<compile_context>
chip_gen: v6e
topology: v6e:2x2x1
jax: 0.10.0
libtpu: 0.0.40
codegen_flags: <defaults>
</compile_context>

<pallas_src>
import functools

import jax
import jax.numpy as jnp
from jax.experimental import pallas as pl
from jax.experimental.pallas import tpu as pltpu

# Small shapes consistent with the module (module uses d_model=24,
# n_hidden=1000, vocab=len(chars); hidden/vocab shrunk for the demo).
D_MODEL = 24
N_HIDDEN = 128        # multiple of 128 -> lane-aligned gate slices
VOCAB = 65
BATCH = 2
SEQ = 8

B_PAD = 8             # sublane width
V_PAD = 128           # lane width (lane-dense output store, padded C rows)


def _char_rnn_kernel(xb_ref,                       # SMEM (B, T) int32 tokens
                     c_ref, uw_ref, ub_ref, ww_ref, h0_ref, c0_ref,
                     why_ref, by_ref,              # VMEM weights
                     logits_ref,                   # output (T, B_PAD, V_PAD)
                     ux_ref, hall_ref):            # VMEM scratch
    """Whole forward pass (embedding + LSTM + output proj) in one invocation."""
    Vp, D = c_ref.shape
    H = ww_ref.shape[0]
    T, Bp, _ = logits_ref.shape
    B = xb_ref.shape[0]
    rows = T * Bp

    # ---- In-kernel embedding gather (fuses XLA gather / transpose / pad) ----
    # ids[r] = xb[b, t] for row r = t*Bp + b (t-major); -1 for padded batch
    # rows so their one-hot row is all zeros (emb = 0, same as before).
    row_iota = jax.lax.broadcasted_iota(jnp.int32, (rows, 1), 0)
    ids = jnp.full((rows, 1), -1, jnp.int32)
    for t in range(T):
        for b in range(B):
            ids = jnp.where(row_iota == (t * Bp + b), xb_ref[b, t], ids)
    col_iota = jax.lax.broadcasted_iota(jnp.int32, (rows, Vp), 1)
    one_hot = (col_iota == jnp.broadcast_to(ids, (rows, Vp))).astype(jnp.float32)
    emb = jnp.dot(one_hot, c_ref[...],
                  preferred_element_type=jnp.float32)             # (T*Bp, D)

    # ---- Hoisted non-recurrent input projection: one (T*Bp, D)@(D, 4H) ----
    ux_ref[...] = (jnp.dot(emb, uw_ref[...],
                           preferred_element_type=jnp.float32)
                   + ub_ref[...]).reshape(T, Bp, 4 * H)

    ww = ww_ref[...]
    h0 = jnp.broadcast_to(h0_ref[...], (Bp, H))
    c0 = jnp.broadcast_to(c0_ref[...], (Bp, H))

    def sigmoid(x):
        # One EUP tanh instead of exp + reciprocal (exact identity).
        return 0.5 * (jnp.tanh(0.5 * x) + 1.0)

    # ---- Recurrence: only h @ Ww on the serial path; state via carry,
    #      per-step activations spilled explicitly to VMEM scratch. ----
    def step(t, carry):
        h, c = carry
        gates = ux_ref[t] + jnp.dot(h, ww, preferred_element_type=jnp.float32)
        i_t = sigmoid(gates[:, 0 * H:1 * H])
        f_t = sigmoid(gates[:, 1 * H:2 * H])
        g_t = jnp.tanh(gates[:, 2 * H:3 * H])
        o_t = sigmoid(gates[:, 3 * H:4 * H])
        c = f_t * c + i_t * g_t
        h = o_t * jnp.tanh(c)
        hall_ref[t] = h
        return (h, c)

    jax.lax.fori_loop(0, T, step, (h0, c0), unroll=True)

    # ---- Hoisted output projection: one (T*Bp, H)@(H, Vp) lane-dense store ---
    h_all = hall_ref[...].reshape(rows, H)
    logits_ref[...] = (jnp.dot(h_all, why_ref[...],
                               preferred_element_type=jnp.float32)
                       + by_ref[...]).reshape(T, Bp, Vp)


def char_rnn_forward(xb, kparams):
    """xb: (B, T) int32 tokens. kparams: prepare_params() output.

    Returns (logits (B, T, V), None)."""
    B, T = xb.shape
    H = kparams["Ww"].shape[0]

    grid_spec = pltpu.PrefetchScalarGridSpec(
        num_scalar_prefetch=1,                       # xb -> SMEM
        grid=(1,),
        in_specs=[
            pl.BlockSpec((V_PAD, D_MODEL), lambda i, xb: (0, 0)),   # C (padded rows)
            pl.BlockSpec((D_MODEL, 4 * H), lambda i, xb: (0, 0)),   # U weight
            pl.BlockSpec((1, 4 * H), lambda i, xb: (0, 0)),         # U bias
            pl.BlockSpec((H, 4 * H), lambda i, xb: (0, 0)),         # W weight
            pl.BlockSpec((1, H), lambda i, xb: (0, 0)),             # h_0
            pl.BlockSpec((1, H), lambda i, xb: (0, 0)),             # c_0
            pl.BlockSpec((H, V_PAD), lambda i, xb: (0, 0)),         # W_hy^T (padded)
            pl.BlockSpec((1, V_PAD), lambda i, xb: (0, 0)),         # b_y    (padded)
        ],
        out_specs=pl.BlockSpec((T, B_PAD, V_PAD), lambda i, xb: (0, 0, 0)),
        scratch_shapes=[
            pltpu.VMEM((T, B_PAD, 4 * H), jnp.float32),   # ux
            pltpu.VMEM((T, B_PAD, H), jnp.float32),       # h_all
        ],
    )

    logits_tm = pl.pallas_call(
        _char_rnn_kernel,
        grid_spec=grid_spec,
        out_shape=jax.ShapeDtypeStruct((T, B_PAD, V_PAD), jnp.float32),
        compiler_params=pltpu.CompilerParams(
            dimension_semantics=("arbitrary",)),
    )(xb, kparams["C_pad"], kparams["Uw"], kparams["Ub"], kparams["Ww"],
      kparams["h0"], kparams["c0"], kparams["Why_pad"], kparams["by_pad"])

    # Strip padding, back to PyTorch's (B, T, V).  (32 KB; XLA fuses it.)
    logits = jnp.transpose(logits_tm[:, :B, :VOCAB], (1, 0, 2))
    return logits, None


def prepare_params(params):
    """One-time (outside jit) kernel-ready padding of the weights."""
    V = params["Why"].shape[1]
    return {
        "C_pad": jnp.pad(params["C"].astype(jnp.float32),
                         ((0, V_PAD - V), (0, 0))),                # (128, D)
        "Uw": params["Uw"],
        "Ub": params["Ub"],
        "Ww": params["Ww"],
        "h0": params["h0"],
        "c0": params["c0"],
        "Why_pad": jnp.pad(params["Why"], ((0, 0), (0, V_PAD - V))),  # (H, 128)
        "by_pad": jnp.pad(params["by"], ((0, 0), (0, V_PAD - V))),    # (1, 128)
    }


def ref_forward(xb, params):
    """Pure-JAX reference matching the PyTorch forward."""
    emb = params["C"][xb].astype(jnp.float32)
    B, T, D = emb.shape
    H = params["h0"].shape[1]
    h0 = jnp.broadcast_to(params["h0"], (B, H))
    c0 = jnp.broadcast_to(params["c0"], (B, H))

    def step(carry, x_t):
        h, c = carry
        gates = x_t @ params["Uw"] + params["Ub"] + h @ params["Ww"]
        i = jax.nn.sigmoid(gates[:, 0 * H:1 * H])
        f = jax.nn.sigmoid(gates[:, 1 * H:2 * H])
        g = jnp.tanh(gates[:, 2 * H:3 * H])
        o = jax.nn.sigmoid(gates[:, 3 * H:4 * H])
        c = f * c + i * g
        h = o * jnp.tanh(c)
        return (h, c), h

    _, h_all = jax.lax.scan(step, (h0, c0), jnp.transpose(emb, (1, 0, 2)))
    logits = h_all @ params["Why"] + params["by"]          # (T, B, V)
    return jnp.transpose(logits, (1, 0, 2))


def init_params(key):
    kC, kUw, kUb, kWw, kWhy = jax.random.split(key, 5)
    lin = lambda k, fan_in, shape: jax.random.uniform(
        k, shape, jnp.float32, -1.0, 1.0) / jnp.sqrt(jnp.float32(fan_in))
    return {
        "C":   jax.random.normal(kC, (VOCAB, D_MODEL), jnp.float32),
        "Uw":  lin(kUw, D_MODEL, (D_MODEL, 4 * N_HIDDEN)),   # nn.Linear weight^T
        "Ub":  lin(kUb, D_MODEL, (1, 4 * N_HIDDEN)),
        "Ww":  lin(kWw, N_HIDDEN, (N_HIDDEN, 4 * N_HIDDEN)),
        "h0":  0.1 * jnp.ones((1, N_HIDDEN), jnp.float32),
        "c0":  0.1 * jnp.ones((1, N_HIDDEN), jnp.float32),
        "Why": lin(kWhy, N_HIDDEN, (N_HIDDEN, VOCAB)),       # W_hy[0].weight^T
        "by":  jnp.zeros((1, VOCAB), jnp.float32),
    }


if __name__ == "__main__":
    key = jax.random.PRNGKey(0)
    kparam, kdata = jax.random.split(key)
    params = init_params(kparam)
    kparams = prepare_params(params)          # one-time padding, outside jit
    xb = jax.random.randint(kdata, (BATCH, SEQ), 0, VOCAB, dtype=jnp.int32)

    fwd = jax.jit(functools.partial(char_rnn_forward, kparams=kparams))
    logits, loss = fwd(xb)
    logits = jax.block_until_ready(logits)

    ref = ref_forward(xb, params)
    assert logits.shape == (BATCH, SEQ, VOCAB), logits.shape
    # 1e-4: only drift source is the in-kernel tanh-form sigmoid (exact math,
    # ~1e-6 rounding difference vs. jax.nn.sigmoid over 8 recurrent steps).
    assert jnp.allclose(logits, ref, rtol=1e-4, atol=1e-4), (
        float(jnp.max(jnp.abs(logits - ref))))
    print("KERNEL_OK")
</pallas_src>

<mosaic_0001>
module attributes {stable_mosaic.version = 11 : i64} {
  func.func @_char_rnn_kernel(%arg0: i32, %arg1: memref<2x8xi32, #tpu.memory_space<smem>>, %arg2: memref<128x24xf32, #tpu.memory_space<vmem>>, %arg3: memref<24x512xf32, #tpu.memory_space<vmem>>, %arg4: memref<1x512xf32, #tpu.memory_space<vmem>>, %arg5: memref<128x512xf32, #tpu.memory_space<vmem>>, %arg6: memref<1x128xf32, #tpu.memory_space<vmem>>, %arg7: memref<1x128xf32, #tpu.memory_space<vmem>>, %arg8: memref<128x128xf32, #tpu.memory_space<vmem>>, %arg9: memref<1x128xf32, #tpu.memory_space<vmem>>, %arg10: memref<8x8x128xf32, #tpu.memory_space<vmem>>, %arg11: memref<8x8x512xf32, #tpu.memory_space<vmem>>, %arg12: memref<8x8x128xf32, #tpu.memory_space<vmem>>) attributes {dimension_semantics = [#tpu.dimension_semantics<arbitrary>], iteration_bounds = array<i64: 1>, scalar_prefetch = 1 : i64, scratch_operands = 2 : i64, tpu.core_type = #tpu.core_type<tc>, window_params = [{pipeline_mode = #tpu.pipeline_mode<synchronous>, transform_indices = @transform_0, window_bounds = array<i64: 128, 24>}, {pipeline_mode = #tpu.pipeline_mode<synchronous>, transform_indices = @transform_1, window_bounds = array<i64: 24, 512>}, {pipeline_mode = #tpu.pipeline_mode<synchronous>, transform_indices = @transform_2, window_bounds = array<i64: 1, 512>}, {pipeline_mode = #tpu.pipeline_mode<synchronous>, transform_indices = @transform_3, window_bounds = array<i64: 128, 512>}, {pipeline_mode = #tpu.pipeline_mode<synchronous>, transform_indices = @transform_4, window_bounds = array<i64: 1, 128>}, {pipeline_mode = #tpu.pipeline_mode<synchronous>, transform_indices = @transform_5, window_bounds = array<i64: 1, 128>}, {pipeline_mode = #tpu.pipeline_mode<synchronous>, transform_indices = @transform_6, window_bounds = array<i64: 128, 128>}, {pipeline_mode = #tpu.pipeline_mode<synchronous>, transform_indices = @transform_7, window_bounds = array<i64: 1, 128>}, {pipeline_mode = #tpu.pipeline_mode<synchronous>, transform_indices = @transform_8, window_bounds = array<i64: 8, 8, 128>}]} {
    %0 = tpu.iota {dimensions = array<i32: 0>} : vector<64x1xi32>
    %c-1_i32 = arith.constant -1 : i32
    %1 = vector.broadcast %c-1_i32 : i32 to vector<64x1xi32>
    %c0_i32 = arith.constant 0 : i32
    %2 = vector.broadcast %c0_i32 : i32 to vector<64x1xi32>
    %3 = arith.cmpi eq, %0, %2 : vector<64x1xi32>
    %c0 = arith.constant 0 : index
    %c0_0 = arith.constant 0 : index
    %4 = memref.load %arg1[%c0, %c0_0] : memref<2x8xi32, #tpu.memory_space<smem>>
    %5 = vector.broadcast %4 : i32 to vector<64x1xi32>
    %6 = arith.select %3, %5, %1 : vector<64x1xi1>, vector<64x1xi32>
    %c1_i32 = arith.constant 1 : i32
    %7 = vector.broadcast %c1_i32 : i32 to vector<64x1xi32>
    %8 = arith.cmpi eq, %0, %7 : vector<64x1xi32>
    %c1 = arith.constant 1 : index
    %c0_1 = arith.constant 0 : index
    %9 = memref.load %arg1[%c1, %c0_1] : memref<2x8xi32, #tpu.memory_space<smem>>
    %10 = vector.broadcast %9 : i32 to vector<64x1xi32>
    %11 = arith.select %8, %10, %6 : vector<64x1xi1>, vector<64x1xi32>
    %c8_i32 = arith.constant 8 : i32
    %12 = vector.broadcast %c8_i32 : i32 to vector<64x1xi32>
    %13 = arith.cmpi eq, %0, %12 : vector<64x1xi32>
    %c0_2 = arith.constant 0 : index
    %c1_3 = arith.constant 1 : index
    %14 = memref.load %arg1[%c0_2, %c1_3] : memref<2x8xi32, #tpu.memory_space<smem>>
    %15 = vector.broadcast %14 : i32 to vector<64x1xi32>
    %16 = arith.select %13, %15, %11 : vector<64x1xi1>, vector<64x1xi32>
    %c9_i32 = arith.constant 9 : i32
    %17 = vector.broadcast %c9_i32 : i32 to vector<64x1xi32>
    %18 = arith.cmpi eq, %0, %17 : vector<64x1xi32>
    %c1_4 = arith.constant 1 : index
    %c1_5 = arith.constant 1 : index
    %19 = memref.load %arg1[%c1_4, %c1_5] : memref<2x8xi32, #tpu.memory_space<smem>>
    %20 = vector.broadcast %19 : i32 to vector<64x1xi32>
    %21 = arith.select %18, %20, %16 : vector<64x1xi1>, vector<64x1xi32>
    %c16_i32 = arith.constant 16 : i32
    %22 = vector.broadcast %c16_i32 : i32 to vector<64x1xi32>
    %23 = arith.cmpi eq, %0, %22 : vector<64x1xi32>
    %c0_6 = arith.constant 0 : index
    %c2 = arith.constant 2 : index
    %24 = memref.load %arg1[%c0_6, %c2] : memref<2x8xi32, #tpu.memory_space<smem>>
    %25 = vector.broadcast %24 : i32 to vector<64x1xi32>
    %26 = arith.select %23, %25, %21 : vector<64x1xi1>, vector<64x1xi32>
    %c17_i32 = arith.constant 17 : i32
    %27 = vector.broadcast %c17_i32 : i32 to vector<64x1xi32>
    %28 = arith.cmpi eq, %0, %27 : vector<64x1xi32>
    %c1_7 = arith.constant 1 : index
    %c2_8 = arith.constant 2 : index
    %29 = memref.load %arg1[%c1_7, %c2_8] : memref<2x8xi32, #tpu.memory_space<smem>>
    %30 = vector.broadcast %29 : i32 to vector<64x1xi32>
    %31 = arith.select %28, %30, %26 : vector<64x1xi1>, vector<64x1xi32>
    %c24_i32 = arith.constant 24 : i32
    %32 = vector.broadcast %c24_i32 : i32 to vector<64x1xi32>
    %33 = arith.cmpi eq, %0, %32 : vector<64x1xi32>
    %c0_9 = arith.constant 0 : index
    %c3 = arith.constant 3 : index
    %34 = memref.load %arg1[%c0_9, %c3] : memref<2x8xi32, #tpu.memory_space<smem>>
    %35 = vector.broadcast %34 : i32 to vector<64x1xi32>
    %36 = arith.select %33, %35, %31 : vector<64x1xi1>, vector<64x1xi32>
    %c25_i32 = arith.constant 25 : i32
    %37 = vector.broadcast %c25_i32 : i32 to vector<64x1xi32>
    %38 = arith.cmpi eq, %0, %37 : vector<64x1xi32>
    %c1_10 = arith.constant 1 : index
    %c3_11 = arith.constant 3 : index
    %39 = memref.load %arg1[%c1_10, %c3_11] : memref<2x8xi32, #tpu.memory_space<smem>>
    %40 = vector.broadcast %39 : i32 to vector<64x1xi32>
    %41 = arith.select %38, %40, %36 : vector<64x1xi1>, vector<64x1xi32>
    %c32_i32 = arith.constant 32 : i32
    %42 = vector.broadcast %c32_i32 : i32 to vector<64x1xi32>
    %43 = arith.cmpi eq, %0, %42 : vector<64x1xi32>
    %c0_12 = arith.constant 0 : index
    %c4 = arith.constant 4 : index
    %44 = memref.load %arg1[%c0_12, %c4] : memref<2x8xi32, #tpu.memory_space<smem>>
    %45 = vector.broadcast %44 : i32 to vector<64x1xi32>
    %46 = arith.select %43, %45, %41 : vector<64x1xi1>, vector<64x1xi32>
    %c33_i32 = arith.constant 33 : i32
    %47 = vector.broadcast %c33_i32 : i32 to vector<64x1xi32>
    %48 = arith.cmpi eq, %0, %47 : vector<64x1xi32>
    %c1_13 = arith.constant 1 : index
    %c4_14 = arith.constant 4 : index
    %49 = memref.load %arg1[%c1_13, %c4_14] : memref<2x8xi32, #tpu.memory_space<smem>>
    %50 = vector.broadcast %49 : i32 to vector<64x1xi32>
    %51 = arith.select %48, %50, %46 : vector<64x1xi1>, vector<64x1xi32>
    %c40_i32 = arith.constant 40 : i32
    %52 = vector.broadcast %c40_i32 : i32 to vector<64x1xi32>
    %53 = arith.cmpi eq, %0, %52 : vector<64x1xi32>
    %c0_15 = arith.constant 0 : index
    %c5 = arith.constant 5 : index
    %54 = memref.load %arg1[%c0_15, %c5] : memref<2x8xi32, #tpu.memory_space<smem>>
    %55 = vector.broadcast %54 : i32 to vector<64x1xi32>
    %56 = arith.select %53, %55, %51 : vector<64x1xi1>, vector<64x1xi32>
    %c41_i32 = arith.constant 41 : i32
    %57 = vector.broadcast %c41_i32 : i32 to vector<64x1xi32>
    %58 = arith.cmpi eq, %0, %57 : vector<64x1xi32>
    %c1_16 = arith.constant 1 : index
    %c5_17 = arith.constant 5 : index
    %59 = memref.load %arg1[%c1_16, %c5_17] : memref<2x8xi32, #tpu.memory_space<smem>>
    %60 = vector.broadcast %59 : i32 to vector<64x1xi32>
    %61 = arith.select %58, %60, %56 : vector<64x1xi1>, vector<64x1xi32>
    %c48_i32 = arith.constant 48 : i32
    %62 = vector.broadcast %c48_i32 : i32 to vector<64x1xi32>
    %63 = arith.cmpi eq, %0, %62 : vector<64x1xi32>
    %c0_18 = arith.constant 0 : index
    %c6 = arith.constant 6 : index
    %64 = memref.load %arg1[%c0_18, %c6] : memref<2x8xi32, #tpu.memory_space<smem>>
    %65 = vector.broadcast %64 : i32 to vector<64x1xi32>
    %66 = arith.select %63, %65, %61 : vector<64x1xi1>, vector<64x1xi32>
    %c49_i32 = arith.constant 49 : i32
    %67 = vector.broadcast %c49_i32 : i32 to vector<64x1xi32>
    %68 = arith.cmpi eq, %0, %67 : vector<64x1xi32>
    %c1_19 = arith.constant 1 : index
    %c6_20 = arith.constant 6 : index
    %69 = memref.load %arg1[%c1_19, %c6_20] : memref<2x8xi32, #tpu.memory_space<smem>>
    %70 = vector.broadcast %69 : i32 to vector<64x1xi32>
    %71 = arith.select %68, %70, %66 : vector<64x1xi1>, vector<64x1xi32>
    %c56_i32 = arith.constant 56 : i32
    %72 = vector.broadcast %c56_i32 : i32 to vector<64x1xi32>
    %73 = arith.cmpi eq, %0, %72 : vector<64x1xi32>
    %c0_21 = arith.constant 0 : index
    %c7 = arith.constant 7 : index
    %74 = memref.load %arg1[%c0_21, %c7] : memref<2x8xi32, #tpu.memory_space<smem>>
    %75 = vector.broadcast %74 : i32 to vector<64x1xi32>
    %76 = arith.select %73, %75, %71 : vector<64x1xi1>, vector<64x1xi32>
    %c57_i32 = arith.constant 57 : i32
    %77 = vector.broadcast %c57_i32 : i32 to vector<64x1xi32>
    %78 = arith.cmpi eq, %0, %77 : vector<64x1xi32>
    %c1_22 = arith.constant 1 : index
    %c7_23 = arith.constant 7 : index
    %79 = memref.load %arg1[%c1_22, %c7_23] : memref<2x8xi32, #tpu.memory_space<smem>>
    %80 = vector.broadcast %79 : i32 to vector<64x1xi32>
    %81 = arith.select %78, %80, %76 : vector<64x1xi1>, vector<64x1xi32>
    %82 = tpu.iota {dimensions = array<i32: 1>} : vector<64x128xi32>
    %83 = vector.shape_cast %81 : vector<64x1xi32> to vector<64x1xi32>
    %84 = vector.broadcast %83 : vector<64x1xi32> to vector<64x128xi32>
    %85 = arith.cmpi eq, %82, %84 : vector<64x128xi32>
    %86 = arith.extui %85 : vector<64x128xi1> to vector<64x128xi32>
    %87 = arith.sitofp %86 : vector<64x128xi32> to vector<64x128xf32>
    %c0_24 = arith.constant 0 : index
    %c0_25 = arith.constant 0 : index
    %88 = vector.load %arg2[%c0_24, %c0_25] : memref<128x24xf32, #tpu.memory_space<vmem>>, vector<128x24xf32>
    %cst = arith.constant dense<0.000000e+00> : vector<64x24xf32>
    %89 = tpu.matmul %87, %88, %cst {dimension_numbers = #tpu.dot_dimension_numbers<[1], [0], [0], [1], [0, 0, 1, 1], [], []>} : vector<64x128xf32>, vector<128x24xf32>, vector<64x24xf32> -> vector<64x24xf32>
    %c0_26 = arith.constant 0 : index
    %c0_27 = arith.constant 0 : index
    %90 = vector.load %arg3[%c0_26, %c0_27] : memref<24x512xf32, #tpu.memory_space<vmem>>, vector<24x512xf32>
    %cst_28 = arith.constant dense<0.000000e+00> : vector<64x512xf32>
    %91 = tpu.matmul %89, %90, %cst_28 {dimension_numbers = #tpu.dot_dimension_numbers<[1], [0], [0], [1], [0, 0, 1, 1], [], []>} : vector<64x24xf32>, vector<24x512xf32>, vector<64x512xf32> -> vector<64x512xf32>
    %c0_29 = arith.constant 0 : index
    %c0_30 = arith.constant 0 : index
    %92 = vector.load %arg4[%c0_29, %c0_30] : memref<1x512xf32, #tpu.memory_space<vmem>>, vector<1x512xf32>
    %93 = vector.broadcast %92 : vector<1x512xf32> to vector<64x512xf32>
    %94 = arith.addf %91, %93 : vector<64x512xf32>
    %95 = vector.shape_cast %94 : vector<64x512xf32> to vector<8x8x512xf32>
    %c0_31 = arith.constant 0 : index
    %c0_32 = arith.constant 0 : index
    %c0_33 = arith.constant 0 : index
    %96 = vector.load %arg11[%c0_31, %c0_32, %c0_33] : memref<8x8x512xf32, #tpu.memory_space<vmem>>, vector<8x8x512xf32>
    tpu.vector_store %arg11[%c0_31, %c0_32, %c0_33], %95 {strides = array<i32>} : memref<8x8x512xf32, #tpu.memory_space<vmem>>, vector<8x8x512xf32>,
    %c0_34 = arith.constant 0 : index
    %c0_35 = arith.constant 0 : index
    %97 = vector.load %arg5[%c0_34, %c0_35] : memref<128x512xf32, #tpu.memory_space<vmem>>, vector<128x512xf32>
    %c0_36 = arith.constant 0 : index
    %c0_37 = arith.constant 0 : index
    %98 = vector.load %arg6[%c0_36, %c0_37] : memref<1x128xf32, #tpu.memory_space<vmem>>, vector<1x128xf32>
    %99 = vector.shape_cast %98 : vector<1x128xf32> to vector<1x128xf32>
    %100 = vector.broadcast %99 : vector<1x128xf32> to vector<8x128xf32>
    %c0_38 = arith.constant 0 : index
    %c0_39 = arith.constant 0 : index
    %101 = vector.load %arg7[%c0_38, %c0_39] : memref<1x128xf32, #tpu.memory_space<vmem>>, vector<1x128xf32>
    %102 = vector.shape_cast %101 : vector<1x128xf32> to vector<1x128xf32>
    %103 = vector.broadcast %102 : vector<1x128xf32> to vector<8x128xf32>
    %c0_i32_40 = arith.constant 0 : i32
    %104 = arith.index_cast %c0_i32_40 : i32 to index
    %c0_41 = arith.constant 0 : index
    %c0_42 = arith.constant 0 : index
    %105 = vector.load %arg11[%104, %c0_41, %c0_42] : memref<8x8x512xf32, #tpu.memory_space<vmem>>, vector<1x8x512xf32>
    %106 = vector.shape_cast %105 : vector<1x8x512xf32> to vector<8x512xf32>
    %cst_43 = arith.constant dense<0.000000e+00> : vector<8x512xf32>
    %107 = tpu.matmul %100, %97, %cst_43 {dimension_numbers = #tpu.dot_dimension_numbers<[1], [0], [0], [1], [0, 0, 1, 1], [], []>} : vector<8x128xf32>, vector<128x512xf32>, vector<8x512xf32> -> vector<8x512xf32>
    %108 = arith.addf %106, %107 : vector<8x512xf32>
    %109 = vector.extract_strided_slice %108 {offsets = [0, 0], sizes = [8, 128], strides = [1, 1]} : vector<8x512xf32> to vector<8x128xf32>
    %cst_44 = arith.constant 5.000000e-01 : f32
    %110 = vector.broadcast %cst_44 : f32 to vector<8x128xf32>
    %111 = arith.mulf %110, %109 : vector<8x128xf32>
    %112 = math.tanh %111 : vector<8x128xf32>
    %cst_45 = arith.constant 1.000000e+00 : f32
    %113 = vector.broadcast %cst_45 : f32 to vector<8x128xf32>
    %114 = arith.addf %112, %113 : vector<8x128xf32>
    %cst_46 = arith.constant 5.000000e-01 : f32
    %115 = vector.broadcast %cst_46 : f32 to vector<8x128xf32>
    %116 = arith.mulf %115, %114 : vector<8x128xf32>
    %117 = vector.extract_strided_slice %108 {offsets = [0, 128], sizes = [8, 128], strides = [1, 1]} : vector<8x512xf32> to vector<8x128xf32>
    %cst_47 = arith.constant 5.000000e-01 : f32
    %118 = vector.broadcast %cst_47 : f32 to vector<8x128xf32>
    %119 = arith.mulf %118, %117 : vector<8x128xf32>
    %120 = math.tanh %119 : vector<8x128xf32>
    %cst_48 = arith.constant 1.000000e+00 : f32
    %121 = vector.broadcast %cst_48 : f32 to vector<8x128xf32>
    %122 = arith.addf %120, %121 : vector<8x128xf32>
    %cst_49 = arith.constant 5.000000e-01 : f32
    %123 = vector.broadcast %cst_49 : f32 to vector<8x128xf32>
    %124 = arith.mulf %123, %122 : vector<8x128xf32>
    %125 = vector.extract_strided_slice %108 {offsets = [0, 256], sizes = [8, 128], strides = [1, 1]} : vector<8x512xf32> to vector<8x128xf32>
    %126 = math.tanh %125 : vector<8x128xf32>
    %127 = vector.extract_strided_slice %108 {offsets = [0, 384], sizes = [8, 128], strides = [1, 1]} : vector<8x512xf32> to vector<8x128xf32>
    %cst_50 = arith.constant 5.000000e-01 : f32
    %128 = vector.broadcast %cst_50 : f32 to vector<8x128xf32>
    %129 = arith.mulf %128, %127 : vector<8x128xf32>
    %130 = math.tanh %129 : vector<8x128xf32>
    %cst_51 = arith.constant 1.000000e+00 : f32
    %131 = vector.broadcast %cst_51 : f32 to vector<8x128xf32>
    %132 = arith.addf %130, %131 : vector<8x128xf32>
    %cst_52 = arith.constant 5.000000e-01 : f32
    %133 = vector.broadcast %cst_52 : f32 to vector<8x128xf32>
    %134 = arith.mulf %133, %132 : vector<8x128xf32>
    %135 = arith.mulf %124, %103 : vector<8x128xf32>
    %136 = arith.mulf %116, %126 : vector<8x128xf32>
    %137 = arith.addf %135, %136 : vector<8x128xf32>
    %138 = math.tanh %137 : vector<8x128xf32>
    %139 = arith.mulf %134, %138 : vector<8x128xf32>
    %140 = arith.index_cast %c0_i32_40 : i32 to index
    %c0_53 = arith.constant 0 : index
    %c0_54 = arith.constant 0 : index
    %141 = vector.load %arg12[%140, %c0_53, %c0_54] : memref<8x8x128xf32, #tpu.memory_space<vmem>>, vector<1x8x128xf32>
    %142 = vector.shape_cast %141 : vector<1x8x128xf32> to vector<8x128xf32>
    %143 = vector.shape_cast %139 : vector<8x128xf32> to vector<1x8x128xf32>
    tpu.vector_store %arg12[%140, %c0_53, %c0_54], %143 {strides = array<i32>} : memref<8x8x128xf32, #tpu.memory_space<vmem>>, vector<1x8x128xf32>,
    %c1_i32_55 = arith.constant 1 : i32
    %144 = arith.index_cast %c1_i32_55 : i32 to index
    %c0_56 = arith.constant 0 : index
    %c0_57 = arith.constant 0 : index
    %145 = vector.load %arg11[%144, %c0_56, %c0_57] : memref<8x8x512xf32, #tpu.memory_space<vmem>>, vector<1x8x512xf32>
    %146 = vector.shape_cast %145 : vector<1x8x512xf32> to vector<8x512xf32>
    %cst_58 = arith.constant dense<0.000000e+00> : vector<8x512xf32>
    %147 = tpu.matmul %139, %97, %cst_58 {dimension_numbers = #tpu.dot_dimension_numbers<[1], [0], [0], [1], [0, 0, 1, 1], [], []>} : vector<8x128xf32>, vector<128x512xf32>, vector<8x512xf32> -> vector<8x512xf32>
    %148 = arith.addf %146, %147 : vector<8x512xf32>
    %149 = vector.extract_strided_slice %148 {offsets = [0, 0], sizes = [8, 128], strides = [1, 1]} : vector<8x512xf32> to vector<8x128xf32>
    %cst_59 = arith.constant 5.000000e-01 : f32
    %150 = vector.broadcast %cst_59 : f32 to vector<8x128xf32>
    %151 = arith.mulf %150, %149 : vector<8x128xf32>
    %152 = math.tanh %151 : vector<8x128xf32>
    %cst_60 = arith.constant 1.000000e+00 : f32
    %153 = vector.broadcast %cst_60 : f32 to vector<8x128xf32>
    %154 = arith.addf %152, %153 : vector<8x128xf32>
    %cst_61 = arith.constant 5.000000e-01 : f32
    %155 = vector.broadcast %cst_61 : f32 to vector<8x128xf32>
    %156 = arith.mulf %155, %154 : vector<8x128xf32>
    %157 = vector.extract_strided_slice %148 {offsets = [0, 128], sizes = [8, 128], strides = [1, 1]} : vector<8x512xf32> to vector<8x128xf32>
    %cst_62 = arith.constant 5.000000e-01 : f32
    %158 = vector.broadcast %cst_62 : f32 to vector<8x128xf32>
    %159 = arith.mulf %158, %157 : vector<8x128xf32>
    %160 = math.tanh %159 : vector<8x128xf32>
    %cst_63 = arith.constant 1.000000e+00 : f32
    %161 = vector.broadcast %cst_63 : f32 to vector<8x128xf32>
    %162 = arith.addf %160, %161 : vector<8x128xf32>
    %cst_64 = arith.constant 5.000000e-01 : f32
    %163 = vector.broadcast %cst_64 : f32 to vector<8x128xf32>
    %164 = arith.mulf %163, %162 : vector<8x128xf32>
    %165 = vector.extract_strided_slice %148 {offsets = [0, 256], sizes = [8, 128], strides = [1, 1]} : vector<8x512xf32> to vector<8x128xf32>
    %166 = math.tanh %165 : vector<8x128xf32>
    %167 = vector.extract_strided_slice %148 {offsets = [0, 384], sizes = [8, 128], strides = [1, 1]} : vector<8x512xf32> to vector<8x128xf32>
    %cst_65 = arith.constant 5.000000e-01 : f32
    %168 = vector.broadcast %cst_65 : f32 to vector<8x128xf32>
    %169 = arith.mulf %168, %167 : vector<8x128xf32>
    %170 = math.tanh %169 : vector<8x128xf32>
    %cst_66 = arith.constant 1.000000e+00 : f32
    %171 = vector.broadcast %cst_66 : f32 to vector<8x128xf32>
    %172 = arith.addf %170, %171 : vector<8x128xf32>
    %cst_67 = arith.constant 5.000000e-01 : f32
    %173 = vector.broadcast %cst_67 : f32 to vector<8x128xf32>
    %174 = arith.mulf %173, %172 : vector<8x128xf32>
    %175 = arith.mulf %164, %137 : vector<8x128xf32>
    %176 = arith.mulf %156, %166 : vector<8x128xf32>
    %177 = arith.addf %175, %176 : vector<8x128xf32>
    %178 = math.tanh %177 : vector<8x128xf32>
    %179 = arith.mulf %174, %178 : vector<8x128xf32>
    %180 = arith.index_cast %c1_i32_55 : i32 to index
    %c0_68 = arith.constant 0 : index
    %c0_69 = arith.constant 0 : index
    %181 = vector.load %arg12[%180, %c0_68, %c0_69] : memref<8x8x128xf32, #tpu.memory_space<vmem>>, vector<1x8x128xf32>
    %182 = vector.shape_cast %181 : vector<1x8x128xf32> to vector<8x128xf32>
    %183 = vector.shape_cast %179 : vector<8x128xf32> to vector<1x8x128xf32>
    tpu.vector_store %arg12[%180, %c0_68, %c0_69], %183 {strides = array<i32>} : memref<8x8x128xf32, #tpu.memory_space<vmem>>, vector<1x8x128xf32>,
    %c2_i32 = arith.constant 2 : i32
    %184 = arith.index_cast %c2_i32 : i32 to index
    %c0_70 = arith.constant 0 : index
    %c0_71 = arith.constant 0 : index
    %185 = vector.load %arg11[%184, %c0_70, %c0_71] : memref<8x8x512xf32, #tpu.memory_space<vmem>>, vector<1x8x512xf32>
    %186 = vector.shape_cast %185 : vector<1x8x512xf32> to vector<8x512xf32>
    %cst_72 = arith.constant dense<0.000000e+00> : vector<8x512xf32>
    %187 = tpu.matmul %179, %97, %cst_72 {dimension_numbers = #tpu.dot_dimension_numbers<[1], [0], [0], [1], [0, 0, 1, 1], [], []>} : vector<8x128xf32>, vector<128x512xf32>, vector<8x512xf32> -> vector<8x512xf32>
    %188 = arith.addf %186, %187 : vector<8x512xf32>
    %189 = vector.extract_strided_slice %188 {offsets = [0, 0], sizes = [8, 128], strides = [1, 1]} : vector<8x512xf32> to vector<8x128xf32>
    %cst_73 = arith.constant 5.000000e-01 : f32
    %190 = vector.broadcast %cst_73 : f32 to vector<8x128xf32>
    %191 = arith.mulf %190, %189 : vector<8x128xf32>
    %192 = math.tanh %191 : vector<8x128xf32>
    %cst_74 = arith.constant 1.000000e+00 : f32
    %193 = vector.broadcast %cst_74 : f32 to vector<8x128xf32>
    %194 = arith.addf %192, %193 : vector<8x128xf32>
    %cst_75 = arith.constant 5.000000e-01 : f32
    %195 = vector.broadcast %cst_75 : f32 to vector<8x128xf32>
    %196 = arith.mulf %195, %194 : vector<8x128xf32>
    %197 = vector.extract_strided_slice %188 {offsets = [0, 128], sizes = [8, 128], strides = [1, 1]} : vector<8x512xf32> to vector<8x128xf32>
    %cst_76 = arith.constant 5.000000e-01 : f32
    %198 = vector.broadcast %cst_76 : f32 to vector<8x128xf32>
    %199 = arith.mulf %198, %197 : vector<8x128xf32>
    %200 = math.tanh %199 : vector<8x128xf32>
    %cst_77 = arith.constant 1.000000e+00 : f32
    %201 = vector.broadcast %cst_77 : f32 to vector<8x128xf32>
    %202 = arith.addf %200, %201 : vector<8x128xf32>
    %cst_78 = arith.constant 5.000000e-01 : f32
    %203 = vector.broadcast %cst_78 : f32 to vector<8x128xf32>
    %204 = arith.mulf %203, %202 : vector<8x128xf32>
    %205 = vector.extract_strided_slice %188 {offsets = [0, 256], sizes = [8, 128], strides = [1, 1]} : vector<8x512xf32> to vector<8x128xf32>
    %206 = math.tanh %205 : vector<8x128xf32>
    %207 = vector.extract_strided_slice %188 {offsets = [0, 384], sizes = [8, 128], strides = [1, 1]} : vector<8x512xf32> to vector<8x128xf32>
    %cst_79 = arith.constant 5.000000e-01 : f32
    %208 = vector.broadcast %cst_79 : f32 to vector<8x128xf32>
    %209 = arith.mulf %208, %207 : vector<8x128xf32>
    %210 = math.tanh %209 : vector<8x128xf32>
    %cst_80 = arith.constant 1.000000e+00 : f32
    %211 = vector.broadcast %cst_80 : f32 to vector<8x128xf32>
    %212 = arith.addf %210, %211 : vector<8x128xf32>
    %cst_81 = arith.constant 5.000000e-01 : f32
    %213 = vector.broadcast %cst_81 : f32 to vector<8x128xf32>
    %214 = arith.mulf %213, %212 : vector<8x128xf32>
    %215 = arith.mulf %204, %177 : vector<8x128xf32>
    %216 = arith.mulf %196, %206 : vector<8x128xf32>
    %217 = arith.addf %215, %216 : vector<8x128xf32>
    %218 = math.tanh %217 : vector<8x128xf32>
    %219 = arith.mulf %214, %218 : vector<8x128xf32>
    %220 = arith.index_cast %c2_i32 : i32 to index
    %c0_82 = arith.constant 0 : index
    %c0_83 = arith.constant 0 : index
    %221 = vector.load %arg12[%220, %c0_82, %c0_83] : memref<8x8x128xf32, #tpu.memory_space<vmem>>, vector<1x8x128xf32>
    %222 = vector.shape_cast %221 : vector<1x8x128xf32> to vector<8x128xf32>
    %223 = vector.shape_cast %219 : vector<8x128xf32> to vector<1x8x128xf32>
    tpu.vector_store %arg12[%220, %c0_82, %c0_83], %223 {strides = array<i32>} : memref<8x8x128xf32, #tpu.memory_space<vmem>>, vector<1x8x128xf32>,
    %c3_i32 = arith.constant 3 : i32
    %224 = arith.index_cast %c3_i32 : i32 to index
    %c0_84 = arith.constant 0 : index
    %c0_85 = arith.constant 0 : index
    %225 = vector.load %arg11[%224, %c0_84, %c0_85] : memref<8x8x512xf32, #tpu.memory_space<vmem>>, vector<1x8x512xf32>
    %226 = vector.shape_cast %225 : vector<1x8x512xf32> to vector<8x512xf32>
    %cst_86 = arith.constant dense<0.000000e+00> : vector<8x512xf32>
    %227 = tpu.matmul %219, %97, %cst_86 {dimension_numbers = #tpu.dot_dimension_numbers<[1], [0], [0], [1], [0, 0, 1, 1], [], []>} : vector<8x128xf32>, vector<128x512xf32>, vector<8x512xf32> -> vector<8x512xf32>
    %228 = arith.addf %226, %227 : vector<8x512xf32>
    %229 = vector.extract_strided_slice %228 {offsets = [0, 0], sizes = [8, 128], strides = [1, 1]} : vector<8x512xf32> to vector<8x128xf32>
    %cst_87 = arith.constant 5.000000e-01 : f32
    %230 = vector.broadcast %cst_87 : f32 to vector<8x128xf32>
    %231 = arith.mulf %230, %229 : vector<8x128xf32>
    %232 = math.tanh %231 : vector<8x128xf32>
    %cst_88 = arith.constant 1.000000e+00 : f32
    %233 = vector.broadcast %cst_88 : f32 to vector<8x128xf32>
    %234 = arith.addf %232, %233 : vector<8x128xf32>
    %cst_89 = arith.constant 5.000000e-01 : f32
    %235 = vector.broadcast %cst_89 : f32 to vector<8x128xf32>
    %236 = arith.mulf %235, %234 : vector<8x128xf32>
    %237 = vector.extract_strided_slice %228 {offsets = [0, 128], sizes = [8, 128], strides = [1, 1]} : vector<8x512xf32> to vector<8x128xf32>
    %cst_90 = arith.constant 5.000000e-01 : f32
    %238 = vector.broadcast %cst_90 : f32 to vector<8x128xf32>
    %239 = arith.mulf %238, %237 : vector<8x128xf32>
    %240 = math.tanh %239 : vector<8x128xf32>
    %cst_91 = arith.constant 1.000000e+00 : f32
    %241 = vector.broadcast %cst_91 : f32 to vector<8x128xf32>
    %242 = arith.addf %240, %241 : vector<8x128xf32>
    %cst_92 = arith.constant 5.000000e-01 : f32
    %243 = vector.broadcast %cst_92 : f32 to vector<8x128xf32>
    %244 = arith.mulf %243, %242 : vector<8x128xf32>
    %245 = vector.extract_strided_slice %228 {offsets = [0, 256], sizes = [8, 128], strides = [1, 1]} : vector<8x512xf32> to vector<8x128xf32>
    %246 = math.tanh %245 : vector<8x128xf32>
    %247 = vector.extract_strided_slice %228 {offsets = [0, 384], sizes = [8, 128], strides = [1, 1]} : vector<8x512xf32> to vector<8x128xf32>
    %cst_93 = arith.constant 5.000000e-01 : f32
    %248 = vector.broadcast %cst_93 : f32 to vector<8x128xf32>
    %249 = arith.mulf %248, %247 : vector<8x128xf32>
    %250 = math.tanh %249 : vector<8x128xf32>
    %cst_94 = arith.constant 1.000000e+00 : f32
    %251 = vector.broadcast %cst_94 : f32 to vector<8x128xf32>
    %252 = arith.addf %250, %251 : vector<8x128xf32>
    %cst_95 = arith.constant 5.000000e-01 : f32
    %253 = vector.broadcast %cst_95 : f32 to vector<8x128xf32>
    %254 = arith.mulf %253, %252 : vector<8x128xf32>
    %255 = arith.mulf %244, %217 : vector<8x128xf32>
    %256 = arith.mulf %236, %246 : vector<8x128xf32>
    %257 = arith.addf %255, %256 : vector<8x128xf32>
    %258 = math.tanh %257 : vector<8x128xf32>
    %259 = arith.mulf %254, %258 : vector<8x128xf32>
    %260 = arith.index_cast %c3_i32 : i32 to index
    %c0_96 = arith.constant 0 : index
    %c0_97 = arith.constant 0 : index
    %261 = vector.load %arg12[%260, %c0_96, %c0_97] : memref<8x8x128xf32, #tpu.memory_space<vmem>>, vector<1x8x128xf32>
    %262 = vector.shape_cast %261 : vector<1x8x128xf32> to vector<8x128xf32>
    %263 = vector.shape_cast %259 : vector<8x128xf32> to vector<1x8x128xf32>
    tpu.vector_store %arg12[%260, %c0_96, %c0_97], %263 {strides = array<i32>} : memref<8x8x128xf32, #tpu.memory_space<vmem>>, vector<1x8x128xf32>,
    %c4_i32 = arith.constant 4 : i32
    %264 = arith.index_cast %c4_i32 : i32 to index
    %c0_98 = arith.constant 0 : index
    %c0_99 = arith.constant 0 : index
    %265 = vector.load %arg11[%264, %c0_98, %c0_99] : memref<8x8x512xf32, #tpu.memory_space<vmem>>, vector<1x8x512xf32>
    %266 = vector.shape_cast %265 : vector<1x8x512xf32> to vector<8x512xf32>
    %cst_100 = arith.constant dense<0.000000e+00> : vector<8x512xf32>
    %267 = tpu.matmul %259, %97, %cst_100 {dimension_numbers = #tpu.dot_dimension_numbers<[1], [0], [0], [1], [0, 0, 1, 1], [], []>} : vector<8x128xf32>, vector<128x512xf32>, vector<8x512xf32> -> vector<8x512xf32>
    %268 = arith.addf %266, %267 : vector<8x512xf32>
    %269 = vector.extract_strided_slice %268 {offsets = [0, 0], sizes = [8, 128], strides = [1, 1]} : vector<8x512xf32> to vector<8x128xf32>
    %cst_101 = arith.constant 5.000000e-01 : f32
    %270 = vector.broadcast %cst_101 : f32 to vector<8x128xf32>
    %271 = arith.mulf %270, %269 : vector<8x128xf32>
    %272 = math.tanh %271 : vector<8x128xf32>
    %cst_102 = arith.constant 1.000000e+00 : f32
    %273 = vector.broadcast %cst_102 : f32 to vector<8x128xf32>
    %274 = arith.addf %272, %273 : vector<8x128xf32>
    %cst_103 = arith.constant 5.000000e-01 : f32
    %275 = vector.broadcast %cst_103 : f32 to vector<8x128xf32>
    %276 = arith.mulf %275, %274 : vector<8x128xf32>
    %277 = vector.extract_strided_slice %268 {offsets = [0, 128], sizes = [8, 128], strides = [1, 1]} : vector<8x512xf32> to vector<8x128xf32>
    %cst_104 = arith.constant 5.000000e-01 : f32
    %278 = vector.broadcast %cst_104 : f32 to vector<8x128xf32>
    %279 = arith.mulf %278, %277 : vector<8x128xf32>
    %280 = math.tanh %279 : vector<8x128xf32>
    %cst_105 = arith.constant 1.000000e+00 : f32
    %281 = vector.broadcast %cst_105 : f32 to vector<8x128xf32>
    %282 = arith.addf %280, %281 : vector<8x128xf32>
    %cst_106 = arith.constant 5.000000e-01 : f32
    %283 = vector.broadcast %cst_106 : f32 to vector<8x128xf32>
    %284 = arith.mulf %283, %282 : vector<8x128xf32>
    %285 = vector.extract_strided_slice %268 {offsets = [0, 256], sizes = [8, 128], strides = [1, 1]} : vector<8x512xf32> to vector<8x128xf32>
    %286 = math.tanh %285 : vector<8x128xf32>
    %287 = vector.extract_strided_slice %268 {offsets = [0, 384], sizes = [8, 128], strides = [1, 1]} : vector<8x512xf32> to vector<8x128xf32>
    %cst_107 = arith.constant 5.000000e-01 : f32
    %288 = vector.broadcast %cst_107 : f32 to vector<8x128xf32>
    %289 = arith.mulf %288, %287 : vector<8x128xf32>
    %290 = math.tanh %289 : vector<8x128xf32>
    %cst_108 = arith.constant 1.000000e+00 : f32
    %291 = vector.broadcast %cst_108 : f32 to vector<8x128xf32>
    %292 = arith.addf %290, %291 : vector<8x128xf32>
    %cst_109 = arith.constant 5.000000e-01 : f32
    %293 = vector.broadcast %cst_109 : f32 to vector<8x128xf32>
    %294 = arith.mulf %293, %292 : vector<8x128xf32>
    %295 = arith.mulf %284, %257 : vector<8x128xf32>
    %296 = arith.mulf %276, %286 : vector<8x128xf32>
    %297 = arith.addf %295, %296 : vector<8x128xf32>
    %298 = math.tanh %297 : vector<8x128xf32>
    %299 = arith.mulf %294, %298 : vector<8x128xf32>
    %300 = arith.index_cast %c4_i32 : i32 to index
    %c0_110 = arith.constant 0 : index
    %c0_111 = arith.constant 0 : index
    %301 = vector.load %arg12[%300, %c0_110, %c0_111] : memref<8x8x128xf32, #tpu.memory_space<vmem>>, vector<1x8x128xf32>
    %302 = vector.shape_cast %301 : vector<1x8x128xf32> to vector<8x128xf32>
    %303 = vector.shape_cast %299 : vector<8x128xf32> to vector<1x8x128xf32>
    tpu.vector_store %arg12[%300, %c0_110, %c0_111], %303 {strides = array<i32>} : memref<8x8x128xf32, #tpu.memory_space<vmem>>, vector<1x8x128xf32>,
    %c5_i32 = arith.constant 5 : i32
    %304 = arith.index_cast %c5_i32 : i32 to index
    %c0_112 = arith.constant 0 : index
    %c0_113 = arith.constant 0 : index
    %305 = vector.load %arg11[%304, %c0_112, %c0_113] : memref<8x8x512xf32, #tpu.memory_space<vmem>>, vector<1x8x512xf32>
    %306 = vector.shape_cast %305 : vector<1x8x512xf32> to vector<8x512xf32>
    %cst_114 = arith.constant dense<0.000000e+00> : vector<8x512xf32>
    %307 = tpu.matmul %299, %97, %cst_114 {dimension_numbers = #tpu.dot_dimension_numbers<[1], [0], [0], [1], [0, 0, 1, 1], [], []>} : vector<8x128xf32>, vector<128x512xf32>, vector<8x512xf32> -> vector<8x512xf32>
    %308 = arith.addf %306, %307 : vector<8x512xf32>
    %309 = vector.extract_strided_slice %308 {offsets = [0, 0], sizes = [8, 128], strides = [1, 1]} : vector<8x512xf32> to vector<8x128xf32>
    %cst_115 = arith.constant 5.000000e-01 : f32
    %310 = vector.broadcast %cst_115 : f32 to vector<8x128xf32>
    %311 = arith.mulf %310, %309 : vector<8x128xf32>
    %312 = math.tanh %311 : vector<8x128xf32>
    %cst_116 = arith.constant 1.000000e+00 : f32
    %313 = vector.broadcast %cst_116 : f32 to vector<8x128xf32>
    %314 = arith.addf %312, %313 : vector<8x128xf32>
    %cst_117 = arith.constant 5.000000e-01 : f32
    %315 = vector.broadcast %cst_117 : f32 to vector<8x128xf32>
    %316 = arith.mulf %315, %314 : vector<8x128xf32>
    %317 = vector.extract_strided_slice %308 {offsets = [0, 128], sizes = [8, 128], strides = [1, 1]} : vector<8x512xf32> to vector<8x128xf32>
    %cst_118 = arith.constant 5.000000e-01 : f32
    %318 = vector.broadcast %cst_118 : f32 to vector<8x128xf32>
    %319 = arith.mulf %318, %317 : vector<8x128xf32>
    %320 = math.tanh %319 : vector<8x128xf32>
    %cst_119 = arith.constant 1.000000e+00 : f32
    %321 = vector.broadcast %cst_119 : f32 to vector<8x128xf32>
    %322 = arith.addf %320, %321 : vector<8x128xf32>
    %cst_120 = arith.constant 5.000000e-01 : f32
    %323 = vector.broadcast %cst_120 : f32 to vector<8x128xf32>
    %324 = arith.mulf %323, %322 : vector<8x128xf32>
    %325 = vector.extract_strided_slice %308 {offsets = [0, 256], sizes = [8, 128], strides = [1, 1]} : vector<8x512xf32> to vector<8x128xf32>
    %326 = math.tanh %325 : vector<8x128xf32>
    %327 = vector.extract_strided_slice %308 {offsets = [0, 384], sizes = [8, 128], strides = [1, 1]} : vector<8x512xf32> to vector<8x128xf32>
    %cst_121 = arith.constant 5.000000e-01 : f32
    %328 = vector.broadcast %cst_121 : f32 to vector<8x128xf32>
    %329 = arith.mulf %328, %327 : vector<8x128xf32>
    %330 = math.tanh %329 : vector<8x128xf32>
    %cst_122 = arith.constant 1.000000e+00 : f32
    %331 = vector.broadcast %cst_122 : f32 to vector<8x128xf32>
    %332 = arith.addf %330, %331 : vector<8x128xf32>
    %cst_123 = arith.constant 5.000000e-01 : f32
    %333 = vector.broadcast %cst_123 : f32 to vector<8x128xf32>
    %334 = arith.mulf %333, %332 : vector<8x128xf32>
    %335 = arith.mulf %324, %297 : vector<8x128xf32>
    %336 = arith.mulf %316, %326 : vector<8x128xf32>
    %337 = arith.addf %335, %336 : vector<8x128xf32>
    %338 = math.tanh %337 : vector<8x128xf32>
    %339 = arith.mulf %334, %338 : vector<8x128xf32>
    %340 = arith.index_cast %c5_i32 : i32 to index
    %c0_124 = arith.constant 0 : index
    %c0_125 = arith.constant 0 : index
    %341 = vector.load %arg12[%340, %c0_124, %c0_125] : memref<8x8x128xf32, #tpu.memory_space<vmem>>, vector<1x8x128xf32>
    %342 = vector.shape_cast %341 : vector<1x8x128xf32> to vector<8x128xf32>
    %343 = vector.shape_cast %339 : vector<8x128xf32> to vector<1x8x128xf32>
    tpu.vector_store %arg12[%340, %c0_124, %c0_125], %343 {strides = array<i32>} : memref<8x8x128xf32, #tpu.memory_space<vmem>>, vector<1x8x128xf32>,
    %c6_i32 = arith.constant 6 : i32
    %344 = arith.index_cast %c6_i32 : i32 to index
    %c0_126 = arith.constant 0 : index
    %c0_127 = arith.constant 0 : index
    %345 = vector.load %arg11[%344, %c0_126, %c0_127] : memref<8x8x512xf32, #tpu.memory_space<vmem>>, vector<1x8x512xf32>
    %346 = vector.shape_cast %345 : vector<1x8x512xf32> to vector<8x512xf32>
    %cst_128 = arith.constant dense<0.000000e+00> : vector<8x512xf32>
    %347 = tpu.matmul %339, %97, %cst_128 {dimension_numbers = #tpu.dot_dimension_numbers<[1], [0], [0], [1], [0, 0, 1, 1], [], []>} : vector<8x128xf32>, vector<128x512xf32>, vector<8x512xf32> -> vector<8x512xf32>
    %348 = arith.addf %346, %347 : vector<8x512xf32>
    %349 = vector.extract_strided_slice %348 {offsets = [0, 0], sizes = [8, 128], strides = [1, 1]} : vector<8x512xf32> to vector<8x128xf32>
    %cst_129 = arith.constant 5.000000e-01 : f32
    %350 = vector.broadcast %cst_129 : f32 to vector<8x128xf32>
    %351 = arith.mulf %350, %349 : vector<8x128xf32>
    %352 = math.tanh %351 : vector<8x128xf32>
    %cst_130 = arith.constant 1.000000e+00 : f32
    %353 = vector.broadcast %cst_130 : f32 to vector<8x128xf32>
    %354 = arith.addf %352, %353 : vector<8x128xf32>
    %cst_131 = arith.constant 5.000000e-01 : f32
    %355 = vector.broadcast %cst_131 : f32 to vector<8x128xf32>
    %356 = arith.mulf %355, %354 : vector<8x128xf32>
    %357 = vector.extract_strided_slice %348 {offsets = [0, 128], sizes = [8, 128], strides = [1, 1]} : vector<8x512xf32> to vector<8x128xf32>
    %cst_132 = arith.constant 5.000000e-01 : f32
    %358 = vector.broadcast %cst_132 : f32 to vector<8x128xf32>
    %359 = arith.mulf %358, %357 : vector<8x128xf32>
    %360 = math.tanh %359 : vector<8x128xf32>
    %cst_133 = arith.constant 1.000000e+00 : f32
    %361 = vector.broadcast %cst_133 : f32 to vector<8x128xf32>
    %362 = arith.addf %360, %361 : vector<8x128xf32>
    %cst_134 = arith.constant 5.000000e-01 : f32
    %363 = vector.broadcast %cst_134 : f32 to vector<8x128xf32>
    %364 = arith.mulf %363, %362 : vector<8x128xf32>
    %365 = vector.extract_strided_slice %348 {offsets = [0, 256], sizes = [8, 128], strides = [1, 1]} : vector<8x512xf32> to vector<8x128xf32>
    %366 = math.tanh %365 : vector<8x128xf32>
    %367 = vector.extract_strided_slice %348 {offsets = [0, 384], sizes = [8, 128], strides = [1, 1]} : vector<8x512xf32> to vector<8x128xf32>
    %cst_135 = arith.constant 5.000000e-01 : f32
    %368 = vector.broadcast %cst_135 : f32 to vector<8x128xf32>
    %369 = arith.mulf %368, %367 : vector<8x128xf32>
    %370 = math.tanh %369 : vector<8x128xf32>
    %cst_136 = arith.constant 1.000000e+00 : f32
    %371 = vector.broadcast %cst_136 : f32 to vector<8x128xf32>
    %372 = arith.addf %370, %371 : vector<8x128xf32>
    %cst_137 = arith.constant 5.000000e-01 : f32
    %373 = vector.broadcast %cst_137 : f32 to vector<8x128xf32>
    %374 = arith.mulf %373, %372 : vector<8x128xf32>
    %375 = arith.mulf %364, %337 : vector<8x128xf32>
    %376 = arith.mulf %356, %366 : vector<8x128xf32>
    %377 = arith.addf %375, %376 : vector<8x128xf32>
    %378 = math.tanh %377 : vector<8x128xf32>
    %379 = arith.mulf %374, %378 : vector<8x128xf32>
    %380 = arith.index_cast %c6_i32 : i32 to index
    %c0_138 = arith.constant 0 : index
    %c0_139 = arith.constant 0 : index
    %381 = vector.load %arg12[%380, %c0_138, %c0_139] : memref<8x8x128xf32, #tpu.memory_space<vmem>>, vector<1x8x128xf32>
    %382 = vector.shape_cast %381 : vector<1x8x128xf32> to vector<8x128xf32>
    %383 = vector.shape_cast %379 : vector<8x128xf32> to vector<1x8x128xf32>
    tpu.vector_store %arg12[%380, %c0_138, %c0_139], %383 {strides = array<i32>} : memref<8x8x128xf32, #tpu.memory_space<vmem>>, vector<1x8x128xf32>,
    %c7_i32 = arith.constant 7 : i32
    %384 = arith.index_cast %c7_i32 : i32 to index
    %c0_140 = arith.constant 0 : index
    %c0_141 = arith.constant 0 : index
    %385 = vector.load %arg11[%384, %c0_140, %c0_141] : memref<8x8x512xf32, #tpu.memory_space<vmem>>, vector<1x8x512xf32>
    %386 = vector.shape_cast %385 : vector<1x8x512xf32> to vector<8x512xf32>
    %cst_142 = arith.constant dense<0.000000e+00> : vector<8x512xf32>
    %387 = tpu.matmul %379, %97, %cst_142 {dimension_numbers = #tpu.dot_dimension_numbers<[1], [0], [0], [1], [0, 0, 1, 1], [], []>} : vector<8x128xf32>, vector<128x512xf32>, vector<8x512xf32> -> vector<8x512xf32>
    %388 = arith.addf %386, %387 : vector<8x512xf32>
    %389 = vector.extract_strided_slice %388 {offsets = [0, 0], sizes = [8, 128], strides = [1, 1]} : vector<8x512xf32> to vector<8x128xf32>
    %cst_143 = arith.constant 5.000000e-01 : f32
    %390 = vector.broadcast %cst_143 : f32 to vector<8x128xf32>
    %391 = arith.mulf %390, %389 : vector<8x128xf32>
    %392 = math.tanh %391 : vector<8x128xf32>
    %cst_144 = arith.constant 1.000000e+00 : f32
    %393 = vector.broadcast %cst_144 : f32 to vector<8x128xf32>
    %394 = arith.addf %392, %393 : vector<8x128xf32>
    %cst_145 = arith.constant 5.000000e-01 : f32
    %395 = vector.broadcast %cst_145 : f32 to vector<8x128xf32>
    %396 = arith.mulf %395, %394 : vector<8x128xf32>
    %397 = vector.extract_strided_slice %388 {offsets = [0, 128], sizes = [8, 128], strides = [1, 1]} : vector<8x512xf32> to vector<8x128xf32>
    %cst_146 = arith.constant 5.000000e-01 : f32
    %398 = vector.broadcast %cst_146 : f32 to vector<8x128xf32>
    %399 = arith.mulf %398, %397 : vector<8x128xf32>
    %400 = math.tanh %399 : vector<8x128xf32>
    %cst_147 = arith.constant 1.000000e+00 : f32
    %401 = vector.broadcast %cst_147 : f32 to vector<8x128xf32>
    %402 = arith.addf %400, %401 : vector<8x128xf32>
    %cst_148 = arith.constant 5.000000e-01 : f32
    %403 = vector.broadcast %cst_148 : f32 to vector<8x128xf32>
    %404 = arith.mulf %403, %402 : vector<8x128xf32>
    %405 = vector.extract_strided_slice %388 {offsets = [0, 256], sizes = [8, 128], strides = [1, 1]} : vector<8x512xf32> to vector<8x128xf32>
    %406 = math.tanh %405 : vector<8x128xf32>
    %407 = vector.extract_strided_slice %388 {offsets = [0, 384], sizes = [8, 128], strides = [1, 1]} : vector<8x512xf32> to vector<8x128xf32>
    %cst_149 = arith.constant 5.000000e-01 : f32
    %408 = vector.broadcast %cst_149 : f32 to vector<8x128xf32>
    %409 = arith.mulf %408, %407 : vector<8x128xf32>
    %410 = math.tanh %409 : vector<8x128xf32>
    %cst_150 = arith.constant 1.000000e+00 : f32
    %411 = vector.broadcast %cst_150 : f32 to vector<8x128xf32>
    %412 = arith.addf %410, %411 : vector<8x128xf32>
    %cst_151 = arith.constant 5.000000e-01 : f32
    %413 = vector.broadcast %cst_151 : f32 to vector<8x128xf32>
    %414 = arith.mulf %413, %412 : vector<8x128xf32>
    %415 = arith.mulf %404, %377 : vector<8x128xf32>
    %416 = arith.mulf %396, %406 : vector<8x128xf32>
    %417 = arith.addf %415, %416 : vector<8x128xf32>
    %418 = math.tanh %417 : vector<8x128xf32>
    %419 = arith.mulf %414, %418 : vector<8x128xf32>
    %420 = arith.index_cast %c7_i32 : i32 to index
    %c0_152 = arith.constant 0 : index
    %c0_153 = arith.constant 0 : index
    %421 = vector.load %arg12[%420, %c0_152, %c0_153] : memref<8x8x128xf32, #tpu.memory_space<vmem>>, vector<1x8x128xf32>
    %422 = vector.shape_cast %421 : vector<1x8x128xf32> to vector<8x128xf32>
    %423 = vector.shape_cast %419 : vector<8x128xf32> to vector<1x8x128xf32>
    tpu.vector_store %arg12[%420, %c0_152, %c0_153], %423 {strides = array<i32>} : memref<8x8x128xf32, #tpu.memory_space<vmem>>, vector<1x8x128xf32>,
    %c8_i32_154 = arith.constant 8 : i32
    %c0_155 = arith.constant 0 : index
    %c0_156 = arith.constant 0 : index
    %c0_157 = arith.constant 0 : index
    %424 = vector.load %arg12[%c0_155, %c0_156, %c0_157] : memref<8x8x128xf32, #tpu.memory_space<vmem>>, vector<8x8x128xf32>
    %425 = vector.shape_cast %424 : vector<8x8x128xf32> to vector<64x128xf32>
    %c0_158 = arith.constant 0 : index
    %c0_159 = arith.constant 0 : index
    %426 = vector.load %arg8[%c0_158, %c0_159] : memref<128x128xf32, #tpu.memory_space<vmem>>, vector<128x128xf32>
    %cst_160 = arith.constant dense<0.000000e+00> : vector<64x128xf32>
    %427 = tpu.matmul %425, %426, %cst_160 {dimension_numbers = #tpu.dot_dimension_numbers<[1], [0], [0], [1], [0, 0, 1, 1], [], []>} : vector<64x128xf32>, vector<128x128xf32>, vector<64x128xf32> -> vector<64x128xf32>
    %c0_161 = arith.constant 0 : index
    %c0_162 = arith.constant 0 : index
    %428 = vector.load %arg9[%c0_161, %c0_162] : memref<1x128xf32, #tpu.memory_space<vmem>>, vector<1x128xf32>
    %429 = vector.broadcast %428 : vector<1x128xf32> to vector<64x128xf32>
    %430 = arith.addf %427, %429 : vector<64x128xf32>
    %431 = vector.shape_cast %430 : vector<64x128xf32> to vector<8x8x128xf32>
    %c0_163 = arith.constant 0 : index
    %c0_164 = arith.constant 0 : index
    %c0_165 = arith.constant 0 : index
    %432 = vector.load %arg10[%c0_163, %c0_164, %c0_165] : memref<8x8x128xf32, #tpu.memory_space<vmem>>, vector<8x8x128xf32>
    tpu.vector_store %arg10[%c0_163, %c0_164, %c0_165], %431 {strides = array<i32>} : memref<8x8x128xf32, #tpu.memory_space<vmem>>, vector<8x8x128xf32>,
    return
  }
  func.func @transform_0(%arg0: i32, %arg1: memref<2x8xi32, #tpu.memory_space<smem>>) -> (i32, i32) {
    %c0_i32 = arith.constant 0 : i32
    %c0_i32_0 = arith.constant 0 : i32
    %c0_i32_1 = arith.constant 0 : i32
    return %c0_i32, %c0_i32_0 : i32, i32
  }
  func.func @transform_1(%arg0: i32, %arg1: memref<2x8xi32, #tpu.memory_space<smem>>) -> (i32, i32) {
    %c0_i32 = arith.constant 0 : i32
    %c0_i32_0 = arith.constant 0 : i32
    %c0_i32_1 = arith.constant 0 : i32
    return %c0_i32, %c0_i32_0 : i32, i32
  }
  func.func @transform_2(%arg0: i32, %arg1: memref<2x8xi32, #tpu.memory_space<smem>>) -> (i32, i32) {
    %c0_i32 = arith.constant 0 : i32
    %c0_i32_0 = arith.constant 0 : i32
    %c0_i32_1 = arith.constant 0 : i32
    return %c0_i32, %c0_i32_0 : i32, i32
  }
  func.func @transform_3(%arg0: i32, %arg1: memref<2x8xi32, #tpu.memory_space<smem>>) -> (i32, i32) {
    %c0_i32 = arith.constant 0 : i32
    %c0_i32_0 = arith.constant 0 : i32
    %c0_i32_1 = arith.constant 0 : i32
    return %c0_i32, %c0_i32_0 : i32, i32
  }
  func.func @transform_4(%arg0: i32, %arg1: memref<2x8xi32, #tpu.memory_space<smem>>) -> (i32, i32) {
    %c0_i32 = arith.constant 0 : i32
    %c0_i32_0 = arith.constant 0 : i32
    %c0_i32_1 = arith.constant 0 : i32
    return %c0_i32, %c0_i32_0 : i32, i32
  }
  func.func @transform_5(%arg0: i32, %arg1: memref<2x8xi32, #tpu.memory_space<smem>>) -> (i32, i32) {
    %c0_i32 = arith.constant 0 : i32
    %c0_i32_0 = arith.constant 0 : i32
    %c0_i32_1 = arith.constant 0 : i32
    return %c0_i32, %c0_i32_0 : i32, i32
  }
  func.func @transform_6(%arg0: i32, %arg1: memref<2x8xi32, #tpu.memory_space<smem>>) -> (i32, i32) {
    %c0_i32 = arith.constant 0 : i32
    %c0_i32_0 = arith.constant 0 : i32
    %c0_i32_1 = arith.constant 0 : i32
    return %c0_i32, %c0_i32_0 : i32, i32
  }
  func.func @transform_7(%arg0: i32, %arg1: memref<2x8xi32, #tpu.memory_space<smem>>) -> (i32, i32) {
    %c0_i32 = arith.constant 0 : i32
    %c0_i32_0 = arith.constant 0 : i32
    %c0_i32_1 = arith.constant 0 : i32
    return %c0_i32, %c0_i32_0 : i32, i32
  }
  func.func @transform_8(%arg0: i32, %arg1: memref<2x8xi32, #tpu.memory_space<smem>>) -> (i32, i32, i32) {
    %c0_i32 = arith.constant 0 : i32
    %c0_i32_0 = arith.constant 0 : i32
    %c0_i32_1 = arith.constant 0 : i32
    %c0_i32_2 = arith.constant 0 : i32
    return %c0_i32, %c0_i32_0, %c0_i32_1 : i32, i32, i32
  }
}

</mosaic_0001>

<llo_original>
// kernel: char_rnn_forward.1
$region0: #{char_rnn_forward.1}
  #allocation0 [shape = 'u32[]', space=smem, size = 0x4, offset = 0x4, fixed_abs, tag = 'smem constant byte address 0x4 - core index']
  #allocation1 [shape = 'u32[144,128]{1,0:T(1,128)}', space=vmem, size = 0x12000, scoped, tag = 'internal scratch']
  #allocation2 [shape = 'f32[8,8,512]{2,1,0:T(8,128)}', space=vmem, size = 0x20000, scoped, tag = 'scratch operand']
  #allocation3 [shape = 'f32[8,8,128]{2,1,0:T(8,128)}', space=vmem, size = 0x8000, scoped, tag = 'scratch operand']
  #allocation4 [shape = 's32[1]{0}', space=sflag, size = 0x4, scoped, tag = 'scoped memory for char_rnn_forward.1']
  #allocation5 [shape = 'u8[1024]{0}', space=smem, size = 0x400, scoped, tag = 'prefetched SMEM operand 0']
  %s0 = inlined_call_operand.vmem [shape: s32[2,8], index: 0, kind: input, shape index: {}]
  %s1 = inlined_call_operand.hbm [shape: f32[128,24], index: 1, kind: input, shape index: {}]
  %s2 = inlined_call_operand.hbm [shape: f32[24,512], index: 2, kind: input, shape index: {}]
  %s3 = inlined_call_operand.vmem [shape: f32[1,512], index: 3, kind: input, shape index: {}]
  %s4 = inlined_call_operand.hbm [shape: f32[128,512], index: 4, kind: input, shape index: {}]
  %s5 = inlined_call_operand.vmem [shape: f32[1,128], index: 5, kind: input, shape index: {}, may-alias: {5,6}]
  %s6 = inlined_call_operand.vmem [shape: f32[1,128], index: 6, kind: input, shape index: {}, may-alias: {5,6}]
  %s7 = inlined_call_operand.hbm [shape: f32[128,128], index: 7, kind: input, shape index: {}]
  %s8 = inlined_call_operand.vmem [shape: f32[1,128], index: 8, kind: input, shape index: {}]
  %s9 = inlined_call_operand.vmem [shape: f32[8,8,128], index: 9, kind: output, shape index: {}]
  %s10 = sld [smem:[#allocation0]]
  $region58: #{char_rnn_forward.1} parent=0
    _
  %s12 = ssub.s32 1, %s10
  %s13 = scalar_select 0, %s12, %s10
  %s14 = sshll.u32 %s0, 4
  %s15 = int_to_ptr.vmem [resolvable:$true] %s14
  %17 = dma.vmem_to_smem %s15, 32, [#allocation5], [#allocation4]
  %18 = dma.done [#allocation4], 32
  %19 = sfence
  $region1: #{char_rnn_forward.1} parent=0
    #allocation6 [shape = 'u8[65536]{0}', space=vmem, size = 0x10000, scoped, tag = 'input window, operand 1, single buffered']
    #allocation7 [shape = 's32[1]{0}', space=sflag, size = 0x4, scoped, tag = 'scoped memory for char_rnn_forward.1']
    #allocation8 [shape = 'u8[49152]{0}', space=vmem, size = 0xc000, scoped, tag = 'input window, operand 2, single buffered']
    #allocation9 [shape = 's32[1]{0}', space=sflag, size = 0x4, scoped, tag = 'scoped memory for char_rnn_forward.1']
    #allocation10 [shape = 'u8[262144]{0}', space=vmem, size = 0x40000, scoped, tag = 'input window, operand 4, single buffered']
    #allocation11 [shape = 'u8[65536]{0}', space=vmem, size = 0x10000, scoped, tag = 'input window, operand 7, single buffered']
    #allocation12 [shape = 's32[1]{0}', space=sflag, size = 0x4, scoped, tag = 'scoped memory for char_rnn_forward.1']
    %20 = vsyncpa [#allocation7], 0
    %21 = vsyncpa [#allocation9], 0
    %22 = vsyncpa [#allocation12], 0
    // Predicated region
    $region2: #{char_rnn_forward.1} parent=1 // pred_check
      _
    $region3: #{char_rnn_forward.1} parent=1 // pred_check_branch
      %24 = sbr.rel (0) target = $region5
    $region4: #{char_rnn_forward.1} parent=1 // pred_region
      %s26 = ssub.s32 2048, 2048
      %27 = vsyncadd [#allocation7], %s26
      %s28 = sshll.u32 [#allocation6], 4
      %s29 = int_to_ptr.vmem [resolvable:$true] %s28
      %34 = dma.hbm_to_vmem [thread:$0]  %s1, 2048, %s29, [#allocation7], 128, 128, 8
    $region5: #{char_rnn_forward.1} parent=1 // pred_fallthru
      _
    // Predicated region
    $region6: #{char_rnn_forward.1} parent=1 // pred_check
      _
    $region7: #{char_rnn_forward.1} parent=1 // pred_check_branch
      %36 = sbr.rel (0) target = $region9
    $region8: #{char_rnn_forward.1} parent=1 // pred_region
      %s38 = ssub.s32 1536, 1536
      %39 = vsyncadd [#allocation9], %s38
      %s40 = sshll.u32 [#allocation8], 4
      %s41 = int_to_ptr.vmem [resolvable:$true] %s40
      %46 = dma.hbm_to_vmem [thread:$0]  %s2, 1536, %s41, [#allocation9], 512, 512, 32
    $region9: #{char_rnn_forward.1} parent=1 // pred_fallthru
      _
    // Predicated region
    $region10: #{char_rnn_forward.1} parent=1 // pred_check
      _
    $region11: #{char_rnn_forward.1} parent=1 // pred_check_branch
      %48 = sbr.rel (0) target = $region13
    $region12: #{char_rnn_forward.1} parent=1 // pred_region
      _
    $region13: #{char_rnn_forward.1} parent=1 // pred_fallthru
      _
    // Predicated region
    $region14: #{char_rnn_forward.1} parent=1 // pred_check
      _
    $region15: #{char_rnn_forward.1} parent=1 // pred_check_branch
      %50 = sbr.rel (0) target = $region17
    $region16: #{char_rnn_forward.1} parent=1 // pred_region
      %s52 = ssub.s32 8192, 8192
      %53 = vsyncadd [#allocation9], %s52
      %s54 = sshll.u32 [#allocation10], 4
      %s55 = int_to_ptr.vmem [resolvable:$true] %s54
      %60 = dma.hbm_to_vmem [thread:$0]  %s4, 8192, %s55, [#allocation9], 512, 512, 32
    $region17: #{char_rnn_forward.1} parent=1 // pred_fallthru
      _
    // Predicated region
    $region18: #{char_rnn_forward.1} parent=1 // pred_check
      _
    $region19: #{char_rnn_forward.1} parent=1 // pred_check_branch
      %62 = sbr.rel (0) target = $region21
    $region20: #{char_rnn_forward.1} parent=1 // pred_region
      _
    $region21: #{char_rnn_forward.1} parent=1 // pred_fallthru
      _
    // Predicated region
    $region22: #{char_rnn_forward.1} parent=1 // pred_check
      _
    $region23: #{char_rnn_forward.1} parent=1 // pred_check_branch
      %64 = sbr.rel (0) target = $region25
    $region24: #{char_rnn_forward.1} parent=1 // pred_region
      _
    $region25: #{char_rnn_forward.1} parent=1 // pred_fallthru
      _
    // Predicated region
    $region26: #{char_rnn_forward.1} parent=1 // pred_check
      _
    $region27: #{char_rnn_forward.1} parent=1 // pred_check_branch
      %66 = sbr.rel (0) target = $region29
    $region28: #{char_rnn_forward.1} parent=1 // pred_region
      %s68 = ssub.s32 2048, 2048
      %69 = vsyncadd [#allocation12], %s68
      %s70 = sshll.u32 [#allocation11], 4
      %s71 = int_to_ptr.vmem [resolvable:$true] %s70
      %76 = dma.hbm_to_vmem [thread:$0]  %s7, 2048, %s71, [#allocation12], 128, 128, 8
    $region29: #{char_rnn_forward.1} parent=1 // pred_fallthru
      _
    // Predicated region
    $region30: #{char_rnn_forward.1} parent=1 // pred_check
      _
    $region31: #{char_rnn_forward.1} parent=1 // pred_check_branch
      %78 = sbr.rel (0) target = $region33
    $region32: #{char_rnn_forward.1} parent=1 // pred_region
      _
    $region33: #{char_rnn_forward.1} parent=1 // pred_fallthru
      _
    // Predicated region
    $region34: #{char_rnn_forward.1} parent=1 // pred_check
      _
    $region35: #{char_rnn_forward.1} parent=1 // pred_check_branch
      %80 = sbr.rel (0) target = $region37
    $region36: #{char_rnn_forward.1} parent=1 // pred_region
      %81 = dma.done [#allocation7], 2048
    $region37: #{char_rnn_forward.1} parent=1 // pred_fallthru
      _
    // Predicated region
    $region38: #{char_rnn_forward.1} parent=1 // pred_check
      _
    $region39: #{char_rnn_forward.1} parent=1 // pred_check_branch
      %83 = sbr.rel (0) target = $region41
    $region40: #{char_rnn_forward.1} parent=1 // pred_region
      %84 = dma.done [#allocation9], 1536
    $region41: #{char_rnn_forward.1} parent=1 // pred_fallthru
      _
    // Predicated region
    $region42: #{char_rnn_forward.1} parent=1 // pred_check
      _
    $region43: #{char_rnn_forward.1} parent=1 // pred_check_branch
      %86 = sbr.rel (0) target = $region45
    $region44: #{char_rnn_forward.1} parent=1 // pred_region
      %87 = dma.done [#allocation9], 8192
    $region45: #{char_rnn_forward.1} parent=1 // pred_fallthru
      _
    // Predicated region
    $region46: #{char_rnn_forward.1} parent=1 // pred_check
      _
    $region47: #{char_rnn_forward.1} parent=1 // pred_check_branch
      %89 = sbr.rel (0) target = $region49
    $region48: #{char_rnn_forward.1} parent=1 // pred_region
      %90 = dma.done [#allocation12], 2048
    $region49: #{char_rnn_forward.1} parent=1 // pred_fallthru
      _
    %v91 = vlaneseq
    %v92 = vshrl.u32 %v91, 7
    %v93 = vadd.s32 %v92, 8
    %v94 = vadd.s32 %v92, 16
    %v95 = vadd.s32 %v92, 24
    %v96 = vadd.s32 %v92, 32
    %v97 = vadd.s32 %v92, 40
    %v98 = vadd.s32 %v92, 48
    %v99 = vadd.s32 %v92, 56
    %vm100 = vcmp.eq.s32.totalorder %v92, 0
    %vm101 = vcmp.eq.s32.totalorder %v93, 0
    %vm102 = vcmp.eq.s32.totalorder %v94, 0
    %vm103 = vcmp.eq.s32.totalorder %v95, 0
    %vm104 = vcmp.eq.s32.totalorder %v96, 0
    %vm105 = vcmp.eq.s32.totalorder %v97, 0
    %vm106 = vcmp.eq.s32.totalorder %v98, 0
    %vm107 = vcmp.eq.s32.totalorder %v99, 0
    %s108 = sld [smem:[#allocation5]]
    %v109 = vstv %s108
    %v110 = vsel %vm100, %v109, 4294967295
    %v111 = vsel %vm101, %v109, 4294967295
    %v112 = vsel %vm102, %v109, 4294967295
    %v113 = vsel %vm103, %v109, 4294967295
    %v114 = vsel %vm104, %v109, 4294967295
    %v115 = vsel %vm105, %v109, 4294967295
    %v116 = vsel %vm106, %v109, 4294967295
    %v117 = vsel %vm107, %v109, 4294967295
    %vm118 = vcmp.eq.s32.totalorder %v92, 1
    %vm119 = vcmp.eq.s32.totalorder %v93, 1
    %vm120 = vcmp.eq.s32.totalorder %v94, 1
    %vm121 = vcmp.eq.s32.totalorder %v95, 1
    %vm122 = vcmp.eq.s32.totalorder %v96, 1
    %vm123 = vcmp.eq.s32.totalorder %v97, 1
    %vm124 = vcmp.eq.s32.totalorder %v98, 1
    %vm125 = vcmp.eq.s32.totalorder %v99, 1
    %s126 = sld [smem:[#allocation5 + $0x80]]
    %v127 = vstv %s126
    %v128 = vsel %vm118, %v127, %v110
    %v129 = vsel %vm119, %v127, %v111
    %v130 = vsel %vm120, %v127, %v112
    %v131 = vsel %vm121, %v127, %v113
    %v132 = vsel %vm122, %v127, %v114
    %v133 = vsel %vm123, %v127, %v115
    %v134 = vsel %vm124, %v127, %v116
    %v135 = vsel %vm125, %v127, %v117
    %vm136 = vcmp.eq.s32.totalorder %v92, 8
    %vm137 = vcmp.eq.s32.totalorder %v93, 8
    %vm138 = vcmp.eq.s32.totalorder %v94, 8
    %vm139 = vcmp.eq.s32.totalorder %v95, 8
    %vm140 = vcmp.eq.s32.totalorder %v96, 8
    %vm141 = vcmp.eq.s32.totalorder %v97, 8
    %vm142 = vcmp.eq.s32.totalorder %v98, 8
    %vm143 = vcmp.eq.s32.totalorder %v99, 8
    %s144 = sld [smem:[#allocation5 + $0x1]]
    %v145 = vstv %s144
    %v146 = vsel %vm136, %v145, %v128
    %v147 = vsel %vm137, %v145, %v129
    %v148 = vsel %vm138, %v145, %v130
    %v149 = vsel %vm139, %v145, %v131
    %v150 = vsel %vm140, %v145, %v132
    %v151 = vsel %vm141, %v145, %v133
    %v152 = vsel %vm142, %v145, %v134
    %v153 = vsel %vm143, %v145, %v135
    %vm154 = vcmp.eq.s32.totalorder %v92, 9
    %vm155 = vcmp.eq.s32.totalorder %v93, 9
    %vm156 = vcmp.eq.s32.totalorder %v94, 9
    %vm157 = vcmp.eq.s32.totalorder %v95, 9
    %vm158 = vcmp.eq.s32.totalorder %v96, 9
    %vm159 = vcmp.eq.s32.totalorder %v97, 9
    %vm160 = vcmp.eq.s32.totalorder %v98, 9
    %vm161 = vcmp.eq.s32.totalorder %v99, 9
    %s162 = sld [smem:[#allocation5 + $0x81]]
    %v163 = vstv %s162
    %v164 = vsel %vm154, %v163, %v146
    %v165 = vsel %vm155, %v163, %v147
    %v166 = vsel %vm156, %v163, %v148
    %v167 = vsel %vm157, %v163, %v149
    %v168 = vsel %vm158, %v163, %v150
    %v169 = vsel %vm159, %v163, %v151
    %v170 = vsel %vm160, %v163, %v152
    %v171 = vsel %vm161, %v163, %v153
    %vm172 = vcmp.eq.s32.totalorder %v92, 16
    %vm173 = vcmp.eq.s32.totalorder %v93, 16
    %vm174 = vcmp.eq.s32.totalorder %v94, 16
    %vm175 = vcmp.eq.s32.totalorder %v95, 16
    %vm176 = vcmp.eq.s32.totalorder %v96, 16
    %vm177 = vcmp.eq.s32.totalorder %v97, 16
    %vm178 = vcmp.eq.s32.totalorder %v98, 16
    %vm179 = vcmp.eq.s32.totalorder %v99, 16
    %s180 = sld [smem:[#allocation5 + $0x2]]
    %v181 = vstv %s180
    %v182 = vsel %vm172, %v181, %v164
    %v183 = vsel %vm173, %v181, %v165
    %v184 = vsel %vm174, %v181, %v166
    %v185 = vsel %vm175, %v181, %v167
    %v186 = vsel %vm176, %v181, %v168
    %v187 = vsel %vm177, %v181, %v169
    %v188 = vsel %vm178, %v181, %v170
    %v189 = vsel %vm179, %v181, %v171
    %vm190 = vcmp.eq.s32.totalorder %v92, 17
    %vm191 = vcmp.eq.s32.totalorder %v93, 17
    %vm192 = vcmp.eq.s32.totalorder %v94, 17
    %vm193 = vcmp.eq.s32.totalorder %v95, 17
    %vm194 = vcmp.eq.s32.totalorder %v96, 17
    %vm195 = vcmp.eq.s32.totalorder %v97, 17
    %vm196 = vcmp.eq.s32.totalorder %v98, 17
    %vm197 = vcmp.eq.s32.totalorder %v99, 17
    %s198 = sld [smem:[#allocation5 + $0x82]]
    %v199 = vstv %s198
    %v200 = vsel %vm190, %v199, %v182
    %v201 = vsel %vm191, %v199, %v183
    %v202 = vsel %vm192, %v199, %v184
    %v203 = vsel %vm193, %v199, %v185
    %v204 = vsel %vm194, %v199, %v186
    %v205 = vsel %vm195, %v199, %v187
    %v206 = vsel %vm196, %v199, %v188
    %v207 = vsel %vm197, %v199, %v189
    %vm208 = vcmp.eq.s32.totalorder %v92, 24
    %vm209 = vcmp.eq.s32.totalorder %v93, 24
    %vm210 = vcmp.eq.s32.totalorder %v94, 24
    %vm211 = vcmp.eq.s32.totalorder %v95, 24
    %vm212 = vcmp.eq.s32.totalorder %v96, 24
    %vm213 = vcmp.eq.s32.totalorder %v97, 24
    %vm214 = vcmp.eq.s32.totalorder %v98, 24
    %vm215 = vcmp.eq.s32.totalorder %v99, 24
    %s216 = sld [smem:[#allocation5 + $0x3]]
    %v217 = vstv %s216
    %v218 = vsel %vm208, %v217, %v200
    %v219 = vsel %vm209, %v217, %v201
    %v220 = vsel %vm210, %v217, %v202
    %v221 = vsel %vm211, %v217, %v203
    %v222 = vsel %vm212, %v217, %v204
    %v223 = vsel %vm213, %v217, %v205
    %v224 = vsel %vm214, %v217, %v206
    %v225 = vsel %vm215, %v217, %v207
    %vm226 = vcmp.eq.s32.totalorder %v92, 25
    %vm227 = vcmp.eq.s32.totalorder %v93, 25
    %vm228 = vcmp.eq.s32.totalorder %v94, 25
    %vm229 = vcmp.eq.s32.totalorder %v95, 25
    %vm230 = vcmp.eq.s32.totalorder %v96, 25
    %vm231 = vcmp.eq.s32.totalorder %v97, 25
    %vm232 = vcmp.eq.s32.totalorder %v98, 25
    %vm233 = vcmp.eq.s32.totalorder %v99, 25
    %s234 = sld [smem:[#allocation5 + $0x83]]
    %v235 = vstv %s234
    %v236 = vsel %vm226, %v235, %v218
    %v237 = vsel %vm227, %v235, %v219
    %v238 = vsel %vm228, %v235, %v220
    %v239 = vsel %vm229, %v235, %v221
    %v240 = vsel %vm230, %v235, %v222
    %v241 = vsel %vm231, %v235, %v223
    %v242 = vsel %vm232, %v235, %v224
    %v243 = vsel %vm233, %v235, %v225
    %vm244 = vcmp.eq.s32.totalorder %v92, 32
    %vm245 = vcmp.eq.s32.totalorder %v93, 32
    %vm246 = vcmp.eq.s32.totalorder %v94, 32
    %vm247 = vcmp.eq.s32.totalorder %v95, 32
    %vm248 = vcmp.eq.s32.totalorder %v96, 32
    %vm249 = vcmp.eq.s32.totalorder %v97, 32
    %vm250 = vcmp.eq.s32.totalorder %v98, 32
    %vm251 = vcmp.eq.s32.totalorder %v99, 32
    %s252 = sld [smem:[#allocation5 + $0x4]]
    %v253 = vstv %s252
    %v254 = vsel %vm244, %v253, %v236
    %v255 = vsel %vm245, %v253, %v237
    %v256 = vsel %vm246, %v253, %v238
    %v257 = vsel %vm247, %v253, %v239
    %v258 = vsel %vm248, %v253, %v240
    %v259 = vsel %vm249, %v253, %v241
    %v260 = vsel %vm250, %v253, %v242
    %v261 = vsel %vm251, %v253, %v243
    %vm262 = vcmp.eq.s32.totalorder %v92, 33
    %vm263 = vcmp.eq.s32.totalorder %v93, 33
    %vm264 = vcmp.eq.s32.totalorder %v94, 33
    %vm265 = vcmp.eq.s32.totalorder %v95, 33
    %vm266 = vcmp.eq.s32.totalorder %v96, 33
    %vm267 = vcmp.eq.s32.totalorder %v97, 33
    %vm268 = vcmp.eq.s32.totalorder %v98, 33
    %vm269 = vcmp.eq.s32.totalorder %v99, 33
    %s270 = sld [smem:[#allocation5 + $0x84]]
    %v271 = vstv %s270
    %v272 = vsel %vm262, %v271, %v254
    %v273 = vsel %vm263, %v271, %v255
    %v274 = vsel %vm264, %v271, %v256
    %v275 = vsel %vm265, %v271, %v257
    %v276 = vsel %vm266, %v271, %v258
    %v277 = vsel %vm267, %v271, %v259
    %v278 = vsel %vm268, %v271, %v260
    %v279 = vsel %vm269, %v271, %v261
    %vm280 = vcmp.eq.s32.totalorder %v92, 40
    %vm281 = vcmp.eq.s32.totalorder %v93, 40
    %vm282 = vcmp.eq.s32.totalorder %v94, 40
    %vm283 = vcmp.eq.s32.totalorder %v95, 40
    %vm284 = vcmp.eq.s32.totalorder %v96, 40
    %vm285 = vcmp.eq.s32.totalorder %v97, 40
    %vm286 = vcmp.eq.s32.totalorder %v98, 40
    %vm287 = vcmp.eq.s32.totalorder %v99, 40
    %s288 = sld [smem:[#allocation5 + $0x5]]
    %v289 = vstv %s288
    %v290 = vsel %vm280, %v289, %v272
    %v291 = vsel %vm281, %v289, %v273
    %v292 = vsel %vm282, %v289, %v274
    %v293 = vsel %vm283, %v289, %v275
    %v294 = vsel %vm284, %v289, %v276
    %v295 = vsel %vm285, %v289, %v277
    %v296 = vsel %vm286, %v289, %v278
    %v297 = vsel %vm287, %v289, %v279
    %vm298 = vcmp.eq.s32.totalorder %v92, 41
    %vm299 = vcmp.eq.s32.totalorder %v93, 41
    %vm300 = vcmp.eq.s32.totalorder %v94, 41
    %vm301 = vcmp.eq.s32.totalorder %v95, 41
    %vm302 = vcmp.eq.s32.totalorder %v96, 41
    %vm303 = vcmp.eq.s32.totalorder %v97, 41
    %vm304 = vcmp.eq.s32.totalorder %v98, 41
    %vm305 = vcmp.eq.s32.totalorder %v99, 41
    %s306 = sld [smem:[#allocation5 + $0x85]]
    %v307 = vstv %s306
    %v308 = vsel %vm298, %v307, %v290
    %v309 = vsel %vm299, %v307, %v291
    %v310 = vsel %vm300, %v307, %v292
    %v311 = vsel %vm301, %v307, %v293
    %v312 = vsel %vm302, %v307, %v294
    %v313 = vsel %vm303, %v307, %v295
    %v314 = vsel %vm304, %v307, %v296
    %v315 = vsel %vm305, %v307, %v297
    %vm316 = vcmp.eq.s32.totalorder %v92, 48
    %vm317 = vcmp.eq.s32.totalorder %v93, 48
    %vm318 = vcmp.eq.s32.totalorder %v94, 48
    %vm319 = vcmp.eq.s32.totalorder %v95, 48
    %vm320 = vcmp.eq.s32.totalorder %v96, 48
    %vm321 = vcmp.eq.s32.totalorder %v97, 48
    %vm322 = vcmp.eq.s32.totalorder %v98, 48
    %vm323 = vcmp.eq.s32.totalorder %v99, 48
    %s324 = sld [smem:[#allocation5 + $0x6]]
    %v325 = vstv %s324
    %v326 = vsel %vm316, %v325, %v308
    %v327 = vsel %vm317, %v325, %v309
    %v328 = vsel %vm318, %v325, %v310
    %v329 = vsel %vm319, %v325, %v311
    %v330 = vsel %vm320, %v325, %v312
    %v331 = vsel %vm321, %v325, %v313
    %v332 = vsel %vm322, %v325, %v314
    %v333 = vsel %vm323, %v325, %v315
    %vm334 = vcmp.eq.s32.totalorder %v92, 49
    %vm335 = vcmp.eq.s32.totalorder %v93, 49
    %vm336 = vcmp.eq.s32.totalorder %v94, 49
    %vm337 = vcmp.eq.s32.totalorder %v95, 49
    %vm338 = vcmp.eq.s32.totalorder %v96, 49
    %vm339 = vcmp.eq.s32.totalorder %v97, 49
    %vm340 = vcmp.eq.s32.totalorder %v98, 49
    %vm341 = vcmp.eq.s32.totalorder %v99, 49
    %s342 = sld [smem:[#allocation5 + $0x86]]
    %v343 = vstv %s342
    %v344 = vsel %vm334, %v343, %v326
    %v345 = vsel %vm335, %v343, %v327
    %v346 = vsel %vm336, %v343, %v328
    %v347 = vsel %vm337, %v343, %v329
    %v348 = vsel %vm338, %v343, %v330
    %v349 = vsel %vm339, %v343, %v331
    %v350 = vsel %vm340, %v343, %v332
    %v351 = vsel %vm341, %v343, %v333
    %vm352 = vcmp.eq.s32.totalorder %v92, 56
    %vm353 = vcmp.eq.s32.totalorder %v93, 56
    %vm354 = vcmp.eq.s32.totalorder %v94, 56
    %vm355 = vcmp.eq.s32.totalorder %v95, 56
    %vm356 = vcmp.eq.s32.totalorder %v96, 56
    %vm357 = vcmp.eq.s32.totalorder %v97, 56
    %vm358 = vcmp.eq.s32.totalorder %v98, 56
    %vm359 = vcmp.eq.s32.totalorder %v99, 56
    %s360 = sld [smem:[#allocation5 + $0x7]]
    %v361 = vstv %s360
    %v362 = vsel %vm352, %v361, %v344
    %v363 = vsel %vm353, %v361, %v345
    %v364 = vsel %vm354, %v361, %v346
    %v365 = vsel %vm355, %v361, %v347
    %v366 = vsel %vm356, %v361, %v348
    %v367 = vsel %vm357, %v361, %v349
    %v368 = vsel %vm358, %v361, %v350
    %v369 = vsel %vm359, %v361, %v351
    %vm370 = vcmp.eq.s32.totalorder %v92, 57
    %vm371 = vcmp.eq.s32.totalorder %v93, 57
    %vm372 = vcmp.eq.s32.totalorder %v94, 57
    %vm373 = vcmp.eq.s32.totalorder %v95, 57
    %vm374 = vcmp.eq.s32.totalorder %v96, 57
    %vm375 = vcmp.eq.s32.totalorder %v97, 57
    %vm376 = vcmp.eq.s32.totalorder %v98, 57
    %vm377 = vcmp.eq.s32.totalorder %v99, 57
    %s378 = sld [smem:[#allocation5 + $0x87]]
    %v379 = vstv %s378
    %v380 = vsel %vm370, %v379, %v362
    %v381 = vsel %vm371, %v379, %v363
    %v382 = vsel %vm372, %v379, %v364
    %v383 = vsel %vm373, %v379, %v365
    %v384 = vsel %vm374, %v379, %v366
    %v385 = vsel %vm375, %v379, %v367
    %v386 = vsel %vm376, %v379, %v368
    %v387 = vsel %vm377, %v379, %v369
    %v388 = vlaneseq
    %v389 = vand.u32 %v388, 127
    %vm390 = vcmp.eq.s32.totalorder %v389, %v380
    %vm391 = vcmp.eq.s32.totalorder %v389, %v381
    %vm392 = vcmp.eq.s32.totalorder %v389, %v382
    %vm393 = vcmp.eq.s32.totalorder %v389, %v383
    %vm394 = vcmp.eq.s32.totalorder %v389, %v384
    %vm395 = vcmp.eq.s32.totalorder %v389, %v385
    %vm396 = vcmp.eq.s32.totalorder %v389, %v386
    %vm397 = vcmp.eq.s32.totalorder %v389, %v387
    %v398 = vsel %vm390, 1, 0
    %v399 = vsel %vm391, 1, 0
    %v400 = vsel %vm392, 1, 0
    %v401 = vsel %vm393, 1, 0
    %v402 = vsel %vm394, 1, 0
    %v403 = vsel %vm395, 1, 0
    %v404 = vsel %vm396, 1, 0
    %v405 = vsel %vm397, 1, 0
    %v406 = vcvt.s32.f32 %v398
    %v407 = vcvt.s32.f32 %v399
    %v408 = vcvt.s32.f32 %v400
    %v409 = vcvt.s32.f32 %v401
    %v410 = vcvt.s32.f32 %v402
    %v411 = vcvt.s32.f32 %v403
    %v412 = vcvt.s32.f32 %v404
    %v413 = vcvt.s32.f32 %v405
    %v414 = vld [vmem:[#allocation6] sm:$0xff]
    %v415 = vld [vmem:[#allocation6 + $0x8] sm:$0xff]
    %v416 = vld [vmem:[#allocation6 + $0x10] sm:$0xff]
    %v417 = vld [vmem:[#allocation6 + $0x18] sm:$0xff]
    %v418 = vld [vmem:[#allocation6 + $0x20] sm:$0xff]
    %v419 = vld [vmem:[#allocation6 + $0x28] sm:$0xff]
    %v420 = vld [vmem:[#allocation6 + $0x30] sm:$0xff]
    %v421 = vld [vmem:[#allocation6 + $0x38] sm:$0xff]
    %v422 = vld [vmem:[#allocation6 + $0x40] sm:$0xff]
    %v423 = vld [vmem:[#allocation6 + $0x48] sm:$0xff]
    %v424 = vld [vmem:[#allocation6 + $0x50] sm:$0xff]
    %v425 = vld [vmem:[#allocation6 + $0x58] sm:$0xff]
    %v426 = vld [vmem:[#allocation6 + $0x60] sm:$0xff]
    %v427 = vld [vmem:[#allocation6 + $0x68] sm:$0xff]
    %v428 = vld [vmem:[#allocation6 + $0x70] sm:$0xff]
    %v429 = vld [vmem:[#allocation6 + $0x78] sm:$0xff]
    %430 = vmatprep.subr.mxu0 0.0
    %431 = vmatpush1.msra.mxu0 %v429
    %432 = vmatprep.subr.mxu0 0.0
    %433 = vmatpush1.msra.mxu0 %v428
    %434 = vmatprep.subr.mxu0 0.0
    %435 = vmatpush1.msra.mxu0 %v427
    %436 = vmatprep.subr.mxu0 0.0
    %437 = vmatpush1.msra.mxu0 %v426
    %438 = vmatprep.subr.mxu0 0.0
    %439 = vmatpush1.msra.mxu0 %v425
    %440 = vmatprep.subr.mxu0 0.0
    %441 = vmatpush1.msra.mxu0 %v424
    %442 = vmatprep.subr.mxu0 0.0
    %443 = vmatpush1.msra.mxu0 %v423
    %444 = vmatprep.subr.mxu0 0.0
    %445 = vmatpush1.msra.mxu0 %v422
    %446 = vmatprep.subr.mxu0 0.0
    %447 = vmatpush1.msra.mxu0 %v421
    %448 = vmatprep.subr.mxu0 0.0
    %449 = vmatpush1.msra.mxu0 %v420
    %450 = vmatprep.subr.mxu0 0.0
    %451 = vmatpush1.msra.mxu0 %v419
    %452 = vmatprep.subr.mxu0 0.0
    %453 = vmatpush1.msra.mxu0 %v418
    %454 = vmatprep.subr.mxu0 0.0
    %455 = vmatpush1.msra.mxu0 %v417
    %456 = vmatprep.subr.mxu0 0.0
    %457 = vmatpush1.msra.mxu0 %v416
    %458 = vmatprep.subr.mxu0 0.0
    %459 = vmatpush1.msra.mxu0 %v415
    %460 = vmatprep.subr.mxu0 0.0
    %461 = vmatpush1.msra.mxu0 %v414
    %462 = vmatprep.subr.mxu0 0.0
    %463 = vmatpush2.msra.mxu0 0.0
    %464 = vmatprep.subr.mxu0 0.0
    %465 = vmatpush2.msra.mxu0 0.0
    %466 = vmatprep.subr.mxu0 0.0
    %467 = vmatpush2.msra.mxu0 0.0
    %468 = vmatprep.subr.mxu0 0.0
    %469 = vmatpush2.msra.mxu0 0.0
    %470 = vmatprep.subr.mxu0 0.0
    %471 = vmatpush2.msra.mxu0 0.0
    %472 = vmatprep.subr.mxu0 0.0
    %473 = vmatpush2.msra.mxu0 0.0
    %474 = vmatprep.subr.mxu0 0.0
    %475 = vmatpush2.msra.mxu0 0.0
    %476 = vmatprep.subr.mxu0 0.0
    %477 = vmatpush2.msra.mxu0 0.0
    %478 = vmatprep.subr.mxu0 0.0
    %479 = vmatpush2.msra.mxu0 0.0
    %480 = vmatprep.subr.mxu0 0.0
    %481 = vmatpush2.msra.mxu0 0.0
    %482 = vmatprep.subr.mxu0 0.0
    %483 = vmatpush2.msra.mxu0 0.0
    %484 = vmatprep.subr.mxu0 0.0
    %485 = vmatpush2.msra.mxu0 0.0
    %486 = vmatprep.subr.mxu0 0.0
    %487 = vmatpush2.msra.mxu0 0.0
    %488 = vmatprep.subr.mxu0 0.0
    %489 = vmatpush2.msra.mxu0 0.0
    %490 = vmatprep.subr.mxu0 0.0
    %491 = vmatpush2.msra.mxu0 0.0
    %492 = vmatprep.subr.mxu0 0.0
    %493 = vmatpush2.msra.mxu0 0.0
    %494 = vmatprep.mubr.f32.mxu0 0.0
    %495 = vmatmul.mubr.f32.gmra.mxu0 %v406
    %v496 = vpop.f32.mrf.mxu0
    %v497 = vadd.f32 0.0, %v496
    %v498 = vpop.f32.mrf.mxu0
    %499 = vmatprep.mubr.f32.mxu0 0.0
    %500 = vmatmul.mubr.f32.gmra.mxu0 %v407
    %v501 = vpop.f32.mrf.mxu0
    %v502 = vadd.f32 0.0, %v501
    %v503 = vpop.f32.mrf.mxu0
    %504 = vmatprep.mubr.f32.mxu0 0.0
    %505 = vmatmul.mubr.f32.gmra.mxu0 %v408
    %v506 = vpop.f32.mrf.mxu0
    %v507 = vadd.f32 0.0, %v506
    %v508 = vpop.f32.mrf.mxu0
    %509 = vmatprep.mubr.f32.mxu0 0.0
    %510 = vmatmul.mubr.f32.gmra.mxu0 %v409
    %v511 = vpop.f32.mrf.mxu0
    %v512 = vadd.f32 0.0, %v511
    %v513 = vpop.f32.mrf.mxu0
    %514 = vmatprep.mubr.f32.mxu0 0.0
    %515 = vmatmul.mubr.f32.gmra.mxu0 %v410
    %v516 = vpop.f32.mrf.mxu0
    %v517 = vadd.f32 0.0, %v516
    %v518 = vpop.f32.mrf.mxu0
    %519 = vmatprep.mubr.f32.mxu0 0.0
    %520 = vmatmul.mubr.f32.gmra.mxu0 %v411
    %v521 = vpop.f32.mrf.mxu0
    %v522 = vadd.f32 0.0, %v521
    %v523 = vpop.f32.mrf.mxu0
    %524 = vmatprep.mubr.f32.mxu0 0.0
    %525 = vmatmul.mubr.f32.gmra.mxu0 %v412
    %v526 = vpop.f32.mrf.mxu0
    %v527 = vadd.f32 0.0, %v526
    %v528 = vpop.f32.mrf.mxu0
    %529 = vmatprep.mubr.f32.mxu0 0.0
    %530 = vmatmul.mubr.f32.gmra.mxu0 %v413
    %v531 = vpop.f32.mrf.mxu0
    %v532 = vadd.f32 0.0, %v531
    %v533 = vpop.f32.mrf.mxu0
    %534 = vdwg.mxu0
    %v535 = vld [vmem:[#allocation8] sm:$0xff]
    %v536 = vld [vmem:[#allocation8 + $0x8] sm:$0xff]
    %v537 = vld [vmem:[#allocation8 + $0x10] sm:$0xff]
    %v538 = vld [vmem:[#allocation8 + $0x18] sm:$0xff]
    %v539 = vld [vmem:[#allocation8 + $0x20] sm:$0xff]
    %v540 = vld [vmem:[#allocation8 + $0x28] sm:$0xff]
    %v541 = vld [vmem:[#allocation8 + $0x30] sm:$0xff]
    %v542 = vld [vmem:[#allocation8 + $0x38] sm:$0xff]
    %v543 = vld [vmem:[#allocation8 + $0x40] sm:$0xff]
    %v544 = vld [vmem:[#allocation8 + $0x48] sm:$0xff]
    %v545 = vld [vmem:[#allocation8 + $0x50] sm:$0xff]
    %v546 = vld [vmem:[#allocation8 + $0x58] sm:$0xff]
    %v547 = vld [vmem:[%s3] sm:$0xf]
    %v549 = vlaneseq
    %v550 = vshrl.u32 %v549, 7
    %v551 = vsub.s32 0, %v550
    %v552 = vrot.slane %v547, %v551
    %v553 = vlaneseq
    %v554 = vshrl.u32 %v553, 7
    %v555 = vsub.s32 1, %v554
    %v556 = vrot.slane %v547, %v555
    %v557 = vlaneseq
    %v558 = vshrl.u32 %v557, 7
    %v559 = vsub.s32 2, %v558
    %v560 = vrot.slane %v547, %v559
    %v561 = vlaneseq
    %v562 = vshrl.u32 %v561, 7
    %v563 = vsub.s32 3, %v562
    %v564 = vrot.slane %v547, %v563
    %vm569 = vcmask 195584
    %v571 = vsel %vm569, %v497, 0
    %v574 = vsel %vm569, %v502, 0
    %v577 = vsel %vm569, %v507, 0
    %v580 = vsel %vm569, %v512, 0
    %v583 = vsel %vm569, %v517, 0
    %v586 = vsel %vm569, %v522, 0
    %v589 = vsel %vm569, %v527, 0
    %v592 = vsel %vm569, %v532, 0
    %594 = vmatprep.subr.mxu0 0.0
    %595 = vmatpush1.msra.mxu0 0.0
    %596 = vmatprep.subr.mxu0 0.0
    %597 = vmatpush1.msra.mxu0 0.0
    %598 = vmatprep.subr.mxu0 0.0
    %599 = vmatpush1.msra.mxu0 0.0
    %600 = vmatprep.subr.mxu0 0.0
    %601 = vmatpush1.msra.mxu0 0.0
    %602 = vmatprep.subr.mxu0 0.0
    %603 = vmatpush1.msra.mxu0 0.0
    %604 = vmatprep.subr.mxu0 0.0
    %605 = vmatpush1.msra.mxu0 0.0
    %606 = vmatprep.subr.mxu0 0.0
    %607 = vmatpush1.msra.mxu0 0.0
    %608 = vmatprep.subr.mxu0 0.0
    %609 = vmatpush1.msra.mxu0 0.0
    %610 = vmatprep.subr.mxu0 0.0
    %611 = vmatpush1.msra.mxu0 0.0
    %612 = vmatprep.subr.mxu0 0.0
    %613 = vmatpush1.msra.mxu0 0.0
    %614 = vmatprep.subr.mxu0 0.0
    %615 = vmatpush1.msra.mxu0 0.0
    %616 = vmatprep.subr.mxu0 0.0
    %617 = vmatpush1.msra.mxu0 0.0
    %618 = vmatprep.subr.mxu0 0.0
    %619 = vmatpush1.msra.mxu0 0.0
    %620 = vmatprep.subr.mxu0 %v544
    %621 = vmatpush1.msra.mxu0 %v543
    %622 = vmatprep.subr.mxu0 %v540
    %623 = vmatpush1.msra.mxu0 %v539
    %624 = vmatprep.subr.mxu0 %v536
    %625 = vmatpush1.msra.mxu0 %v535
    %626 = vmatprep.subr.mxu0 0.0
    %627 = vmatpush2.msra.mxu0 0.0
    %628 = vmatprep.subr.mxu0 0.0
    %629 = vmatpush2.msra.mxu0 0.0
    %630 = vmatprep.subr.mxu0 0.0
    %631 = vmatpush2.msra.mxu0 0.0
    %632 = vmatprep.subr.mxu0 0.0
    %633 = vmatpush2.msra.mxu0 0.0
    %634 = vmatprep.subr.mxu0 0.0
    %635 = vmatpush2.msra.mxu0 0.0
    %636 = vmatprep.subr.mxu0 0.0
    %637 = vmatpush2.msra.mxu0 0.0
    %638 = vmatprep.subr.mxu0 0.0
    %639 = vmatpush2.msra.mxu0 0.0
    %640 = vmatprep.subr.mxu0 0.0
    %641 = vmatpush2.msra.mxu0 0.0
    %642 = vmatprep.subr.mxu0 0.0
    %643 = vmatpush2.msra.mxu0 0.0
    %644 = vmatprep.subr.mxu0 0.0
    %645 = vmatpush2.msra.mxu0 0.0
    %646 = vmatprep.subr.mxu0 0.0
    %647 = vmatpush2.msra.mxu0 0.0
    %648 = vmatprep.subr.mxu0 0.0
    %649 = vmatpush2.msra.mxu0 0.0
    %650 = vmatprep.subr.mxu0 0.0
    %651 = vmatpush2.msra.mxu0 0.0
    %652 = vmatprep.subr.mxu0 0.0
    %653 = vmatpush2.msra.mxu0 0.0
    %654 = vmatprep.subr.mxu0 0.0
    %655 = vmatpush2.msra.mxu0 0.0
    %656 = vmatprep.subr.mxu0 0.0
    %657 = vmatpush2.msra.mxu0 0.0
    %658 = vmatprep.mubr.f32.mxu0 0.0
    %659 = vmatmul.mubr.f32.gmra.mxu0 %v571
    %v660 = vpop.f32.mrf.mxu0
    %v661 = vadd.f32 %v552, %v660
    %v662 = vpop.f32.mrf.mxu0
    %v663 = vadd.f32 %v556, %v662
    %664 = vmatprep.mubr.f32.mxu0 0.0
    %665 = vmatmul.mubr.f32.gmra.mxu0 %v574
    %v666 = vpop.f32.mrf.mxu0
    %v667 = vadd.f32 %v552, %v666
    %v668 = vpop.f32.mrf.mxu0
    %v669 = vadd.f32 %v556, %v668
    %670 = vmatprep.mubr.f32.mxu0 0.0
    %671 = vmatmul.mubr.f32.gmra.mxu0 %v577
    %v672 = vpop.f32.mrf.mxu0
    %v673 = vadd.f32 %v552, %v672
    %v674 = vpop.f32.mrf.mxu0
    %v675 = vadd.f32 %v556, %v674
    %676 = vmatprep.mubr.f32.mxu0 0.0
    %677 = vmatmul.mubr.f32.gmra.mxu0 %v580
    %v678 = vpop.f32.mrf.mxu0
    %v679 = vadd.f32 %v552, %v678
    %v680 = vpop.f32.mrf.mxu0
    %v681 = vadd.f32 %v556, %v680
    %682 = vmatprep.mubr.f32.mxu0 0.0
    %683 = vmatmul.mubr.f32.gmra.mxu0 %v583
    %v684 = vpop.f32.mrf.mxu0
    %v685 = vadd.f32 %v552, %v684
    %v686 = vpop.f32.mrf.mxu0
    %v687 = vadd.f32 %v556, %v686
    %688 = vmatprep.mubr.f32.mxu0 0.0
    %689 = vmatmul.mubr.f32.gmra.mxu0 %v586
    %v690 = vpop.f32.mrf.mxu0
    %v691 = vadd.f32 %v552, %v690
    %v692 = vpop.f32.mrf.mxu0
    %v693 = vadd.f32 %v556, %v692
    %694 = vmatprep.mubr.f32.mxu0 0.0
    %695 = vmatmul.mubr.f32.gmra.mxu0 %v589
    %v696 = vpop.f32.mrf.mxu0
    %v697 = vadd.f32 %v552, %v696
    %v698 = vpop.f32.mrf.mxu0
    %v699 = vadd.f32 %v556, %v698
    %700 = vmatprep.mubr.f32.mxu0 0.0
    %701 = vmatmul.mubr.f32.gmra.mxu0 %v592
    %v702 = vpop.f32.mrf.mxu0
    %v703 = vadd.f32 %v552, %v702
    %v704 = vpop.f32.mrf.mxu0
    %v705 = vadd.f32 %v556, %v704
    %706 = vdwg.mxu0
    %707 = vmatprep.subr.mxu0 0.0
    %708 = vmatpush1.msra.mxu0 0.0
    %709 = vmatprep.subr.mxu0 0.0
    %710 = vmatpush1.msra.mxu0 0.0
    %711 = vmatprep.subr.mxu0 0.0
    %712 = vmatpush1.msra.mxu0 0.0
    %713 = vmatprep.subr.mxu0 0.0
    %714 = vmatpush1.msra.mxu0 0.0
    %715 = vmatprep.subr.mxu0 0.0
    %716 = vmatpush1.msra.mxu0 0.0
    %717 = vmatprep.subr.mxu0 0.0
    %718 = vmatpush1.msra.mxu0 0.0
    %719 = vmatprep.subr.mxu0 0.0
    %720 = vmatpush1.msra.mxu0 0.0
    %721 = vmatprep.subr.mxu0 0.0
    %722 = vmatpush1.msra.mxu0 0.0
    %723 = vmatprep.subr.mxu0 0.0
    %724 = vmatpush1.msra.mxu0 0.0
    %725 = vmatprep.subr.mxu0 0.0
    %726 = vmatpush1.msra.mxu0 0.0
    %727 = vmatprep.subr.mxu0 0.0
    %728 = vmatpush1.msra.mxu0 0.0
    %729 = vmatprep.subr.mxu0 0.0
    %730 = vmatpush1.msra.mxu0 0.0
    %731 = vmatprep.subr.mxu0 0.0
    %732 = vmatpush1.msra.mxu0 0.0
    %733 = vmatprep.subr.mxu0 %v546
    %734 = vmatpush1.msra.mxu0 %v545
    %735 = vmatprep.subr.mxu0 %v542
    %736 = vmatpush1.msra.mxu0 %v541
    %737 = vmatprep.subr.mxu0 %v538
    %738 = vmatpush1.msra.mxu0 %v537
    %739 = vmatprep.subr.mxu0 0.0
    %740 = vmatpush2.msra.mxu0 0.0
    %741 = vmatprep.subr.mxu0 0.0
    %742 = vmatpush2.msra.mxu0 0.0
    %743 = vmatprep.subr.mxu0 0.0
    %744 = vmatpush2.msra.mxu0 0.0
    %745 = vmatprep.subr.mxu0 0.0
    %746 = vmatpush2.msra.mxu0 0.0
    %747 = vmatprep.subr.mxu0 0.0
    %748 = vmatpush2.msra.mxu0 0.0
    %749 = vmatprep.subr.mxu0 0.0
    %750 = vmatpush2.msra.mxu0 0.0
    %751 = vmatprep.subr.mxu0 0.0
    %752 = vmatpush2.msra.mxu0 0.0
    %753 = vmatprep.subr.mxu0 0.0
    %754 = vmatpush2.msra.mxu0 0.0
    %755 = vmatprep.subr.mxu0 0.0
    %756 = vmatpush2.msra.mxu0 0.0
    %757 = vmatprep.subr.mxu0 0.0
    %758 = vmatpush2.msra.mxu0 0.0
    %759 = vmatprep.subr.mxu0 0.0
    %760 = vmatpush2.msra.mxu0 0.0
    %761 = vmatprep.subr.mxu0 0.0
    %762 = vmatpush2.msra.mxu0 0.0
    %763 = vmatprep.subr.mxu0 0.0
    %764 = vmatpush2.msra.mxu0 0.0
    %765 = vmatprep.subr.mxu0 0.0
    %766 = vmatpush2.msra.mxu0 0.0
    %767 = vmatprep.subr.mxu0 0.0
    %768 = vmatpush2.msra.mxu0 0.0
    %769 = vmatprep.subr.mxu0 0.0
    %770 = vmatpush2.msra.mxu0 0.0
    %771 = vmatprep.mubr.f32.mxu0 0.0
    %772 = vmatmul.mubr.f32.gmra.mxu0 %v571
    %v773 = vpop.f32.mrf.mxu0
    %v774 = vadd.f32 %v560, %v773
    %v775 = vpop.f32.mrf.mxu0
    %v776 = vadd.f32 %v564, %v775
    %777 = vmatprep.mubr.f32.mxu0 0.0
    %778 = vmatmul.mubr.f32.gmra.mxu0 %v574
    %v779 = vpop.f32.mrf.mxu0
    %v780 = vadd.f32 %v560, %v779
    %v781 = vpop.f32.mrf.mxu0
    %v782 = vadd.f32 %v564, %v781
    %783 = vmatprep.mubr.f32.mxu0 0.0
    %784 = vmatmul.mubr.f32.gmra.mxu0 %v577
    %v785 = vpop.f32.mrf.mxu0
    %v786 = vadd.f32 %v560, %v785
    %v787 = vpop.f32.mrf.mxu0
    %v788 = vadd.f32 %v564, %v787
    %789 = vmatprep.mubr.f32.mxu0 0.0
    %790 = vmatmul.mubr.f32.gmra.mxu0 %v580
    %v791 = vpop.f32.mrf.mxu0
    %v792 = vadd.f32 %v560, %v791
    %v793 = vpop.f32.mrf.mxu0
    %v794 = vadd.f32 %v564, %v793
    %795 = vmatprep.mubr.f32.mxu0 0.0
    %796 = vmatmul.mubr.f32.gmra.mxu0 %v583
    %v797 = vpop.f32.mrf.mxu0
    %v798 = vadd.f32 %v560, %v797
    %v799 = vpop.f32.mrf.mxu0
    %v800 = vadd.f32 %v564, %v799
    %801 = vmatprep.mubr.f32.mxu0 0.0
    %802 = vmatmul.mubr.f32.gmra.mxu0 %v586
    %v803 = vpop.f32.mrf.mxu0
    %v804 = vadd.f32 %v560, %v803
    %v805 = vpop.f32.mrf.mxu0
    %v806 = vadd.f32 %v564, %v805
    %807 = vmatprep.mubr.f32.mxu0 0.0
    %808 = vmatmul.mubr.f32.gmra.mxu0 %v589
    %v809 = vpop.f32.mrf.mxu0
    %v810 = vadd.f32 %v560, %v809
    %v811 = vpop.f32.mrf.mxu0
    %v812 = vadd.f32 %v564, %v811
    %813 = vmatprep.mubr.f32.mxu0 0.0
    %814 = vmatmul.mubr.f32.gmra.mxu0 %v592
    %v815 = vpop.f32.mrf.mxu0
    %v816 = vadd.f32 %v560, %v815
    %v817 = vpop.f32.mrf.mxu0
    %v818 = vadd.f32 %v564, %v817
    %819 = vdwg.mxu0
    %820 = vst [vmem:[#allocation2] sm:$0xff] %v661
    %821 = vst [vmem:[#allocation2 + $0x8] sm:$0xff] %v663
    %822 = vst [vmem:[#allocation2 + $0x10] sm:$0xff] %v774
    %823 = vst [vmem:[#allocation2 + $0x18] sm:$0xff] %v776
    %824 = vst [vmem:[#allocation2 + $0x20] sm:$0xff] %v667
    %825 = vst [vmem:[#allocation2 + $0x28] sm:$0xff] %v669
    %826 = vst [vmem:[#allocation2 + $0x30] sm:$0xff] %v780
    %827 = vst [vmem:[#allocation2 + $0x38] sm:$0xff] %v782
    %828 = vst [vmem:[#allocation2 + $0x40] sm:$0xff] %v673
    %829 = vst [vmem:[#allocation2 + $0x48] sm:$0xff] %v675
    %830 = vst [vmem:[#allocation2 + $0x50] sm:$0xff] %v786
    %831 = vst [vmem:[#allocation2 + $0x58] sm:$0xff] %v788
    %832 = vst [vmem:[#allocation2 + $0x60] sm:$0xff] %v679
    %833 = vst [vmem:[#allocation2 + $0x68] sm:$0xff] %v681
    %834 = vst [vmem:[#allocation2 + $0x70] sm:$0xff] %v792
    %835 = vst [vmem:[#allocation2 + $0x78] sm:$0xff] %v794
    %836 = vst [vmem:[#allocation2 + $0x80] sm:$0xff] %v685
    %837 = vst [vmem:[#allocation2 + $0x88] sm:$0xff] %v687
    %838 = vst [vmem:[#allocation2 + $0x90] sm:$0xff] %v798
    %839 = vst [vmem:[#allocation2 + $0x98] sm:$0xff] %v800
    %840 = vst [vmem:[#allocation2 + $0xa0] sm:$0xff] %v691
    %841 = vst [vmem:[#allocation2 + $0xa8] sm:$0xff] %v693
    %842 = vst [vmem:[#allocation2 + $0xb0] sm:$0xff] %v804
    %843 = vst [vmem:[#allocation2 + $0xb8] sm:$0xff] %v806
    %844 = vst [vmem:[#allocation2 + $0xc0] sm:$0xff] %v697
    %845 = vst [vmem:[#allocation2 + $0xc8] sm:$0xff] %v699
    %846 = vst [vmem:[#allocation2 + $0xd0] sm:$0xff] %v810
    %847 = vst [vmem:[#allocation2 + $0xd8] sm:$0xff] %v812
    %848 = vst [vmem:[#allocation2 + $0xe0] sm:$0xff] %v703
    %849 = vst [vmem:[#allocation2 + $0xe8] sm:$0xff] %v705
    %850 = vst [vmem:[#allocation2 + $0xf0] sm:$0xff] %v816
    %851 = vst [vmem:[#allocation2 + $0xf8] sm:$0xff] %v818
    %v852 = vld [vmem:[#allocation10] sm:$0xff]
    %v853 = vld [vmem:[#allocation10 + $0x8] sm:$0xff]
    %v854 = vld [vmem:[#allocation10 + $0x10] sm:$0xff]
    %v855 = vld [vmem:[#allocation10 + $0x18] sm:$0xff]
    %v856 = vld [vmem:[#allocation10 + $0x20] sm:$0xff]
    %v857 = vld [vmem:[#allocation10 + $0x28] sm:$0xff]
    %v858 = vld [vmem:[#allocation10 + $0x30] sm:$0xff]
    %v859 = vld [vmem:[#allocation10 + $0x38] sm:$0xff]
    %v860 = vld [vmem:[#allocation10 + $0x40] sm:$0xff]
    %v861 = vld [vmem:[#allocation10 + $0x48] sm:$0xff]
    %v862 = vld [vmem:[#allocation10 + $0x50] sm:$0xff]
    %v863 = vld [vmem:[#allocation10 + $0x58] sm:$0xff]
    %v864 = vld [vmem:[#allocation10 + $0x60] sm:$0xff]
    %v865 = vld [vmem:[#allocation10 + $0x68] sm:$0xff]
    %v866 = vld [vmem:[#allocation10 + $0x70] sm:$0xff]
    %v867 = vld [vmem:[#allocation10 + $0x78] sm:$0xff]
    %v868 = vld [vmem:[#allocation10 + $0x80] sm:$0xff]
    %v869 = vld [vmem:[#allocation10 + $0x88] sm:$0xff]
    %v870 = vld [vmem:[#allocation10 + $0x90] sm:$0xff]
    %v871 = vld [vmem:[#allocation10 + $0x98] sm:$0xff]
    %v872 = vld [vmem:[#allocation10 + $0xa0] sm:$0xff]
    %v873 = vld [vmem:[#allocation10 + $0xa8] sm:$0xff]
    %v874 = vld [vmem:[#allocation10 + $0xb0] sm:$0xff]
    %v875 = vld [vmem:[#allocation10 + $0xb8] sm:$0xff]
    %v876 = vld [vmem:[#allocation10 + $0xc0] sm:$0xff]
    %v877 = vld [vmem:[#allocation10 + $0xc8] sm:$0xff]
    %v878 = vld [vmem:[#allocation10 + $0xd0] sm:$0xff]
    %v879 = vld [vmem:[#allocation10 + $0xd8] sm:$0xff]
    %v880 = vld [vmem:[#allocation10 + $0xe0] sm:$0xff]
    %v881 = vld [vmem:[#allocation10 + $0xe8] sm:$0xff]
    %v882 = vld [vmem:[#allocation10 + $0xf0] sm:$0xff]
    %v883 = vld [vmem:[#allocation10 + $0xf8] sm:$0xff]
    %v884 = vld [vmem:[#allocation10 + $0x100] sm:$0xff]
    %v885 = vld [vmem:[#allocation10 + $0x108] sm:$0xff]
    %v886 = vld [vmem:[#allocation10 + $0x110] sm:$0xff]
    %v887 = vld [vmem:[#allocation10 + $0x118] sm:$0xff]
    %v888 = vld [vmem:[#allocation10 + $0x120] sm:$0xff]
    %v889 = vld [vmem:[#allocation10 + $0x128] sm:$0xff]
    %v890 = vld [vmem:[#allocation10 + $0x130] sm:$0xff]
    %v891 = vld [vmem:[#allocation10 + $0x138] sm:$0xff]
    %v892 = vld [vmem:[#allocation10 + $0x140] sm:$0xff]
    %v893 = vld [vmem:[#allocation10 + $0x148] sm:$0xff]
    %v894 = vld [vmem:[#allocation10 + $0x150] sm:$0xff]
    %v895 = vld [vmem:[#allocation10 + $0x158] sm:$0xff]
    %v896 = vld [vmem:[#allocation10 + $0x160] sm:$0xff]
    %v897 = vld [vmem:[#allocation10 + $0x168] sm:$0xff]
    %v898 = vld [vmem:[#allocation10 + $0x170] sm:$0xff]
    %v899 = vld [vmem:[#allocation10 + $0x178] sm:$0xff]
    %v900 = vld [vmem:[#allocation10 + $0x180] sm:$0xff]
    %v901 = vld [vmem:[#allocation10 + $0x188] sm:$0xff]
    %v902 = vld [vmem:[#allocation10 + $0x190] sm:$0xff]
    %v903 = vld [vmem:[#allocation10 + $0x198] sm:$0xff]
    %v904 = vld [vmem:[#allocation10 + $0x1a0] sm:$0xff]
    %v905 = vld [vmem:[#allocation10 + $0x1a8] sm:$0xff]
    %v906 = vld [vmem:[#allocation10 + $0x1b0] sm:$0xff]
    %v907 = vld [vmem:[#allocation10 + $0x1b8] sm:$0xff]
    %v908 = vld [vmem:[#allocation10 + $0x1c0] sm:$0xff]
    %v909 = vld [vmem:[#allocation10 + $0x1c8] sm:$0xff]
    %v910 = vld [vmem:[#allocation10 + $0x1d0] sm:$0xff]
    %v911 = vld [vmem:[#allocation10 + $0x1d8] sm:$0xff]
    %v912 = vld [vmem:[#allocation10 + $0x1e0] sm:$0xff]
    %v913 = vld [vmem:[#allocation10 + $0x1e8] sm:$0xff]
    %v914 = vld [vmem:[#allocation10 + $0x1f0] sm:$0xff]
    %v915 = vld [vmem:[#allocation10 + $0x1f8] sm:$0xff]
    %v916 = vld [vmem:[%s5] sm:$0x1]
    %v918 = vlaneseq
    %v919 = vshrl.u32 %v918, 7
    %v920 = vsub.s32 0, %v919
    %v921 = vrot.slane %v916, %v920
    %v923 = vld [vmem:[%s6] sm:$0x1]
    %v925 = vlaneseq
    %v926 = vshrl.u32 %v925, 7
    %v927 = vsub.s32 0, %v926
    %v928 = vrot.slane %v923, %v927
    %v930 = vld [vmem:[#allocation2] sm:$0xff]
    %v931 = vld [vmem:[#allocation2 + $0x8] sm:$0xff]
    %v932 = vld [vmem:[#allocation2 + $0x10] sm:$0xff]
    %v933 = vld [vmem:[#allocation2 + $0x18] sm:$0xff]
    %934 = vmatprep.subr.mxu0 %v913
    %935 = vmatpush1.msra.mxu0 %v912
    %936 = vmatprep.subr.mxu0 %v909
    %937 = vmatpush1.msra.mxu0 %v908
    %938 = vmatprep.subr.mxu0 %v905
    %939 = vmatpush1.msra.mxu0 %v904
    %940 = vmatprep.subr.mxu0 %v901
    %941 = vmatpush1.msra.mxu0 %v900
    %942 = vmatprep.subr.mxu0 %v897
    %943 = vmatpush1.msra.mxu0 %v896
    %944 = vmatprep.subr.mxu0 %v893
    %945 = vmatpush1.msra.mxu0 %v892
    %946 = vmatprep.subr.mxu0 %v889
    %947 = vmatpush1.msra.mxu0 %v888
    %948 = vmatprep.subr.mxu0 %v885
    %949 = vmatpush1.msra.mxu0 %v884
    %950 = vmatprep.subr.mxu0 %v881
    %951 = vmatpush1.msra.mxu0 %v880
    %952 = vmatprep.subr.mxu0 %v877
    %953 = vmatpush1.msra.mxu0 %v876
    %954 = vmatprep.subr.mxu0 %v873
    %955 = vmatpush1.msra.mxu0 %v872
    %956 = vmatprep.subr.mxu0 %v869
    %957 = vmatpush1.msra.mxu0 %v868
    %958 = vmatprep.subr.mxu0 %v865
    %959 = vmatpush1.msra.mxu0 %v864
    %960 = vmatprep.subr.mxu0 %v861
    %961 = vmatpush1.msra.mxu0 %v860
    %962 = vmatprep.subr.mxu0 %v857
    %963 = vmatpush1.msra.mxu0 %v856
    %964 = vmatprep.subr.mxu0 %v853
    %965 = vmatpush1.msra.mxu0 %v852
    %966 = vmatprep.subr.mxu0 0.0
    %967 = vmatpush2.msra.mxu0 0.0
    %968 = vmatprep.subr.mxu0 0.0
    %969 = vmatpush2.msra.mxu0 0.0
    %970 = vmatprep.subr.mxu0 0.0
    %971 = vmatpush2.msra.mxu0 0.0
    %972 = vmatprep.subr.mxu0 0.0
    %973 = vmatpush2.msra.mxu0 0.0
    %974 = vmatprep.subr.mxu0 0.0
    %975 = vmatpush2.msra.mxu0 0.0
    %976 = vmatprep.subr.mxu0 0.0
    %977 = vmatpush2.msra.mxu0 0.0
    %978 = vmatprep.subr.mxu0 0.0
    %979 = vmatpush2.msra.mxu0 0.0
    %980 = vmatprep.subr.mxu0 0.0
    %981 = vmatpush2.msra.mxu0 0.0
    %982 = vmatprep.subr.mxu0 0.0
    %983 = vmatpush2.msra.mxu0 0.0
    %984 = vmatprep.subr.mxu0 0.0
    %985 = vmatpush2.msra.mxu0 0.0
    %986 = vmatprep.subr.mxu0 0.0
    %987 = vmatpush2.msra.mxu0 0.0
    %988 = vmatprep.subr.mxu0 0.0
    %989 = vmatpush2.msra.mxu0 0.0
    %990 = vmatprep.subr.mxu0 0.0
    %991 = vmatpush2.msra.mxu0 0.0
    %992 = vmatprep.subr.mxu0 0.0
    %993 = vmatpush2.msra.mxu0 0.0
    %994 = vmatprep.subr.mxu0 0.0
    %995 = vmatpush2.msra.mxu0 0.0
    %996 = vmatprep.subr.mxu0 0.0
    %997 = vmatpush2.msra.mxu0 0.0
    %998 = vmatprep.mubr.f32.mxu0 0.0
    %999 = vmatmul.mubr.f32.gmra.mxu0 %v921
    %v1000 = vpop.f32.mrf.mxu0
    %v1001 = vadd.f32 0.0, %v1000
    %v1002 = vpop.f32.mrf.mxu0
    %v1003 = vadd.f32 0.0, %v1002
    %1004 = vdwg.mxu0
    %1005 = vmatprep.subr.mxu0 %v915
    %1006 = vmatpush1.msra.mxu0 %v914
    %1007 = vmatprep.subr.mxu0 %v911
    %1008 = vmatpush1.msra.mxu0 %v910
    %1009 = vmatprep.subr.mxu0 %v907
    %1010 = vmatpush1.msra.mxu0 %v906
    %1011 = vmatprep.subr.mxu0 %v903
    %1012 = vmatpush1.msra.mxu0 %v902
    %1013 = vmatprep.subr.mxu0 %v899
    %1014 = vmatpush1.msra.mxu0 %v898
    %1015 = vmatprep.subr.mxu0 %v895
    %1016 = vmatpush1.msra.mxu0 %v894
    %1017 = vmatprep.subr.mxu0 %v891
    %1018 = vmatpush1.msra.mxu0 %v890
    %1019 = vmatprep.subr.mxu0 %v887
    %1020 = vmatpush1.msra.mxu0 %v886
    %1021 = vmatprep.subr.mxu0 %v883
    %1022 = vmatpush1.msra.mxu0 %v882
    %1023 = vmatprep.subr.mxu0 %v879
    %1024 = vmatpush1.msra.mxu0 %v878
    %1025 = vmatprep.subr.mxu0 %v875
    %1026 = vmatpush1.msra.mxu0 %v874
    %1027 = vmatprep.subr.mxu0 %v871
    %1028 = vmatpush1.msra.mxu0 %v870
    %1029 = vmatprep.subr.mxu0 %v867
    %1030 = vmatpush1.msra.mxu0 %v866
    %1031 = vmatprep.subr.mxu0 %v863
    %1032 = vmatpush1.msra.mxu0 %v862
    %1033 = vmatprep.subr.mxu0 %v859
    %1034 = vmatpush1.msra.mxu0 %v858
    %1035 = vmatprep.subr.mxu0 %v855
    %1036 = vmatpush1.msra.mxu0 %v854
    %1037 = vmatprep.subr.mxu0 0.0
    %1038 = vmatpush2.msra.mxu0 0.0
    %1039 = vmatprep.subr.mxu0 0.0
    %1040 = vmatpush2.msra.mxu0 0.0
    %1041 = vmatprep.subr.mxu0 0.0
    %1042 = vmatpush2.msra.mxu0 0.0
    %1043 = vmatprep.subr.mxu0 0.0
    %1044 = vmatpush2.msra.mxu0 0.0
    %1045 = vmatprep.subr.mxu0 0.0
    %1046 = vmatpush2.msra.mxu0 0.0
    %1047 = vmatprep.subr.mxu0 0.0
    %1048 = vmatpush2.msra.mxu0 0.0
    %1049 = vmatprep.subr.mxu0 0.0
    %1050 = vmatpush2.msra.mxu0 0.0
    %1051 = vmatprep.subr.mxu0 0.0
    %1052 = vmatpush2.msra.mxu0 0.0
    %1053 = vmatprep.subr.mxu0 0.0
    %1054 = vmatpush2.msra.mxu0 0.0
    %1055 = vmatprep.subr.mxu0 0.0
    %1056 = vmatpush2.msra.mxu0 0.0
    %1057 = vmatprep.subr.mxu0 0.0
    %1058 = vmatpush2.msra.mxu0 0.0
    %1059 = vmatprep.subr.mxu0 0.0
    %1060 = vmatpush2.msra.mxu0 0.0
    %1061 = vmatprep.subr.mxu0 0.0
    %1062 = vmatpush2.msra.mxu0 0.0
    %1063 = vmatprep.subr.mxu0 0.0
    %1064 = vmatpush2.msra.mxu0 0.0
    %1065 = vmatprep.subr.mxu0 0.0
    %1066 = vmatpush2.msra.mxu0 0.0
    %1067 = vmatprep.subr.mxu0 0.0
    %1068 = vmatpush2.msra.mxu0 0.0
    %1069 = vmatprep.mubr.f32.mxu0 0.0
    %1070 = vmatmul.mubr.f32.gmra.mxu0 %v921
    %v1071 = vpop.f32.mrf.mxu0
    %v1072 = vadd.f32 0.0, %v1071
    %v1073 = vpop.f32.mrf.mxu0
    %v1074 = vadd.f32 0.0, %v1073
    %1075 = vdwg.mxu0
    %v1076 = vadd.f32 %v930, %v1001
    %v1077 = vadd.f32 %v931, %v1003
    %v1078 = vadd.f32 %v932, %v1072
    %v1079 = vadd.f32 %v933, %v1074
    %v1080 = vmul.f32 %v1076, 0.5
    %v1081 = vtanh.pop %v1080
    %v1082 = vadd.f32 %v1081, 1.0
    %v1083 = vmul.f32 %v1082, 0.5
    %v1084 = vmul.f32 %v1077, 0.5
    %v1085 = vtanh.pop %v1084
    %v1086 = vadd.f32 %v1085, 1.0
    %v1087 = vmul.f32 %v1086, 0.5
    %v1088 = vtanh.pop %v1078
    %v1089 = vmul.f32 %v1079, 0.5
    %v1090 = vtanh.pop %v1089
    %v1091 = vadd.f32 %v1090, 1.0
    %v1092 = vmul.f32 %v1091, 0.5
    %v1093 = vmul.f32 %v1087, %v928
    %v1094 = vmul.f32 %v1083, %v1088
    %v1095 = vadd.f32 %v1093, %v1094
    %v1096 = vtanh.pop %v1095
    %v1097 = vmul.f32 %v1092, %v1096
    %1098 = vst [vmem:[#allocation3] sm:$0xff] %v1097
    %s1099 = scalar_lea.vmem [#allocation2], 32
    %v1100 = vld [vmem:[%s1099] sm:$0xff]
    %v1101 = vld [vmem:[%s1099 + $0x8] sm:$0xff]
    %v1102 = vld [vmem:[%s1099 + $0x10] sm:$0xff]
    %v1103 = vld [vmem:[%s1099 + $0x18] sm:$0xff]
    %1104 = vmatprep.subr.mxu0 %v913
    %1105 = vmatpush1.msra.mxu0 %v912
    %1106 = vmatprep.subr.mxu0 %v909
    %1107 = vmatpush1.msra.mxu0 %v908
    %1108 = vmatprep.subr.mxu0 %v905
    %1109 = vmatpush1.msra.mxu0 %v904
    %1110 = vmatprep.subr.mxu0 %v901
    %1111 = vmatpush1.msra.mxu0 %v900
    %1112 = vmatprep.subr.mxu0 %v897
    %1113 = vmatpush1.msra.mxu0 %v896
    %1114 = vmatprep.subr.mxu0 %v893
    %1115 = vmatpush1.msra.mxu0 %v892
    %1116 = vmatprep.subr.mxu0 %v889
    %1117 = vmatpush1.msra.mxu0 %v888
    %1118 = vmatprep.subr.mxu0 %v885
    %1119 = vmatpush1.msra.mxu0 %v884
    %1120 = vmatprep.subr.mxu0 %v881
    %1121 = vmatpush1.msra.mxu0 %v880
    %1122 = vmatprep.subr.mxu0 %v877
    %1123 = vmatpush1.msra.mxu0 %v876
    %1124 = vmatprep.subr.mxu0 %v873
    %1125 = vmatpush1.msra.mxu0 %v872
    %1126 = vmatprep.subr.mxu0 %v869
    %1127 = vmatpush1.msra.mxu0 %v868
    %1128 = vmatprep.subr.mxu0 %v865
    %1129 = vmatpush1.msra.mxu0 %v864
    %1130 = vmatprep.subr.mxu0 %v861
    %1131 = vmatpush1.msra.mxu0 %v860
    %1132 = vmatprep.subr.mxu0 %v857
    %1133 = vmatpush1.msra.mxu0 %v856
    %1134 = vmatprep.subr.mxu0 %v853
    %1135 = vmatpush1.msra.mxu0 %v852
    %1136 = vmatprep.subr.mxu0 0.0
    %1137 = vmatpush2.msra.mxu0 0.0
    %1138 = vmatprep.subr.mxu0 0.0
    %1139 = vmatpush2.msra.mxu0 0.0
    %1140 = vmatprep.subr.mxu0 0.0
    %1141 = vmatpush2.msra.mxu0 0.0
    %1142 = vmatprep.subr.mxu0 0.0
    %1143 = vmatpush2.msra.mxu0 0.0
    %1144 = vmatprep.subr.mxu0 0.0
    %1145 = vmatpush2.msra.mxu0 0.0
    %1146 = vmatprep.subr.mxu0 0.0
    %1147 = vmatpush2.msra.mxu0 0.0
    %1148 = vmatprep.subr.mxu0 0.0
    %1149 = vmatpush2.msra.mxu0 0.0
    %1150 = vmatprep.subr.mxu0 0.0
    %1151 = vmatpush2.msra.mxu0 0.0
    %1152 = vmatprep.subr.mxu0 0.0
    %1153 = vmatpush2.msra.mxu0 0.0
    %1154 = vmatprep.subr.mxu0 0.0
    %1155 = vmatpush2.msra.mxu0 0.0
    %1156 = vmatprep.subr.mxu0 0.0
    %1157 = vmatpush2.msra.mxu0 0.0
    %1158 = vmatprep.subr.mxu0 0.0
    %1159 = vmatpush2.msra.mxu0 0.0
    %1160 = vmatprep.subr.mxu0 0.0
    %1161 = vmatpush2.msra.mxu0 0.0
    %1162 = vmatprep.subr.mxu0 0.0
    %1163 = vmatpush2.msra.mxu0 0.0
    %1164 = vmatprep.subr.mxu0 0.0
    %1165 = vmatpush2.msra.mxu0 0.0
    %1166 = vmatprep.subr.mxu0 0.0
    %1167 = vmatpush2.msra.mxu0 0.0
    %1168 = vmatprep.mubr.f32.mxu0 0.0
    %1169 = vmatmul.mubr.f32.gmra.mxu0 %v1097
    %v1170 = vpop.f32.mrf.mxu0
    %v1171 = vadd.f32 0.0, %v1170
    %v1172 = vpop.f32.mrf.mxu0
    %v1173 = vadd.f32 0.0, %v1172
    %1174 = vdwg.mxu0
    %1175 = vmatprep.subr.mxu0 %v915
    %1176 = vmatpush1.msra.mxu0 %v914
    %1177 = vmatprep.subr.mxu0 %v911
    %1178 = vmatpush1.msra.mxu0 %v910
    %1179 = vmatprep.subr.mxu0 %v907
    %1180 = vmatpush1.msra.mxu0 %v906
    %1181 = vmatprep.subr.mxu0 %v903
    %1182 = vmatpush1.msra.mxu0 %v902
    %1183 = vmatprep.subr.mxu0 %v899
    %1184 = vmatpush1.msra.mxu0 %v898
    %1185 = vmatprep.subr.mxu0 %v895
    %1186 = vmatpush1.msra.mxu0 %v894
    %1187 = vmatprep.subr.mxu0 %v891
    %1188 = vmatpush1.msra.mxu0 %v890
    %1189 = vmatprep.subr.mxu0 %v887
    %1190 = vmatpush1.msra.mxu0 %v886
    %1191 = vmatprep.subr.mxu0 %v883
    %1192 = vmatpush1.msra.mxu0 %v882
    %1193 = vmatprep.subr.mxu0 %v879
    %1194 = vmatpush1.msra.mxu0 %v878
    %1195 = vmatprep.subr.mxu0 %v875
    %1196 = vmatpush1.msra.mxu0 %v874
    %1197 = vmatprep.subr.mxu0 %v871
    %1198 = vmatpush1.msra.mxu0 %v870
    %1199 = vmatprep.subr.mxu0 %v867
    %1200 = vmatpush1.msra.mxu0 %v866
    %1201 = vmatprep.subr.mxu0 %v863
    %1202 = vmatpush1.msra.mxu0 %v862
    %1203 = vmatprep.subr.mxu0 %v859
    %1204 = vmatpush1.msra.mxu0 %v858
    %1205 = vmatprep.subr.mxu0 %v855
    %1206 = vmatpush1.msra.mxu0 %v854
    %1207 = vmatprep.subr.mxu0 0.0
    %1208 = vmatpush2.msra.mxu0 0.0
    %1209 = vmatprep.subr.mxu0 0.0
    %1210 = vmatpush2.msra.mxu0 0.0
    %1211 = vmatprep.subr.mxu0 0.0
    %1212 = vmatpush2.msra.mxu0 0.0
    %1213 = vmatprep.subr.mxu0 0.0
    %1214 = vmatpush2.msra.mxu0 0.0
    %1215 = vmatprep.subr.mxu0 0.0
    %1216 = vmatpush2.msra.mxu0 0.0
    %1217 = vmatprep.subr.mxu0 0.0
    %1218 = vmatpush2.msra.mxu0 0.0
    %1219 = vmatprep.subr.mxu0 0.0
    %1220 = vmatpush2.msra.mxu0 0.0
    %1221 = vmatprep.subr.mxu0 0.0
    %1222 = vmatpush2.msra.mxu0 0.0
    %1223 = vmatprep.subr.mxu0 0.0
    %1224 = vmatpush2.msra.mxu0 0.0
    %1225 = vmatprep.subr.mxu0 0.0
    %1226 = vmatpush2.msra.mxu0 0.0
    %1227 = vmatprep.subr.mxu0 0.0
    %1228 = vmatpush2.msra.mxu0 0.0
    %1229 = vmatprep.subr.mxu0 0.0
    %1230 = vmatpush2.msra.mxu0 0.0
    %1231 = vmatprep.subr.mxu0 0.0
    %1232 = vmatpush2.msra.mxu0 0.0
    %1233 = vmatprep.subr.mxu0 0.0
    %1234 = vmatpush2.msra.mxu0 0.0
    %1235 = vmatprep.subr.mxu0 0.0
    %1236 = vmatpush2.msra.mxu0 0.0
    %1237 = vmatprep.subr.mxu0 0.0
    %1238 = vmatpush2.msra.mxu0 0.0
    %1239 = vmatprep.mubr.f32.mxu0 0.0
    %1240 = vmatmul.mubr.f32.gmra.mxu0 %v1097
    %v1241 = vpop.f32.mrf.mxu0
    %v1242 = vadd.f32 0.0, %v1241
    %v1243 = vpop.f32.mrf.mxu0
    %v1244 = vadd.f32 0.0, %v1243
    %1245 = vdwg.mxu0
    %v1246 = vadd.f32 %v1100, %v1171
    %v1247 = vadd.f32 %v1101, %v1173
    %v1248 = vadd.f32 %v1102, %v1242
    %v1249 = vadd.f32 %v1103, %v1244
    %v1250 = vmul.f32 %v1246, 0.5
    %v1251 = vtanh.pop %v1250
    %v1252 = vadd.f32 %v1251, 1.0
    %v1253 = vmul.f32 %v1252, 0.5
    %v1254 = vmul.f32 %v1247, 0.5
    %v1255 = vtanh.pop %v1254
    %v1256 = vadd.f32 %v1255, 1.0
    %v1257 = vmul.f32 %v1256, 0.5
    %v1258 = vtanh.pop %v1248
    %v1259 = vmul.f32 %v1249, 0.5
    %v1260 = vtanh.pop %v1259
    %v1261 = vadd.f32 %v1260, 1.0
    %v1262 = vmul.f32 %v1261, 0.5
    %v1263 = vmul.f32 %v1257, %v1095
    %v1264 = vmul.f32 %v1253, %v1258
    %v1265 = vadd.f32 %v1263, %v1264
    %v1266 = vtanh.pop %v1265
    %v1267 = vmul.f32 %v1262, %v1266
    %s1268 = scalar_lea.vmem [#allocation3], 8
    %1269 = vst [vmem:[%s1268] sm:$0xff] %v1267
    %s1270 = scalar_lea.vmem [#allocation2], 64
    %v1271 = vld [vmem:[%s1270] sm:$0xff]
    %v1272 = vld [vmem:[%s1270 + $0x8] sm:$0xff]
    %v1273 = vld [vmem:[%s1270 + $0x10] sm:$0xff]
    %v1274 = vld [vmem:[%s1270 + $0x18] sm:$0xff]
    %1275 = vmatprep.subr.mxu0 %v913
    %1276 = vmatpush1.msra.mxu0 %v912
    %1277 = vmatprep.subr.mxu0 %v909
    %1278 = vmatpush1.msra.mxu0 %v908
    %1279 = vmatprep.subr.mxu0 %v905
    %1280 = vmatpush1.msra.mxu0 %v904
    %1281 = vmatprep.subr.mxu0 %v901
    %1282 = vmatpush1.msra.mxu0 %v900
    %1283 = vmatprep.subr.mxu0 %v897
    %1284 = vmatpush1.msra.mxu0 %v896
    %1285 = vmatprep.subr.mxu0 %v893
    %1286 = vmatpush1.msra.mxu0 %v892
    %1287 = vmatprep.subr.mxu0 %v889
    %1288 = vmatpush1.msra.mxu0 %v888
    %1289 = vmatprep.subr.mxu0 %v885
    %1290 = vmatpush1.msra.mxu0 %v884
    %1291 = vmatprep.subr.mxu0 %v881
    %1292 = vmatpush1.msra.mxu0 %v880
    %1293 = vmatprep.subr.mxu0 %v877
    %1294 = vmatpush1.msra.mxu0 %v876
    %1295 = vmatprep.subr.mxu0 %v873
    %1296 = vmatpush1.msra.mxu0 %v872
    %1297 = vmatprep.subr.mxu0 %v869
    %1298 = vmatpush1.msra.mxu0 %v868
    %1299 = vmatprep.subr.mxu0 %v865
    %1300 = vmatpush1.msra.mxu0 %v864
    %1301 = vmatprep.subr.mxu0 %v861
    %1302 = vmatpush1.msra.mxu0 %v860
    %1303 = vmatprep.subr.mxu0 %v857
    %1304 = vmatpush1.msra.mxu0 %v856
    %1305 = vmatprep.subr.mxu0 %v853
    %1306 = vmatpush1.msra.mxu0 %v852
    %1307 = vmatprep.subr.mxu0 0.0
    %1308 = vmatpush2.msra.mxu0 0.0
    %1309 = vmatprep.subr.mxu0 0.0
    %1310 = vmatpush2.msra.mxu0 0.0
    %1311 = vmatprep.subr.mxu0 0.0
    %1312 = vmatpush2.msra.mxu0 0.0
    %1313 = vmatprep.subr.mxu0 0.0
    %1314 = vmatpush2.msra.mxu0 0.0
    %1315 = vmatprep.subr.mxu0 0.0
    %1316 = vmatpush2.msra.mxu0 0.0
    %1317 = vmatprep.subr.mxu0 0.0
    %1318 = vmatpush2.msra.mxu0 0.0
    %1319 = vmatprep.subr.mxu0 0.0
    %1320 = vmatpush2.msra.mxu0 0.0
    %1321 = vmatprep.subr.mxu0 0.0
    %1322 = vmatpush2.msra.mxu0 0.0
    %1323 = vmatprep.subr.mxu0 0.0
    %1324 = vmatpush2.msra.mxu0 0.0
    %1325 = vmatprep.subr.mxu0 0.0
    %1326 = vmatpush2.msra.mxu0 0.0
    %1327 = vmatprep.subr.mxu0 0.0
    %1328 = vmatpush2.msra.mxu0 0.0
    %1329 = vmatprep.subr.mxu0 0.0
    %1330 = vmatpush2.msra.mxu0 0.0
    %1331 = vmatprep.subr.mxu0 0.0
    %1332 = vmatpush2.msra.mxu0 0.0
    %1333 = vmatprep.subr.mxu0 0.0
    %1334 = vmatpush2.msra.mxu0 0.0
    %1335 = vmatprep.subr.mxu0 0.0
    %1336 = vmatpush2.msra.mxu0 0.0
    %1337 = vmatprep.subr.mxu0 0.0
    %1338 = vmatpush2.msra.mxu0 0.0
    %1339 = vmatprep.mubr.f32.mxu0 0.0
    %1340 = vmatmul.mubr.f32.gmra.mxu0 %v1267
    %v1341 = vpop.f32.mrf.mxu0
    %v1342 = vadd.f32 0.0, %v1341
    %v1343 = vpop.f32.mrf.mxu0
    %v1344 = vadd.f32 0.0, %v1343
    %1345 = vdwg.mxu0
    %1346 = vmatprep.subr.mxu0 %v915
    %1347 = vmatpush1.msra.mxu0 %v914
    %1348 = vmatprep.subr.mxu0 %v911
    %1349 = vmatpush1.msra.mxu0 %v910
    %1350 = vmatprep.subr.mxu0 %v907
    %1351 = vmatpush1.msra.mxu0 %v906
    %1352 = vmatprep.subr.mxu0 %v903
    %1353 = vmatpush1.msra.mxu0 %v902
    %1354 = vmatprep.subr.mxu0 %v899
    %1355 = vmatpush1.msra.mxu0 %v898
    %1356 = vmatprep.subr.mxu0 %v895
    %1357 = vmatpush1.msra.mxu0 %v894
    %1358 = vmatprep.subr.mxu0 %v891
    %1359 = vmatpush1.msra.mxu0 %v890
    %1360 = vmatprep.subr.mxu0 %v887
    %1361 = vmatpush1.msra.mxu0 %v886
    %1362 = vmatprep.subr.mxu0 %v883
    %1363 = vmatpush1.msra.mxu0 %v882
    %1364 = vmatprep.subr.mxu0 %v879
    %1365 = vmatpush1.msra.mxu0 %v878
    %1366 = vmatprep.subr.mxu0 %v875
    %1367 = vmatpush1.msra.mxu0 %v874
    %1368 = vmatprep.subr.mxu0 %v871
    %1369 = vmatpush1.msra.mxu0 %v870
    %1370 = vmatprep.subr.mxu0 %v867
    %1371 = vmatpush1.msra.mxu0 %v866
    %1372 = vmatprep.subr.mxu0 %v863
    %1373 = vmatpush1.msra.mxu0 %v862
    %1374 = vmatprep.subr.mxu0 %v859
    %1375 = vmatpush1.msra.mxu0 %v858
    %1376 = vmatprep.subr.mxu0 %v855
    %1377 = vmatpush1.msra.mxu0 %v854
    %1378 = vmatprep.subr.mxu0 0.0
    %1379 = vmatpush2.msra.mxu0 0.0
    %1380 = vmatprep.subr.mxu0 0.0
    %1381 = vmatpush2.msra.mxu0 0.0
    %1382 = vmatprep.subr.mxu0 0.0
    %1383 = vmatpush2.msra.mxu0 0.0
    %1384 = vmatprep.subr.mxu0 0.0
    %1385 = vmatpush2.msra.mxu0 0.0
    %1386 = vmatprep.subr.mxu0 0.0
    %1387 = vmatpush2.msra.mxu0 0.0
    %1388 = vmatprep.subr.mxu0 0.0
    %1389 = vmatpush2.msra.mxu0 0.0
    %1390 = vmatprep.subr.mxu0 0.0
    %1391 = vmatpush2.msra.mxu0 0.0
    %1392 = vmatprep.subr.mxu0 0.0
    %1393 = vmatpush2.msra.mxu0 0.0
    %1394 = vmatprep.subr.mxu0 0.0
    %1395 = vmatpush2.msra.mxu0 0.0
    %1396 = vmatprep.subr.mxu0 0.0
    %1397 = vmatpush2.msra.mxu0 0.0
    %1398 = vmatprep.subr.mxu0 0.0
    %1399 = vmatpush2.msra.mxu0 0.0
    %1400 = vmatprep.subr.mxu0 0.0
    %1401 = vmatpush2.msra.mxu0 0.0
    %1402 = vmatprep.subr.mxu0 0.0
    %1403 = vmatpush2.msra.mxu0 0.0
    %1404 = vmatprep.subr.mxu0 0.0
    %1405 = vmatpush2.msra.mxu0 0.0
    %1406 = vmatprep.subr.mxu0 0.0
    %1407 = vmatpush2.msra.mxu0 0.0
    %1408 = vmatprep.subr.mxu0 0.0
    %1409 = vmatpush2.msra.mxu0 0.0
    %1410 = vmatprep.mubr.f32.mxu0 0.0
    %1411 = vmatmul.mubr.f32.gmra.mxu0 %v1267
    %v1412 = vpop.f32.mrf.mxu0
    %v1413 = vadd.f32 0.0, %v1412
    %v1414 = vpop.f32.mrf.mxu0
    %v1415 = vadd.f32 0.0, %v1414
    %1416 = vdwg.mxu0
    %v1417 = vadd.f32 %v1271, %v1342
    %v1418 = vadd.f32 %v1272, %v1344
    %v1419 = vadd.f32 %v1273, %v1413
    %v1420 = vadd.f32 %v1274, %v1415
    %v1421 = vmul.f32 %v1417, 0.5
    %v1422 = vtanh.pop %v1421
    %v1423 = vadd.f32 %v1422, 1.0
    %v1424 = vmul.f32 %v1423, 0.5
    %v1425 = vmul.f32 %v1418, 0.5
    %v1426 = vtanh.pop %v1425
    %v1427 = vadd.f32 %v1426, 1.0
    %v1428 = vmul.f32 %v1427, 0.5
    %v1429 = vtanh.pop %v1419
    %v1430 = vmul.f32 %v1420, 0.5
    %v1431 = vtanh.pop %v1430
    %v1432 = vadd.f32 %v1431, 1.0
    %v1433 = vmul.f32 %v1432, 0.5
    %v1434 = vmul.f32 %v1428, %v1265
    %v1435 = vmul.f32 %v1424, %v1429
    %v1436 = vadd.f32 %v1434, %v1435
    %v1437 = vtanh.pop %v1436
    %v1438 = vmul.f32 %v1433, %v1437
    %s1439 = scalar_lea.vmem [#allocation3], 16
    %1440 = vst [vmem:[%s1439] sm:$0xff] %v1438
    %s1441 = scalar_lea.vmem [#allocation2], 96
    %v1442 = vld [vmem:[%s1441] sm:$0xff]
    %v1443 = vld [vmem:[%s1441 + $0x8] sm:$0xff]
    %v1444 = vld [vmem:[%s1441 + $0x10] sm:$0xff]
    %v1445 = vld [vmem:[%s1441 + $0x18] sm:$0xff]
    %1446 = vmatprep.subr.mxu0 %v913
    %1447 = vmatpush1.msra.mxu0 %v912
    %1448 = vmatprep.subr.mxu0 %v909
    %1449 = vmatpush1.msra.mxu0 %v908
    %1450 = vmatprep.subr.mxu0 %v905
    %1451 = vmatpush1.msra.mxu0 %v904
    %1452 = vmatprep.subr.mxu0 %v901
    %1453 = vmatpush1.msra.mxu0 %v900
    %1454 = vmatprep.subr.mxu0 %v897
    %1455 = vmatpush1.msra.mxu0 %v896
    %1456 = vmatprep.subr.mxu0 %v893
    %1457 = vmatpush1.msra.mxu0 %v892
    %1458 = vmatprep.subr.mxu0 %v889
    %1459 = vmatpush1.msra.mxu0 %v888
    %1460 = vmatprep.subr.mxu0 %v885
    %1461 = vmatpush1.msra.mxu0 %v884
    %1462 = vmatprep.subr.mxu0 %v881
    %1463 = vmatpush1.msra.mxu0 %v880
    %1464 = vmatprep.subr.mxu0 %v877
    %1465 = vmatpush1.msra.mxu0 %v876
    %1466 = vmatprep.subr.mxu0 %v873
    %1467 = vmatpush1.msra.mxu0 %v872
    %1468 = vmatprep.subr.mxu0 %v869
    %1469 = vmatpush1.msra.mxu0 %v868
    %1470 = vmatprep.subr.mxu0 %v865
    %1471 = vmatpush1.msra.mxu0 %v864
    %1472 = vmatprep.subr.mxu0 %v861
    %1473 = vmatpush1.msra.mxu0 %v860
    %1474 = vmatprep.subr.mxu0 %v857
    %1475 = vmatpush1.msra.mxu0 %v856
    %1476 = vmatprep.subr.mxu0 %v853
    %1477 = vmatpush1.msra.mxu0 %v852
    %1478 = vmatprep.subr.mxu0 0.0
    %1479 = vmatpush2.msra.mxu0 0.0
    %1480 = vmatprep.subr.mxu0 0.0
    %1481 = vmatpush2.msra.mxu0 0.0
    %1482 = vmatprep.subr.mxu0 0.0
    %1483 = vmatpush2.msra.mxu0 0.0
    %1484 = vmatprep.subr.mxu0 0.0
    %1485 = vmatpush2.msra.mxu0 0.0
    %1486 = vmatprep.subr.mxu0 0.0
    %1487 = vmatpush2.msra.mxu0 0.0
    %1488 = vmatprep.subr.mxu0 0.0
    %1489 = vmatpush2.msra.mxu0 0.0
    %1490 = vmatprep.subr.mxu0 0.0
    %1491 = vmatpush2.msra.mxu0 0.0
    %1492 = vmatprep.subr.mxu0 0.0
    %1493 = vmatpush2.msra.mxu0 0.0
    %1494 = vmatprep.subr.mxu0 0.0
    %1495 = vmatpush2.msra.mxu0 0.0
    %1496 = vmatprep.subr.mxu0 0.0
    %1497 = vmatpush2.msra.mxu0 0.0
    %1498 = vmatprep.subr.mxu0 0.0
    %1499 = vmatpush2.msra.mxu0 0.0
    %1500 = vmatprep.subr.mxu0 0.0
    %1501 = vmatpush2.msra.mxu0 0.0
    %1502 = vmatprep.subr.mxu0 0.0
    %1503 = vmatpush2.msra.mxu0 0.0
    %1504 = vmatprep.subr.mxu0 0.0
    %1505 = vmatpush2.msra.mxu0 0.0
    %1506 = vmatprep.subr.mxu0 0.0
    %1507 = vmatpush2.msra.mxu0 0.0
    %1508 = vmatprep.subr.mxu0 0.0
    %1509 = vmatpush2.msra.mxu0 0.0
    %1510 = vmatprep.mubr.f32.mxu0 0.0
    %1511 = vmatmul.mubr.f32.gmra.mxu0 %v1438
    %v1512 = vpop.f32.mrf.mxu0
    %v1513 = vadd.f32 0.0, %v1512
    %v1514 = vpop.f32.mrf.mxu0
    %v1515 = vadd.f32 0.0, %v1514
    %1516 = vdwg.mxu0
    %1517 = vmatprep.subr.mxu0 %v915
    %1518 = vmatpush1.msra.mxu0 %v914
    %1519 = vmatprep.subr.mxu0 %v911
    %1520 = vmatpush1.msra.mxu0 %v910
    %1521 = vmatprep.subr.mxu0 %v907
    %1522 = vmatpush1.msra.mxu0 %v906
    %1523 = vmatprep.subr.mxu0 %v903
    %1524 = vmatpush1.msra.mxu0 %v902
    %1525 = vmatprep.subr.mxu0 %v899
    %1526 = vmatpush1.msra.mxu0 %v898
    %1527 = vmatprep.subr.mxu0 %v895
    %1528 = vmatpush1.msra.mxu0 %v894
    %1529 = vmatprep.subr.mxu0 %v891
    %1530 = vmatpush1.msra.mxu0 %v890
    %1531 = vmatprep.subr.mxu0 %v887
    %1532 = vmatpush1.msra.mxu0 %v886
    %1533 = vmatprep.subr.mxu0 %v883
    %1534 = vmatpush1.msra.mxu0 %v882
    %1535 = vmatprep.subr.mxu0 %v879
    %1536 = vmatpush1.msra.mxu0 %v878
    %1537 = vmatprep.subr.mxu0 %v875
    %1538 = vmatpush1.msra.mxu0 %v874
    %1539 = vmatprep.subr.mxu0 %v871
    %1540 = vmatpush1.msra.mxu0 %v870
    %1541 = vmatprep.subr.mxu0 %v867
    %1542 = vmatpush1.msra.mxu0 %v866
    %1543 = vmatprep.subr.mxu0 %v863
    %1544 = vmatpush1.msra.mxu0 %v862
    %1545 = vmatprep.subr.mxu0 %v859
    %1546 = vmatpush1.msra.mxu0 %v858
    %1547 = vmatprep.subr.mxu0 %v855
    %1548 = vmatpush1.msra.mxu0 %v854
    %1549 = vmatprep.subr.mxu0 0.0
    %1550 = vmatpush2.msra.mxu0 0.0
    %1551 = vmatprep.subr.mxu0 0.0
    %1552 = vmatpush2.msra.mxu0 0.0
    %1553 = vmatprep.subr.mxu0 0.0
    %1554 = vmatpush2.msra.mxu0 0.0
    %1555 = vmatprep.subr.mxu0 0.0
    %1556 = vmatpush2.msra.mxu0 0.0
    %1557 = vmatprep.subr.mxu0 0.0
    %1558 = vmatpush2.msra.mxu0 0.0
    %1559 = vmatprep.subr.mxu0 0.0
    %1560 = vmatpush2.msra.mxu0 0.0
    %1561 = vmatprep.subr.mxu0 0.0
    %1562 = vmatpush2.msra.mxu0 0.0
    %1563 = vmatprep.subr.mxu0 0.0
    %1564 = vmatpush2.msra.mxu0 0.0
    %1565 = vmatprep.subr.mxu0 0.0
    %1566 = vmatpush2.msra.mxu0 0.0
    %1567 = vmatprep.subr.mxu0 0.0
    %1568 = vmatpush2.msra.mxu0 0.0
    %1569 = vmatprep.subr.mxu0 0.0
    %1570 = vmatpush2.msra.mxu0 0.0
    %1571 = vmatprep.subr.mxu0 0.0
    %1572 = vmatpush2.msra.mxu0 0.0
    %1573 = vmatprep.subr.mxu0 0.0
    %1574 = vmatpush2.msra.mxu0 0.0
    %1575 = vmatprep.subr.mxu0 0.0
    %1576 = vmatpush2.msra.mxu0 0.0
    %1577 = vmatprep.subr.mxu0 0.0
    %1578 = vmatpush2.msra.mxu0 0.0
    %1579 = vmatprep.subr.mxu0 0.0
    %1580 = vmatpush2.msra.mxu0 0.0
    %1581 = vmatprep.mubr.f32.mxu0 0.0
    %1582 = vmatmul.mubr.f32.gmra.mxu0 %v1438
    %v1583 = vpop.f32.mrf.mxu0
    %v1584 = vadd.f32 0.0, %v1583
    %v1585 = vpop.f32.mrf.mxu0
    %v1586 = vadd.f32 0.0, %v1585
    %1587 = vdwg.mxu0
    %v1588 = vadd.f32 %v1442, %v1513
    %v1589 = vadd.f32 %v1443, %v1515
    %v1590 = vadd.f32 %v1444, %v1584
    %v1591 = vadd.f32 %v1445, %v1586
    %v1592 = vmul.f32 %v1588, 0.5
    %v1593 = vtanh.pop %v1592
    %v1594 = vadd.f32 %v1593, 1.0
    %v1595 = vmul.f32 %v1594, 0.5
    %v1596 = vmul.f32 %v1589, 0.5
    %v1597 = vtanh.pop %v1596
    %v1598 = vadd.f32 %v1597, 1.0
    %v1599 = vmul.f32 %v1598, 0.5
    %v1600 = vtanh.pop %v1590
    %v1601 = vmul.f32 %v1591, 0.5
    %v1602 = vtanh.pop %v1601
    %v1603 = vadd.f32 %v1602, 1.0
    %v1604 = vmul.f32 %v1603, 0.5
    %v1605 = vmul.f32 %v1599, %v1436
    %v1606 = vmul.f32 %v1595, %v1600
    %v1607 = vadd.f32 %v1605, %v1606
    %v1608 = vtanh.pop %v1607
    %v1609 = vmul.f32 %v1604, %v1608
    %s1610 = scalar_lea.vmem [#allocation3], 24
    %1611 = vst [vmem:[%s1610] sm:$0xff] %v1609
    %s1612 = scalar_lea.vmem [#allocation2], 128
    %v1613 = vld [vmem:[%s1612] sm:$0xff]
    %v1614 = vld [vmem:[%s1612 + $0x8] sm:$0xff]
    %v1615 = vld [vmem:[%s1612 + $0x10] sm:$0xff]
    %v1616 = vld [vmem:[%s1612 + $0x18] sm:$0xff]
    %1617 = vmatprep.subr.mxu0 %v913
    %1618 = vmatpush1.msra.mxu0 %v912
    %1619 = vmatprep.subr.mxu0 %v909
    %1620 = vmatpush1.msra.mxu0 %v908
    %1621 = vmatprep.subr.mxu0 %v905
    %1622 = vmatpush1.msra.mxu0 %v904
    %1623 = vmatprep.subr.mxu0 %v901
    %1624 = vmatpush1.msra.mxu0 %v900
    %1625 = vmatprep.subr.mxu0 %v897
    %1626 = vmatpush1.msra.mxu0 %v896
    %1627 = vmatprep.subr.mxu0 %v893
    %1628 = vmatpush1.msra.mxu0 %v892
    %1629 = vmatprep.subr.mxu0 %v889
    %1630 = vmatpush1.msra.mxu0 %v888
    %1631 = vmatprep.subr.mxu0 %v885
    %1632 = vmatpush1.msra.mxu0 %v884
    %1633 = vmatprep.subr.mxu0 %v881
    %1634 = vmatpush1.msra.mxu0 %v880
    %1635 = vmatprep.subr.mxu0 %v877
    %1636 = vmatpush1.msra.mxu0 %v876
    %1637 = vmatprep.subr.mxu0 %v873
    %1638 = vmatpush1.msra.mxu0 %v872
    %1639 = vmatprep.subr.mxu0 %v869
    %1640 = vmatpush1.msra.mxu0 %v868
    %1641 = vmatprep.subr.mxu0 %v865
    %1642 = vmatpush1.msra.mxu0 %v864
    %1643 = vmatprep.subr.mxu0 %v861
    %1644 = vmatpush1.msra.mxu0 %v860
    %1645 = vmatprep.subr.mxu0 %v857
    %1646 = vmatpush1.msra.mxu0 %v856
    %1647 = vmatprep.subr.mxu0 %v853
    %1648 = vmatpush1.msra.mxu0 %v852
    %1649 = vmatprep.subr.mxu0 0.0
    %1650 = vmatpush2.msra.mxu0 0.0
    %1651 = vmatprep.subr.mxu0 0.0
    %1652 = vmatpush2.msra.mxu0 0.0
    %1653 = vmatprep.subr.mxu0 0.0
    %1654 = vmatpush2.msra.mxu0 0.0
    %1655 = vmatprep.subr.mxu0 0.0
    %1656 = vmatpush2.msra.mxu0 0.0
    %1657 = vmatprep.subr.mxu0 0.0
    %1658 = vmatpush2.msra.mxu0 0.0
    %1659 = vmatprep.subr.mxu0 0.0
    %1660 = vmatpush2.msra.mxu0 0.0
    %1661 = vmatprep.subr.mxu0 0.0
    %1662 = vmatpush2.msra.mxu0 0.0
    %1663 = vmatprep.subr.mxu0 0.0
    %1664 = vmatpush2.msra.mxu0 0.0
    %1665 = vmatprep.subr.mxu0 0.0
    %1666 = vmatpush2.msra.mxu0 0.0
    %1667 = vmatprep.subr.mxu0 0.0
    %1668 = vmatpush2.msra.mxu0 0.0
    %1669 = vmatprep.subr.mxu0 0.0
    %1670 = vmatpush2.msra.mxu0 0.0
    %1671 = vmatprep.subr.mxu0 0.0
    %1672 = vmatpush2.msra.mxu0 0.0
    %1673 = vmatprep.subr.mxu0 0.0
    %1674 = vmatpush2.msra.mxu0 0.0
    %1675 = vmatprep.subr.mxu0 0.0
    %1676 = vmatpush2.msra.mxu0 0.0
    %1677 = vmatprep.subr.mxu0 0.0
    %1678 = vmatpush2.msra.mxu0 0.0
    %1679 = vmatprep.subr.mxu0 0.0
    %1680 = vmatpush2.msra.mxu0 0.0
    %1681 = vmatprep.mubr.f32.mxu0 0.0
    %1682 = vmatmul.mubr.f32.gmra.mxu0 %v1609
    %v1683 = vpop.f32.mrf.mxu0
    %v1684 = vadd.f32 0.0, %v1683
    %v1685 = vpop.f32.mrf.mxu0
    %v1686 = vadd.f32 0.0, %v1685
    %1687 = vdwg.mxu0
    %1688 = vmatprep.subr.mxu0 %v915
    %1689 = vmatpush1.msra.mxu0 %v914
    %1690 = vmatprep.subr.mxu0 %v911
    %1691 = vmatpush1.msra.mxu0 %v910
    %1692 = vmatprep.subr.mxu0 %v907
    %1693 = vmatpush1.msra.mxu0 %v906
    %1694 = vmatprep.subr.mxu0 %v903
    %1695 = vmatpush1.msra.mxu0 %v902
    %1696 = vmatprep.subr.mxu0 %v899
    %1697 = vmatpush1.msra.mxu0 %v898
    %1698 = vmatprep.subr.mxu0 %v895
    %1699 = vmatpush1.msra.mxu0 %v894
    %1700 = vmatprep.subr.mxu0 %v891
    %1701 = vmatpush1.msra.mxu0 %v890
    %1702 = vmatprep.subr.mxu0 %v887
    %1703 = vmatpush1.msra.mxu0 %v886
    %1704 = vmatprep.subr.mxu0 %v883
    %1705 = vmatpush1.msra.mxu0 %v882
    %1706 = vmatprep.subr.mxu0 %v879
    %1707 = vmatpush1.msra.mxu0 %v878
    %1708 = vmatprep.subr.mxu0 %v875
    %1709 = vmatpush1.msra.mxu0 %v874
    %1710 = vmatprep.subr.mxu0 %v871
    %1711 = vmatpush1.msra.mxu0 %v870
    %1712 = vmatprep.subr.mxu0 %v867
    %1713 = vmatpush1.msra.mxu0 %v866
    %1714 = vmatprep.subr.mxu0 %v863
    %1715 = vmatpush1.msra.mxu0 %v862
    %1716 = vmatprep.subr.mxu0 %v859
    %1717 = vmatpush1.msra.mxu0 %v858
    %1718 = vmatprep.subr.mxu0 %v855
    %1719 = vmatpush1.msra.mxu0 %v854
    %1720 = vmatprep.subr.mxu0 0.0
    %1721 = vmatpush2.msra.mxu0 0.0
    %1722 = vmatprep.subr.mxu0 0.0
    %1723 = vmatpush2.msra.mxu0 0.0
    %1724 = vmatprep.subr.mxu0 0.0
    %1725 = vmatpush2.msra.mxu0 0.0
    %1726 = vmatprep.subr.mxu0 0.0
    %1727 = vmatpush2.msra.mxu0 0.0
    %1728 = vmatprep.subr.mxu0 0.0
    %1729 = vmatpush2.msra.mxu0 0.0
    %1730 = vmatprep.subr.mxu0 0.0
    %1731 = vmatpush2.msra.mxu0 0.0
    %1732 = vmatprep.subr.mxu0 0.0
    %1733 = vmatpush2.msra.mxu0 0.0
    %1734 = vmatprep.subr.mxu0 0.0
    %1735 = vmatpush2.msra.mxu0 0.0
    %1736 = vmatprep.subr.mxu0 0.0
    %1737 = vmatpush2.msra.mxu0 0.0
    %1738 = vmatprep.subr.mxu0 0.0
    %1739 = vmatpush2.msra.mxu0 0.0
    %1740 = vmatprep.subr.mxu0 0.0
    %1741 = vmatpush2.msra.mxu0 0.0
    %1742 = vmatprep.subr.mxu0 0.0
    %1743 = vmatpush2.msra.mxu0 0.0
    %1744 = vmatprep.subr.mxu0 0.0
    %1745 = vmatpush2.msra.mxu0 0.0
    %1746 = vmatprep.subr.mxu0 0.0
    %1747 = vmatpush2.msra.mxu0 0.0
    %1748 = vmatprep.subr.mxu0 0.0
    %1749 = vmatpush2.msra.mxu0 0.0
    %1750 = vmatprep.subr.mxu0 0.0
    %1751 = vmatpush2.msra.mxu0 0.0
    %1752 = vmatprep.mubr.f32.mxu0 0.0
    %1753 = vmatmul.mubr.f32.gmra.mxu0 %v1609
    %v1754 = vpop.f32.mrf.mxu0
    %v1755 = vadd.f32 0.0, %v1754
    %v1756 = vpop.f32.mrf.mxu0
    %v1757 = vadd.f32 0.0, %v1756
    %1758 = vdwg.mxu0
    %v1759 = vadd.f32 %v1613, %v1684
    %v1760 = vadd.f32 %v1614, %v1686
    %v1761 = vadd.f32 %v1615, %v1755
    %v1762 = vadd.f32 %v1616, %v1757
    %v1763 = vmul.f32 %v1759, 0.5
    %v1764 = vtanh.pop %v1763
    %v1765 = vadd.f32 %v1764, 1.0
    %v1766 = vmul.f32 %v1765, 0.5
    %v1767 = vmul.f32 %v1760, 0.5
    %v1768 = vtanh.pop %v1767
    %v1769 = vadd.f32 %v1768, 1.0
    %v1770 = vmul.f32 %v1769, 0.5
    %v1771 = vtanh.pop %v1761
    %v1772 = vmul.f32 %v1762, 0.5
    %v1773 = vtanh.pop %v1772
    %v1774 = vadd.f32 %v1773, 1.0
    %v1775 = vmul.f32 %v1774, 0.5
    %v1776 = vmul.f32 %v1770, %v1607
    %v1777 = vmul.f32 %v1766, %v1771
    %v1778 = vadd.f32 %v1776, %v1777
    %v1779 = vtanh.pop %v1778
    %v1780 = vmul.f32 %v1775, %v1779
    %s1781 = scalar_lea.vmem [#allocation3], 32
    %1782 = vst [vmem:[%s1781] sm:$0xff] %v1780
    %s1783 = scalar_lea.vmem [#allocation2], 160
    %v1784 = vld [vmem:[%s1783] sm:$0xff]
    %v1785 = vld [vmem:[%s1783 + $0x8] sm:$0xff]
    %v1786 = vld [vmem:[%s1783 + $0x10] sm:$0xff]
    %v1787 = vld [vmem:[%s1783 + $0x18] sm:$0xff]
    %1788 = vmatprep.subr.mxu0 %v913
    %1789 = vmatpush1.msra.mxu0 %v912
    %1790 = vmatprep.subr.mxu0 %v909
    %1791 = vmatpush1.msra.mxu0 %v908
    %1792 = vmatprep.subr.mxu0 %v905
    %1793 = vmatpush1.msra.mxu0 %v904
    %1794 = vmatprep.subr.mxu0 %v901
    %1795 = vmatpush1.msra.mxu0 %v900
    %1796 = vmatprep.subr.mxu0 %v897
    %1797 = vmatpush1.msra.mxu0 %v896
    %1798 = vmatprep.subr.mxu0 %v893
    %1799 = vmatpush1.msra.mxu0 %v892
    %1800 = vmatprep.subr.mxu0 %v889
    %1801 = vmatpush1.msra.mxu0 %v888
    %1802 = vmatprep.subr.mxu0 %v885
    %1803 = vmatpush1.msra.mxu0 %v884
    %1804 = vmatprep.subr.mxu0 %v881
    %1805 = vmatpush1.msra.mxu0 %v880
    %1806 = vmatprep.subr.mxu0 %v877
    %1807 = vmatpush1.msra.mxu0 %v876
    %1808 = vmatprep.subr.mxu0 %v873
    %1809 = vmatpush1.msra.mxu0 %v872
    %1810 = vmatprep.subr.mxu0 %v869
    %1811 = vmatpush1.msra.mxu0 %v868
    %1812 = vmatprep.subr.mxu0 %v865
    %1813 = vmatpush1.msra.mxu0 %v864
    %1814 = vmatprep.subr.mxu0 %v861
    %1815 = vmatpush1.msra.mxu0 %v860
    %1816 = vmatprep.subr.mxu0 %v857
    %1817 = vmatpush1.msra.mxu0 %v856
    %1818 = vmatprep.subr.mxu0 %v853
    %1819 = vmatpush1.msra.mxu0 %v852
    %1820 = vmatprep.subr.mxu0 0.0
    %1821 = vmatpush2.msra.mxu0 0.0
    %1822 = vmatprep.subr.mxu0 0.0
    %1823 = vmatpush2.msra.mxu0 0.0
    %1824 = vmatprep.subr.mxu0 0.0
    %1825 = vmatpush2.msra.mxu0 0.0
    %1826 = vmatprep.subr.mxu0 0.0
    %1827 = vmatpush2.msra.mxu0 0.0
    %1828 = vmatprep.subr.mxu0 0.0
    %1829 = vmatpush2.msra.mxu0 0.0
    %1830 = vmatprep.subr.mxu0 0.0
    %1831 = vmatpush2.msra.mxu0 0.0
    %1832 = vmatprep.subr.mxu0 0.0
    %1833 = vmatpush2.msra.mxu0 0.0
    %1834 = vmatprep.subr.mxu0 0.0
    %1835 = vmatpush2.msra.mxu0 0.0
    %1836 = vmatprep.subr.mxu0 0.0
    %1837 = vmatpush2.msra.mxu0 0.0
    %1838 = vmatprep.subr.mxu0 0.0
    %1839 = vmatpush2.msra.mxu0 0.0
    %1840 = vmatprep.subr.mxu0 0.0
    %1841 = vmatpush2.msra.mxu0 0.0
    %1842 = vmatprep.subr.mxu0 0.0
    %1843 = vmatpush2.msra.mxu0 0.0
    %1844 = vmatprep.subr.mxu0 0.0
    %1845 = vmatpush2.msra.mxu0 0.0
    %1846 = vmatprep.subr.mxu0 0.0
    %1847 = vmatpush2.msra.mxu0 0.0
    %1848 = vmatprep.subr.mxu0 0.0
    %1849 = vmatpush2.msra.mxu0 0.0
    %1850 = vmatprep.subr.mxu0 0.0
    %1851 = vmatpush2.msra.mxu0 0.0
    %1852 = vmatprep.mubr.f32.mxu0 0.0
    %1853 = vmatmul.mubr.f32.gmra.mxu0 %v1780
    %v1854 = vpop.f32.mrf.mxu0
    %v1855 = vadd.f32 0.0, %v1854
    %v1856 = vpop.f32.mrf.mxu0
    %v1857 = vadd.f32 0.0, %v1856
    %1858 = vdwg.mxu0
    %1859 = vmatprep.subr.mxu0 %v915
    %1860 = vmatpush1.msra.mxu0 %v914
    %1861 = vmatprep.subr.mxu0 %v911
    %1862 = vmatpush1.msra.mxu0 %v910
    %1863 = vmatprep.subr.mxu0 %v907
    %1864 = vmatpush1.msra.mxu0 %v906
    %1865 = vmatprep.subr.mxu0 %v903
    %1866 = vmatpush1.msra.mxu0 %v902
    %1867 = vmatprep.subr.mxu0 %v899
    %1868 = vmatpush1.msra.mxu0 %v898
    %1869 = vmatprep.subr.mxu0 %v895
    %1870 = vmatpush1.msra.mxu0 %v894
    %1871 = vmatprep.subr.mxu0 %v891
    %1872 = vmatpush1.msra.mxu0 %v890
    %1873 = vmatprep.subr.mxu0 %v887
    %1874 = vmatpush1.msra.mxu0 %v886
    %1875 = vmatprep.subr.mxu0 %v883
    %1876 = vmatpush1.msra.mxu0 %v882
    %1877 = vmatprep.subr.mxu0 %v879
    %1878 = vmatpush1.msra.mxu0 %v878
    %1879 = vmatprep.subr.mxu0 %v875
    %1880 = vmatpush1.msra.mxu0 %v874
    %1881 = vmatprep.subr.mxu0 %v871
    %1882 = vmatpush1.msra.mxu0 %v870
    %1883 = vmatprep.subr.mxu0 %v867
    %1884 = vmatpush1.msra.mxu0 %v866
    %1885 = vmatprep.subr.mxu0 %v863
    %1886 = vmatpush1.msra.mxu0 %v862
    %1887 = vmatprep.subr.mxu0 %v859
    %1888 = vmatpush1.msra.mxu0 %v858
    %1889 = vmatprep.subr.mxu0 %v855
    %1890 = vmatpush1.msra.mxu0 %v854
    %1891 = vmatprep.subr.mxu0 0.0
    %1892 = vmatpush2.msra.mxu0 0.0
    %1893 = vmatprep.subr.mxu0 0.0
    %1894 = vmatpush2.msra.mxu0 0.0
    %1895 = vmatprep.subr.mxu0 0.0
    %1896 = vmatpush2.msra.mxu0 0.0
    %1897 = vmatprep.subr.mxu0 0.0
    %1898 = vmatpush2.msra.mxu0 0.0
    %1899 = vmatprep.subr.mxu0 0.0
    %1900 = vmatpush2.msra.mxu0 0.0
    %1901 = vmatprep.subr.mxu0 0.0
    %1902 = vmatpush2.msra.mxu0 0.0
    %1903 = vmatprep.subr.mxu0 0.0
    %1904 = vmatpush2.msra.mxu0 0.0
    %1905 = vmatprep.subr.mxu0 0.0
    %1906 = vmatpush2.msra.mxu0 0.0
    %1907 = vmatprep.subr.mxu0 0.0
    %1908 = vmatpush2.msra.mxu0 0.0
    %1909 = vmatprep.subr.mxu0 0.0
    %1910 = vmatpush2.msra.mxu0 0.0
    %1911 = vmatprep.subr.mxu0 0.0
    %1912 = vmatpush2.msra.mxu0 0.0
    %1913 = vmatprep.subr.mxu0 0.0
    %1914 = vmatpush2.msra.mxu0 0.0
    %1915 = vmatprep.subr.mxu0 0.0
    %1916 = vmatpush2.msra.mxu0 0.0
    %1917 = vmatprep.subr.mxu0 0.0
    %1918 = vmatpush2.msra.mxu0 0.0
    %1919 = vmatprep.subr.mxu0 0.0
    %1920 = vmatpush2.msra.mxu0 0.0
    %1921 = vmatprep.subr.mxu0 0.0
    %1922 = vmatpush2.msra.mxu0 0.0
    %1923 = vmatprep.mubr.f32.mxu0 0.0
    %1924 = vmatmul.mubr.f32.gmra.mxu0 %v1780
    %v1925 = vpop.f32.mrf.mxu0
    %v1926 = vadd.f32 0.0, %v1925
    %v1927 = vpop.f32.mrf.mxu0
    %v1928 = vadd.f32 0.0, %v1927
    %1929 = vdwg.mxu0
    %v1930 = vadd.f32 %v1784, %v1855
    %v1931 = vadd.f32 %v1785, %v1857
    %v1932 = vadd.f32 %v1786, %v1926
    %v1933 = vadd.f32 %v1787, %v1928
    %v1934 = vmul.f32 %v1930, 0.5
    %v1935 = vtanh.pop %v1934
    %v1936 = vadd.f32 %v1935, 1.0
    %v1937 = vmul.f32 %v1936, 0.5
    %v1938 = vmul.f32 %v1931, 0.5
    %v1939 = vtanh.pop %v1938
    %v1940 = vadd.f32 %v1939, 1.0
    %v1941 = vmul.f32 %v1940, 0.5
    %v1942 = vtanh.pop %v1932
    %v1943 = vmul.f32 %v1933, 0.5
    %v1944 = vtanh.pop %v1943
    %v1945 = vadd.f32 %v1944, 1.0
    %v1946 = vmul.f32 %v1945, 0.5
    %v1947 = vmul.f32 %v1941, %v1778
    %v1948 = vmul.f32 %v1937, %v1942
    %v1949 = vadd.f32 %v1947, %v1948
    %v1950 = vtanh.pop %v1949
    %v1951 = vmul.f32 %v1946, %v1950
    %s1952 = scalar_lea.vmem [#allocation3], 40
    %1953 = vst [vmem:[%s1952] sm:$0xff] %v1951
    %s1954 = scalar_lea.vmem [#allocation2], 192
    %v1955 = vld [vmem:[%s1954] sm:$0xff]
    %v1956 = vld [vmem:[%s1954 + $0x8] sm:$0xff]
    %v1957 = vld [vmem:[%s1954 + $0x10] sm:$0xff]
    %v1958 = vld [vmem:[%s1954 + $0x18] sm:$0xff]
    %1959 = vmatprep.subr.mxu0 %v913
    %1960 = vmatpush1.msra.mxu0 %v912
    %1961 = vmatprep.subr.mxu0 %v909
    %1962 = vmatpush1.msra.mxu0 %v908
    %1963 = vmatprep.subr.mxu0 %v905
    %1964 = vmatpush1.msra.mxu0 %v904
    %1965 = vmatprep.subr.mxu0 %v901
    %1966 = vmatpush1.msra.mxu0 %v900
    %1967 = vmatprep.subr.mxu0 %v897
    %1968 = vmatpush1.msra.mxu0 %v896
    %1969 = vmatprep.subr.mxu0 %v893
    %1970 = vmatpush1.msra.mxu0 %v892
    %1971 = vmatprep.subr.mxu0 %v889
    %1972 = vmatpush1.msra.mxu0 %v888
    %1973 = vmatprep.subr.mxu0 %v885
    %1974 = vmatpush1.msra.mxu0 %v884
    %1975 = vmatprep.subr.mxu0 %v881
    %1976 = vmatpush1.msra.mxu0 %v880
    %1977 = vmatprep.subr.mxu0 %v877
    %1978 = vmatpush1.msra.mxu0 %v876
    %1979 = vmatprep.subr.mxu0 %v873
    %1980 = vmatpush1.msra.mxu0 %v872
    %1981 = vmatprep.subr.mxu0 %v869
    %1982 = vmatpush1.msra.mxu0 %v868
    %1983 = vmatprep.subr.mxu0 %v865
    %1984 = vmatpush1.msra.mxu0 %v864
    %1985 = vmatprep.subr.mxu0 %v861
    %1986 = vmatpush1.msra.mxu0 %v860
    %1987 = vmatprep.subr.mxu0 %v857
    %1988 = vmatpush1.msra.mxu0 %v856
    %1989 = vmatprep.subr.mxu0 %v853
    %1990 = vmatpush1.msra.mxu0 %v852
    %1991 = vmatprep.subr.mxu0 0.0
    %1992 = vmatpush2.msra.mxu0 0.0
    %1993 = vmatprep.subr.mxu0 0.0
    %1994 = vmatpush2.msra.mxu0 0.0
    %1995 = vmatprep.subr.mxu0 0.0
    %1996 = vmatpush2.msra.mxu0 0.0
    %1997 = vmatprep.subr.mxu0 0.0
    %1998 = vmatpush2.msra.mxu0 0.0
    %1999 = vmatprep.subr.mxu0 0.0
    %2000 = vmatpush2.msra.mxu0 0.0
    %2001 = vmatprep.subr.mxu0 0.0
    %2002 = vmatpush2.msra.mxu0 0.0
    %2003 = vmatprep.subr.mxu0 0.0
    %2004 = vmatpush2.msra.mxu0 0.0
    %2005 = vmatprep.subr.mxu0 0.0
    %2006 = vmatpush2.msra.mxu0 0.0
    %2007 = vmatprep.subr.mxu0 0.0
    %2008 = vmatpush2.msra.mxu0 0.0
    %2009 = vmatprep.subr.mxu0 0.0
    %2010 = vmatpush2.msra.mxu0 0.0
    %2011 = vmatprep.subr.mxu0 0.0
    %2012 = vmatpush2.msra.mxu0 0.0
    %2013 = vmatprep.subr.mxu0 0.0
    %2014 = vmatpush2.msra.mxu0 0.0
    %2015 = vmatprep.subr.mxu0 0.0
    %2016 = vmatpush2.msra.mxu0 0.0
    %2017 = vmatprep.subr.mxu0 0.0
    %2018 = vmatpush2.msra.mxu0 0.0
    %2019 = vmatprep.subr.mxu0 0.0
    %2020 = vmatpush2.msra.mxu0 0.0
    %2021 = vmatprep.subr.mxu0 0.0
    %2022 = vmatpush2.msra.mxu0 0.0
    %2023 = vmatprep.mubr.f32.mxu0 0.0
    %2024 = vmatmul.mubr.f32.gmra.mxu0 %v1951
    %v2025 = vpop.f32.mrf.mxu0
    %v2026 = vadd.f32 0.0, %v2025
    %v2027 = vpop.f32.mrf.mxu0
    %v2028 = vadd.f32 0.0, %v2027
    %2029 = vdwg.mxu0
    %2030 = vmatprep.subr.mxu0 %v915
    %2031 = vmatpush1.msra.mxu0 %v914
    %2032 = vmatprep.subr.mxu0 %v911
    %2033 = vmatpush1.msra.mxu0 %v910
    %2034 = vmatprep.subr.mxu0 %v907
    %2035 = vmatpush1.msra.mxu0 %v906
    %2036 = vmatprep.subr.mxu0 %v903
    %2037 = vmatpush1.msra.mxu0 %v902
    %2038 = vmatprep.subr.mxu0 %v899
    %2039 = vmatpush1.msra.mxu0 %v898
    %2040 = vmatprep.subr.mxu0 %v895
    %2041 = vmatpush1.msra.mxu0 %v894
    %2042 = vmatprep.subr.mxu0 %v891
    %2043 = vmatpush1.msra.mxu0 %v890
    %2044 = vmatprep.subr.mxu0 %v887
    %2045 = vmatpush1.msra.mxu0 %v886
    %2046 = vmatprep.subr.mxu0 %v883
    %2047 = vmatpush1.msra.mxu0 %v882
    %2048 = vmatprep.subr.mxu0 %v879
    %2049 = vmatpush1.msra.mxu0 %v878
    %2050 = vmatprep.subr.mxu0 %v875
    %2051 = vmatpush1.msra.mxu0 %v874
    %2052 = vmatprep.subr.mxu0 %v871
    %2053 = vmatpush1.msra.mxu0 %v870
    %2054 = vmatprep.subr.mxu0 %v867
    %2055 = vmatpush1.msra.mxu0 %v866
    %2056 = vmatprep.subr.mxu0 %v863
    %2057 = vmatpush1.msra.mxu0 %v862
    %2058 = vmatprep.subr.mxu0 %v859
    %2059 = vmatpush1.msra.mxu0 %v858
    %2060 = vmatprep.subr.mxu0 %v855
    %2061 = vmatpush1.msra.mxu0 %v854
    %2062 = vmatprep.subr.mxu0 0.0
    %2063 = vmatpush2.msra.mxu0 0.0
    %2064 = vmatprep.subr.mxu0 0.0
    %2065 = vmatpush2.msra.mxu0 0.0
    %2066 = vmatprep.subr.mxu0 0.0
    %2067 = vmatpush2.msra.mxu0 0.0
    %2068 = vmatprep.subr.mxu0 0.0
    %2069 = vmatpush2.msra.mxu0 0.0
    %2070 = vmatprep.subr.mxu0 0.0
    %2071 = vmatpush2.msra.mxu0 0.0
    %2072 = vmatprep.subr.mxu0 0.0
    %2073 = vmatpush2.msra.mxu0 0.0
    %2074 = vmatprep.subr.mxu0 0.0
    %2075 = vmatpush2.msra.mxu0 0.0
    %2076 = vmatprep.subr.mxu0 0.0
    %2077 = vmatpush2.msra.mxu0 0.0
    %2078 = vmatprep.subr.mxu0 0.0
    %2079 = vmatpush2.msra.mxu0 0.0
    %2080 = vmatprep.subr.mxu0 0.0
    %2081 = vmatpush2.msra.mxu0 0.0
    %2082 = vmatprep.subr.mxu0 0.0
    %2083 = vmatpush2.msra.mxu0 0.0
    %2084 = vmatprep.subr.mxu0 0.0
    %2085 = vmatpush2.msra.mxu0 0.0
    %2086 = vmatprep.subr.mxu0 0.0
    %2087 = vmatpush2.msra.mxu0 0.0
    %2088 = vmatprep.subr.mxu0 0.0
    %2089 = vmatpush2.msra.mxu0 0.0
    %2090 = vmatprep.subr.mxu0 0.0
    %2091 = vmatpush2.msra.mxu0 0.0
    %2092 = vmatprep.subr.mxu0 0.0
    %2093 = vmatpush2.msra.mxu0 0.0
    %2094 = vmatprep.mubr.f32.mxu0 0.0
    %2095 = vmatmul.mubr.f32.gmra.mxu0 %v1951
    %v2096 = vpop.f32.mrf.mxu0
    %v2097 = vadd.f32 0.0, %v2096
    %v2098 = vpop.f32.mrf.mxu0
    %v2099 = vadd.f32 0.0, %v2098
    %2100 = vdwg.mxu0
    %v2101 = vadd.f32 %v1955, %v2026
    %v2102 = vadd.f32 %v1956, %v2028
    %v2103 = vadd.f32 %v1957, %v2097
    %v2104 = vadd.f32 %v1958, %v2099
    %v2105 = vmul.f32 %v2101, 0.5
    %v2106 = vtanh.pop %v2105
    %v2107 = vadd.f32 %v2106, 1.0
    %v2108 = vmul.f32 %v2107, 0.5
    %v2109 = vmul.f32 %v2102, 0.5
    %v2110 = vtanh.pop %v2109
    %v2111 = vadd.f32 %v2110, 1.0
    %v2112 = vmul.f32 %v2111, 0.5
    %v2113 = vtanh.pop %v2103
    %v2114 = vmul.f32 %v2104, 0.5
    %v2115 = vtanh.pop %v2114
    %v2116 = vadd.f32 %v2115, 1.0
    %v2117 = vmul.f32 %v2116, 0.5
    %v2118 = vmul.f32 %v2112, %v1949
    %v2119 = vmul.f32 %v2108, %v2113
    %v2120 = vadd.f32 %v2118, %v2119
    %v2121 = vtanh.pop %v2120
    %v2122 = vmul.f32 %v2117, %v2121
    %s2123 = scalar_lea.vmem [#allocation3], 48
    %2124 = vst [vmem:[%s2123] sm:$0xff] %v2122
    %s2125 = scalar_lea.vmem [#allocation2], 224
    %v2126 = vld [vmem:[%s2125] sm:$0xff]
    %v2127 = vld [vmem:[%s2125 + $0x8] sm:$0xff]
    %v2128 = vld [vmem:[%s2125 + $0x10] sm:$0xff]
    %v2129 = vld [vmem:[%s2125 + $0x18] sm:$0xff]
    %2130 = vmatprep.subr.mxu0 %v913
    %2131 = vmatpush1.msra.mxu0 %v912
    %2132 = vmatprep.subr.mxu0 %v909
    %2133 = vmatpush1.msra.mxu0 %v908
    %2134 = vmatprep.subr.mxu0 %v905
    %2135 = vmatpush1.msra.mxu0 %v904
    %2136 = vmatprep.subr.mxu0 %v901
    %2137 = vmatpush1.msra.mxu0 %v900
    %2138 = vmatprep.subr.mxu0 %v897
    %2139 = vmatpush1.msra.mxu0 %v896
    %2140 = vmatprep.subr.mxu0 %v893
    %2141 = vmatpush1.msra.mxu0 %v892
    %2142 = vmatprep.subr.mxu0 %v889
    %2143 = vmatpush1.msra.mxu0 %v888
    %2144 = vmatprep.subr.mxu0 %v885
    %2145 = vmatpush1.msra.mxu0 %v884
    %2146 = vmatprep.subr.mxu0 %v881
    %2147 = vmatpush1.msra.mxu0 %v880
    %2148 = vmatprep.subr.mxu0 %v877
    %2149 = vmatpush1.msra.mxu0 %v876
    %2150 = vmatprep.subr.mxu0 %v873
    %2151 = vmatpush1.msra.mxu0 %v872
    %2152 = vmatprep.subr.mxu0 %v869
    %2153 = vmatpush1.msra.mxu0 %v868
    %2154 = vmatprep.subr.mxu0 %v865
    %2155 = vmatpush1.msra.mxu0 %v864
    %2156 = vmatprep.subr.mxu0 %v861
    %2157 = vmatpush1.msra.mxu0 %v860
    %2158 = vmatprep.subr.mxu0 %v857
    %2159 = vmatpush1.msra.mxu0 %v856
    %2160 = vmatprep.subr.mxu0 %v853
    %2161 = vmatpush1.msra.mxu0 %v852
    %2162 = vmatprep.subr.mxu0 0.0
    %2163 = vmatpush2.msra.mxu0 0.0
    %2164 = vmatprep.subr.mxu0 0.0
    %2165 = vmatpush2.msra.mxu0 0.0
    %2166 = vmatprep.subr.mxu0 0.0
    %2167 = vmatpush2.msra.mxu0 0.0
    %2168 = vmatprep.subr.mxu0 0.0
    %2169 = vmatpush2.msra.mxu0 0.0
    %2170 = vmatprep.subr.mxu0 0.0
    %2171 = vmatpush2.msra.mxu0 0.0
    %2172 = vmatprep.subr.mxu0 0.0
    %2173 = vmatpush2.msra.mxu0 0.0
    %2174 = vmatprep.subr.mxu0 0.0
    %2175 = vmatpush2.msra.mxu0 0.0
    %2176 = vmatprep.subr.mxu0 0.0
    %2177 = vmatpush2.msra.mxu0 0.0
    %2178 = vmatprep.subr.mxu0 0.0
    %2179 = vmatpush2.msra.mxu0 0.0
    %2180 = vmatprep.subr.mxu0 0.0
    %2181 = vmatpush2.msra.mxu0 0.0
    %2182 = vmatprep.subr.mxu0 0.0
    %2183 = vmatpush2.msra.mxu0 0.0
    %2184 = vmatprep.subr.mxu0 0.0
    %2185 = vmatpush2.msra.mxu0 0.0
    %2186 = vmatprep.subr.mxu0 0.0
    %2187 = vmatpush2.msra.mxu0 0.0
    %2188 = vmatprep.subr.mxu0 0.0
    %2189 = vmatpush2.msra.mxu0 0.0
    %2190 = vmatprep.subr.mxu0 0.0
    %2191 = vmatpush2.msra.mxu0 0.0
    %2192 = vmatprep.subr.mxu0 0.0
    %2193 = vmatpush2.msra.mxu0 0.0
    %2194 = vmatprep.mubr.f32.mxu0 0.0
    %2195 = vmatmul.mubr.f32.gmra.mxu0 %v2122
    %v2196 = vpop.f32.mrf.mxu0
    %v2197 = vadd.f32 0.0, %v2196
    %v2198 = vpop.f32.mrf.mxu0
    %v2199 = vadd.f32 0.0, %v2198
    %2200 = vdwg.mxu0
    %2201 = vmatprep.subr.mxu0 %v915
    %2202 = vmatpush1.msra.mxu0 %v914
    %2203 = vmatprep.subr.mxu0 %v911
    %2204 = vmatpush1.msra.mxu0 %v910
    %2205 = vmatprep.subr.mxu0 %v907
    %2206 = vmatpush1.msra.mxu0 %v906
    %2207 = vmatprep.subr.mxu0 %v903
    %2208 = vmatpush1.msra.mxu0 %v902
    %2209 = vmatprep.subr.mxu0 %v899
    %2210 = vmatpush1.msra.mxu0 %v898
    %2211 = vmatprep.subr.mxu0 %v895
    %2212 = vmatpush1.msra.mxu0 %v894
    %2213 = vmatprep.subr.mxu0 %v891
    %2214 = vmatpush1.msra.mxu0 %v890
    %2215 = vmatprep.subr.mxu0 %v887
    %2216 = vmatpush1.msra.mxu0 %v886
    %2217 = vmatprep.subr.mxu0 %v883
    %2218 = vmatpush1.msra.mxu0 %v882
    %2219 = vmatprep.subr.mxu0 %v879
    %2220 = vmatpush1.msra.mxu0 %v878
    %2221 = vmatprep.subr.mxu0 %v875
    %2222 = vmatpush1.msra.mxu0 %v874
    %2223 = vmatprep.subr.mxu0 %v871
    %2224 = vmatpush1.msra.mxu0 %v870
    %2225 = vmatprep.subr.mxu0 %v867
    %2226 = vmatpush1.msra.mxu0 %v866
    %2227 = vmatprep.subr.mxu0 %v863
    %2228 = vmatpush1.msra.mxu0 %v862
    %2229 = vmatprep.subr.mxu0 %v859
    %2230 = vmatpush1.msra.mxu0 %v858
    %2231 = vmatprep.subr.mxu0 %v855
    %2232 = vmatpush1.msra.mxu0 %v854
    %2233 = vmatprep.subr.mxu0 0.0
    %2234 = vmatpush2.msra.mxu0 0.0
    %2235 = vmatprep.subr.mxu0 0.0
    %2236 = vmatpush2.msra.mxu0 0.0
    %2237 = vmatprep.subr.mxu0 0.0
    %2238 = vmatpush2.msra.mxu0 0.0
    %2239 = vmatprep.subr.mxu0 0.0
    %2240 = vmatpush2.msra.mxu0 0.0
    %2241 = vmatprep.subr.mxu0 0.0
    %2242 = vmatpush2.msra.mxu0 0.0
    %2243 = vmatprep.subr.mxu0 0.0
    %2244 = vmatpush2.msra.mxu0 0.0
    %2245 = vmatprep.subr.mxu0 0.0
    %2246 = vmatpush2.msra.mxu0 0.0
    %2247 = vmatprep.subr.mxu0 0.0
    %2248 = vmatpush2.msra.mxu0 0.0
    %2249 = vmatprep.subr.mxu0 0.0
    %2250 = vmatpush2.msra.mxu0 0.0
    %2251 = vmatprep.subr.mxu0 0.0
    %2252 = vmatpush2.msra.mxu0 0.0
    %2253 = vmatprep.subr.mxu0 0.0
    %2254 = vmatpush2.msra.mxu0 0.0
    %2255 = vmatprep.subr.mxu0 0.0
    %2256 = vmatpush2.msra.mxu0 0.0
    %2257 = vmatprep.subr.mxu0 0.0
    %2258 = vmatpush2.msra.mxu0 0.0
    %2259 = vmatprep.subr.mxu0 0.0
    %2260 = vmatpush2.msra.mxu0 0.0
    %2261 = vmatprep.subr.mxu0 0.0
    %2262 = vmatpush2.msra.mxu0 0.0
    %2263 = vmatprep.subr.mxu0 0.0
    %2264 = vmatpush2.msra.mxu0 0.0
    %2265 = vmatprep.mubr.f32.mxu0 0.0
    %2266 = vmatmul.mubr.f32.gmra.mxu0 %v2122
    %v2267 = vpop.f32.mrf.mxu0
    %v2268 = vadd.f32 0.0, %v2267
    %v2269 = vpop.f32.mrf.mxu0
    %v2270 = vadd.f32 0.0, %v2269
    %2271 = vdwg.mxu0
    %v2272 = vadd.f32 %v2126, %v2197
    %v2273 = vadd.f32 %v2127, %v2199
    %v2274 = vadd.f32 %v2128, %v2268
    %v2275 = vadd.f32 %v2129, %v2270
    %v2276 = vmul.f32 %v2272, 0.5
    %v2277 = vtanh.pop %v2276
    %v2278 = vadd.f32 %v2277, 1.0
    %v2279 = vmul.f32 %v2278, 0.5
    %v2280 = vmul.f32 %v2273, 0.5
    %v2281 = vtanh.pop %v2280
    %v2282 = vadd.f32 %v2281, 1.0
    %v2283 = vmul.f32 %v2282, 0.5
    %v2284 = vtanh.pop %v2274
    %v2285 = vmul.f32 %v2275, 0.5
    %v2286 = vtanh.pop %v2285
    %v2287 = vadd.f32 %v2286, 1.0
    %v2288 = vmul.f32 %v2287, 0.5
    %v2289 = vmul.f32 %v2283, %v2120
    %v2290 = vmul.f32 %v2279, %v2284
    %v2291 = vadd.f32 %v2289, %v2290
    %v2292 = vtanh.pop %v2291
    %v2293 = vmul.f32 %v2288, %v2292
    %s2294 = scalar_lea.vmem [#allocation3], 56
    %2295 = vst [vmem:[%s2294] sm:$0xff] %v2293
    %v2296 = vld [vmem:[#allocation3] sm:$0xff]
    %v2297 = vld [vmem:[#allocation3 + $0x8] sm:$0xff]
    %v2298 = vld [vmem:[#allocation3 + $0x10] sm:$0xff]
    %v2299 = vld [vmem:[#allocation3 + $0x18] sm:$0xff]
    %v2300 = vld [vmem:[#allocation3 + $0x20] sm:$0xff]
    %v2301 = vld [vmem:[#allocation3 + $0x28] sm:$0xff]
    %v2302 = vld [vmem:[#allocation3 + $0x30] sm:$0xff]
    %v2303 = vld [vmem:[#allocation3 + $0x38] sm:$0xff]
    %v2304 = vld [vmem:[#allocation11] sm:$0xff]
    %v2305 = vld [vmem:[#allocation11 + $0x8] sm:$0xff]
    %v2306 = vld [vmem:[#allocation11 + $0x10] sm:$0xff]
    %v2307 = vld [vmem:[#allocation11 + $0x18] sm:$0xff]
    %v2308 = vld [vmem:[#allocation11 + $0x20] sm:$0xff]
    %v2309 = vld [vmem:[#allocation11 + $0x28] sm:$0xff]
    %v2310 = vld [vmem:[#allocation11 + $0x30] sm:$0xff]
    %v2311 = vld [vmem:[#allocation11 + $0x38] sm:$0xff]
    %v2312 = vld [vmem:[#allocation11 + $0x40] sm:$0xff]
    %v2313 = vld [vmem:[#allocation11 + $0x48] sm:$0xff]
    %v2314 = vld [vmem:[#allocation11 + $0x50] sm:$0xff]
    %v2315 = vld [vmem:[#allocation11 + $0x58] sm:$0xff]
    %v2316 = vld [vmem:[#allocation11 + $0x60] sm:$0xff]
    %v2317 = vld [vmem:[#allocation11 + $0x68] sm:$0xff]
    %v2318 = vld [vmem:[#allocation11 + $0x70] sm:$0xff]
    %v2319 = vld [vmem:[#allocation11 + $0x78] sm:$0xff]
    %v2320 = vld [vmem:[%s8] sm:$0x1]
    %v2322 = vlaneseq
    %v2323 = vshrl.u32 %v2322, 7
    %v2324 = vsub.s32 0, %v2323
    %v2325 = vrot.slane %v2320, %v2324
    %2327 = vmatprep.subr.mxu0 0.0
    %2328 = vmatpush1.msra.mxu0 %v2319
    %2329 = vmatprep.subr.mxu0 0.0
    %2330 = vmatpush1.msra.mxu0 %v2318
    %2331 = vmatprep.subr.mxu0 0.0
    %2332 = vmatpush1.msra.mxu0 %v2317
    %2333 = vmatprep.subr.mxu0 0.0
    %2334 = vmatpush1.msra.mxu0 %v2316
    %2335 = vmatprep.subr.mxu0 0.0
    %2336 = vmatpush1.msra.mxu0 %v2315
    %2337 = vmatprep.subr.mxu0 0.0
    %2338 = vmatpush1.msra.mxu0 %v2314
    %2339 = vmatprep.subr.mxu0 0.0
    %2340 = vmatpush1.msra.mxu0 %v2313
    %2341 = vmatprep.subr.mxu0 0.0
    %2342 = vmatpush1.msra.mxu0 %v2312
    %2343 = vmatprep.subr.mxu0 0.0
    %2344 = vmatpush1.msra.mxu0 %v2311
    %2345 = vmatprep.subr.mxu0 0.0
    %2346 = vmatpush1.msra.mxu0 %v2310
    %2347 = vmatprep.subr.mxu0 0.0
    %2348 = vmatpush1.msra.mxu0 %v2309
    %2349 = vmatprep.subr.mxu0 0.0
    %2350 = vmatpush1.msra.mxu0 %v2308
    %2351 = vmatprep.subr.mxu0 0.0
    %2352 = vmatpush1.msra.mxu0 %v2307
    %2353 = vmatprep.subr.mxu0 0.0
    %2354 = vmatpush1.msra.mxu0 %v2306
    %2355 = vmatprep.subr.mxu0 0.0
    %2356 = vmatpush1.msra.mxu0 %v2305
    %2357 = vmatprep.subr.mxu0 0.0
    %2358 = vmatpush1.msra.mxu0 %v2304
    %2359 = vmatprep.subr.mxu0 0.0
    %2360 = vmatpush2.msra.mxu0 0.0
    %2361 = vmatprep.subr.mxu0 0.0
    %2362 = vmatpush2.msra.mxu0 0.0
    %2363 = vmatprep.subr.mxu0 0.0
    %2364 = vmatpush2.msra.mxu0 0.0
    %2365 = vmatprep.subr.mxu0 0.0
    %2366 = vmatpush2.msra.mxu0 0.0
    %2367 = vmatprep.subr.mxu0 0.0
    %2368 = vmatpush2.msra.mxu0 0.0
    %2369 = vmatprep.subr.mxu0 0.0
    %2370 = vmatpush2.msra.mxu0 0.0
    %2371 = vmatprep.subr.mxu0 0.0
    %2372 = vmatpush2.msra.mxu0 0.0
    %2373 = vmatprep.subr.mxu0 0.0
    %2374 = vmatpush2.msra.mxu0 0.0
    %2375 = vmatprep.subr.mxu0 0.0
    %2376 = vmatpush2.msra.mxu0 0.0
    %2377 = vmatprep.subr.mxu0 0.0
    %2378 = vmatpush2.msra.mxu0 0.0
    %2379 = vmatprep.subr.mxu0 0.0
    %2380 = vmatpush2.msra.mxu0 0.0
    %2381 = vmatprep.subr.mxu0 0.0
    %2382 = vmatpush2.msra.mxu0 0.0
    %2383 = vmatprep.subr.mxu0 0.0
    %2384 = vmatpush2.msra.mxu0 0.0
    %2385 = vmatprep.subr.mxu0 0.0
    %2386 = vmatpush2.msra.mxu0 0.0
    %2387 = vmatprep.subr.mxu0 0.0
    %2388 = vmatpush2.msra.mxu0 0.0
    %2389 = vmatprep.subr.mxu0 0.0
    %2390 = vmatpush2.msra.mxu0 0.0
    %2391 = vmatprep.mubr.f32.mxu0 0.0
    %2392 = vmatmul.mubr.f32.gmra.mxu0 %v2296
    %v2393 = vpop.f32.mrf.mxu0
    %v2394 = vadd.f32 %v2325, %v2393
    %v2395 = vpop.f32.mrf.mxu0
    %2396 = vmatprep.mubr.f32.mxu0 0.0
    %2397 = vmatmul.mubr.f32.gmra.mxu0 %v2297
    %v2398 = vpop.f32.mrf.mxu0
    %v2399 = vadd.f32 %v2325, %v2398
    %v2400 = vpop.f32.mrf.mxu0
    %2401 = vmatprep.mubr.f32.mxu0 0.0
    %2402 = vmatmul.mubr.f32.gmra.mxu0 %v2298
    %v2403 = vpop.f32.mrf.mxu0
    %v2404 = vadd.f32 %v2325, %v2403
    %v2405 = vpop.f32.mrf.mxu0
    %2406 = vmatprep.mubr.f32.mxu0 0.0
    %2407 = vmatmul.mubr.f32.gmra.mxu0 %v2299
    %v2408 = vpop.f32.mrf.mxu0
    %v2409 = vadd.f32 %v2325, %v2408
    %v2410 = vpop.f32.mrf.mxu0
    %2411 = vmatprep.mubr.f32.mxu0 0.0
    %2412 = vmatmul.mubr.f32.gmra.mxu0 %v2300
    %v2413 = vpop.f32.mrf.mxu0
    %v2414 = vadd.f32 %v2325, %v2413
    %v2415 = vpop.f32.mrf.mxu0
    %2416 = vmatprep.mubr.f32.mxu0 0.0
    %2417 = vmatmul.mubr.f32.gmra.mxu0 %v2301
    %v2418 = vpop.f32.mrf.mxu0
    %v2419 = vadd.f32 %v2325, %v2418
    %v2420 = vpop.f32.mrf.mxu0
    %2421 = vmatprep.mubr.f32.mxu0 0.0
    %2422 = vmatmul.mubr.f32.gmra.mxu0 %v2302
    %v2423 = vpop.f32.mrf.mxu0
    %v2424 = vadd.f32 %v2325, %v2423
    %v2425 = vpop.f32.mrf.mxu0
    %2426 = vmatprep.mubr.f32.mxu0 0.0
    %2427 = vmatmul.mubr.f32.gmra.mxu0 %v2303
    %v2428 = vpop.f32.mrf.mxu0
    %v2429 = vadd.f32 %v2325, %v2428
    %v2430 = vpop.f32.mrf.mxu0
    %2431 = vdwg.mxu0
    %2432 = vst [vmem:[%s9] sm:$0xff] %v2394
    %2433 = vst [vmem:[%s9 + $0x8] sm:$0xff] %v2399
    %2434 = vst [vmem:[%s9 + $0x10] sm:$0xff] %v2404
    %2435 = vst [vmem:[%s9 + $0x18] sm:$0xff] %v2409
    %2436 = vst [vmem:[%s9 + $0x20] sm:$0xff] %v2414
    %2437 = vst [vmem:[%s9 + $0x28] sm:$0xff] %v2419
    %2438 = vst [vmem:[%s9 + $0x30] sm:$0xff] %v2424
    %2439 = vst [vmem:[%s9 + $0x38] sm:$0xff] %v2429
    // Predicated region
    $region50: #{char_rnn_forward.1} parent=1 // pred_check
      _
    $region51: #{char_rnn_forward.1} parent=1 // pred_check_branch
      %2441 = sbr.rel (0) target = $region53
    $region52: #{char_rnn_forward.1} parent=1 // pred_region
      _
    $region53: #{char_rnn_forward.1} parent=1 // pred_fallthru
      _
    // Predicated region
    $region54: #{char_rnn_forward.1} parent=1 // pred_check
      _
    $region55: #{char_rnn_forward.1} parent=1 // pred_check_branch
      %2443 = sbr.rel (0) target = $region57
    $region56: #{char_rnn_forward.1} parent=1 // pred_region
      _
    $region57: #{char_rnn_forward.1} parent=1 // pred_fallthru
      _
    %2444 = vsyncpa [#allocation7], 1
    %2445 = vsyncpa [#allocation9], 1
    %2446 = vsyncpa [#allocation12], 1

</llo_original>
